<compile_context>
chip_gen: v7x
topology: tpu7x:2x2x1
jax: 0.10.0
libtpu: 0.0.40
codegen_flags: <defaults>
</compile_context>

<pallas_src>
from functools import partial
import math

import jax
import jax.numpy as jnp
from jax.experimental import pallas as pl
from jax.experimental.pallas import tpu as pltpu

MXU_DTYPE = jnp.bfloat16     # GEMM operand dtype (accumulation is always f32)
ACT_DTYPE = jnp.bfloat16     # inter-kernel activation dtype (halves activation HBM traffic)


def _chip_defaults():
    """Scoped-VMEM limit + row tile per generation (v5e/v6e: 128 MiB VMEM, v7x: 64 MiB)."""
    try:
        cap = int(pltpu.get_tpu_info().vmem_capacity_bytes)
    except Exception:
        cap = 64 << 20                                   # conservative (v7x-sized) fallback
    limit = min(max(cap - (32 << 20), 32 << 20), 96 << 20)
    tm = 512 if limit >= (64 << 20) else 256
    return limit, tm


VMEM_LIMIT, DEFAULT_TM = _chip_defaults()


# --------------------------- fused GEMM (LN + bias + GELU + residual) ----------------------

def _col_tile(dim, target, align=128):
    """Largest multiple of `align` <= target that divides `dim`, else the full dim."""
    if dim <= target:
        return dim
    t = (target // align) * align
    while t >= align:
        if dim % t == 0:
            return t
        t -= align
    return dim


def fused_linear(x, w, b, *, gamma=None, beta=None, residual=None, activation=None,
                 eps=1e-5, tm=None, tn=256, tk=512, out_dtype=ACT_DTYPE):
    """y = activation(LayerNorm(x) @ w + b) + residual  — tiled for the MXU.

    LN (gamma/beta), bias, exact-erf GELU and the residual add are fused into the GEMM
    prologue/epilogue so each activation makes a single HBM round trip per GEMM.
    """
    n, din = x.shape
    dout = w.shape[1]
    fuse_ln = gamma is not None
    fuse_res = residual is not None
    tm = DEFAULT_TM if tm is None else tm
    tm = min(tm, n)                                 # full-extent row block when n <= tm
    tn = _col_tile(dout, tn)
    tk = din if fuse_ln else _col_tile(din, tk)     # LN needs the whole feature dim resident

    ni = pl.cdiv(n, tm)                             # ragged last row block -> masked stores
    nj = dout // tn
    nk = din // tk
    use_acc = nk > 1                                # K resident in one step -> skip f32 scratch
    use_ln_scratch = fuse_ln and nj > 1             # hoist LN out of the per-j column loop

    def kernel(*refs):
        it = iter(refs)
        x_ref, w_ref, b_ref = next(it), next(it), next(it)
        g_ref = bt_ref = res_ref = None
        if fuse_ln:
            g_ref, bt_ref = next(it), next(it)
        if fuse_res:
            res_ref = next(it)
        o_ref = next(it)
        ln_ref = next(it) if use_ln_scratch else None
        acc_ref = next(it) if use_acc else None

        def ln_block():
            xv = x_ref[...].astype(jnp.float32)
            mu = jnp.mean(xv, axis=-1, keepdims=True)
            var = jnp.mean(jnp.square(xv - mu), axis=-1, keepdims=True)
            xv = (xv - mu) * jax.lax.rsqrt(var + eps)
            xv = xv * g_ref[...].astype(jnp.float32) + bt_ref[...].astype(jnp.float32)
            return xv.astype(MXU_DTYPE)

        if use_ln_scratch:
            # LN of the (tm, din) row block is identical for every output-column tile j:
            # compute it once per row block (j axis is kept un-split across cores).
            @pl.when(pl.program_id(1) == 0)
            def _ln():
                ln_ref[...] = ln_block()
            a = ln_ref[...]
        elif fuse_ln:
            a = ln_block()
        else:
            a = x_ref[...].astype(MXU_DTYPE)

        part = jnp.dot(a, w_ref[...].astype(MXU_DTYPE), preferred_element_type=jnp.float32)

        def epilogue(y):
            y = y + b_ref[...].astype(jnp.float32)
            if activation == "gelu":                 # exact (erf) GELU, matches nn.GELU / TE
                y = 0.5 * y * (1.0 + jax.lax.erf(y * (1.0 / math.sqrt(2.0))))
            if fuse_res:
                y = y + res_ref[...].astype(jnp.float32)
            return y.astype(o_ref.dtype)

        if use_acc:
            @pl.when(pl.program_id(2) == 0)
            def _zero():
                acc_ref[...] = jnp.zeros_like(acc_ref)
            acc_ref[...] += part

            @pl.when(pl.program_id(2) == pl.num_programs(2) - 1)
            def _fin():
                o_ref[...] = epilogue(acc_ref[...])
        else:
            o_ref[...] = epilogue(part)

    # TODO(synk): on v5e, pipeline_mode=pl.Buffered(3) on the weight spec would hide more of the
    #             exposed weight-stream DMA latency; left at the default depth for portability.
    in_specs = [
        pl.BlockSpec((tm, tk), lambda i, j, k: (i, k)),
        pl.BlockSpec((tk, tn), lambda i, j, k: (k, j)),
        pl.BlockSpec((1, tn), lambda i, j, k: (0, j)),
    ]
    operands = [x, w, b.reshape(1, dout)]
    if fuse_ln:
        ln_spec = pl.BlockSpec((1, tk), lambda i, j, k: (0, k))
        in_specs += [ln_spec, ln_spec]
        operands += [gamma.reshape(1, din), beta.reshape(1, din)]
    if fuse_res:
        in_specs.append(pl.BlockSpec((tm, tn), lambda i, j, k: (i, j)))
        operands.append(residual)

    scratch_shapes = []
    if use_ln_scratch:
        scratch_shapes.append(pltpu.VMEM((tm, tk), MXU_DTYPE))
    if use_acc:
        scratch_shapes.append(pltpu.VMEM((tm, tn), jnp.float32))

    flops = int(2 * n * din * dout)
    transcend = int(n * dout) if activation == "gelu" else 0
    bytes_accessed = int(x.dtype.itemsize * n * din
                         + w.dtype.itemsize * din * dout
                         + jnp.dtype(out_dtype).itemsize * n * dout
                         + (residual.dtype.itemsize * n * dout if fuse_res else 0))

    return pl.pallas_call(
        kernel,
        out_shape=jax.ShapeDtypeStruct((n, dout), out_dtype),
        grid=(ni, nj, nk),
        in_specs=in_specs,
        out_specs=pl.BlockSpec((tm, tn), lambda i, j, k: (i, j)),
        scratch_shapes=scratch_shapes,
        compiler_params=pltpu.CompilerParams(
            dimension_semantics=("parallel",
                                 "arbitrary" if use_ln_scratch else "parallel",
                                 "arbitrary"),
            vmem_limit_bytes=VMEM_LIMIT),
        cost_estimate=pl.CostEstimate(flops=flops, transcendentals=transcend,
                                      bytes_accessed=bytes_accessed),
    )(*operands)


# --------------------------------- multi-head self-attention -------------------------------

def _attention_kernel(qkv_ref, o_ref, *, num_heads, head_dim, scale):
    """Attention for one sample; all heads batched, one input relayout, lane-dense output."""
    seq = qkv_ref.shape[1]
    d = num_heads * head_dim
    # (S, 3D) -> (3H, S, Dh) with a single transpose; per-head q/k/v are leading-dim slices.
    qkv = jnp.swapaxes(qkv_ref[0].reshape(seq, 3 * num_heads, head_dim), 0, 1)
    q = qkv[:num_heads].astype(MXU_DTYPE)
    k = qkv[num_heads:2 * num_heads].astype(MXU_DTYPE)
    v = qkv[2 * num_heads:].astype(MXU_DTYPE)

    s = jnp.einsum("hqd,hkd->hqk", q, k, preferred_element_type=jnp.float32) * scale
    m = jnp.max(s, axis=-1, keepdims=True)
    p = jnp.exp(s - m)                                    # f32 softmax numerator
    l = jnp.sum(p, axis=-1, keepdims=True)
    ctx = jnp.einsum("hqk,hkd->hqd", p.astype(MXU_DTYPE), v,
                     preferred_element_type=jnp.float32)  # (H, S, Dh)
    # normalize the (S, Dh) outputs (not the (S, S) probs); reciprocal goes to the EUP slot
    ctx = ctx * pl.reciprocal(l, approx=True)
    # merge heads back into a lane-dense (S, D) block
    o_ref[0] = jnp.swapaxes(ctx, 0, 1).reshape(seq, d).astype(o_ref.dtype)
    # TODO(synk): for long sequences (S >~ 512) this should be tiled flash-style over q/k blocks
    #             so the (H, S, S) score tensor never materializes (v7x has 64 MiB VMEM per TC).


def attention(qkv, num_heads):
    bp, s, d3 = qkv.shape
    d = d3 // 3
    head_dim = d // num_heads
    kernel = partial(_attention_kernel, num_heads=num_heads, head_dim=head_dim,
                     scale=1.0 / math.sqrt(head_dim))
    return pl.pallas_call(
        kernel,
        out_shape=jax.ShapeDtypeStruct((bp, s, d), ACT_DTYPE),
        grid=(bp,),
        in_specs=[pl.BlockSpec((1, s, d3), lambda b: (b, 0, 0))],
        out_specs=pl.BlockSpec((1, s, d), lambda b: (b, 0, 0)),
        compiler_params=pltpu.CompilerParams(
            dimension_semantics=("parallel",),
            vmem_limit_bytes=VMEM_LIMIT),
        cost_estimate=pl.CostEstimate(
            flops=int(4 * bp * num_heads * s * s * head_dim),
            transcendentals=int(bp * num_heads * s * s),
            bytes_accessed=int(qkv.dtype.itemsize * bp * s * d3
                               + jnp.dtype(ACT_DTYPE).itemsize * bp * s * d)),
    )(qkv)


# ------------------------------------ transformer block ------------------------------------

def block_forward(x, p, num_heads):
    """One FP8Block / te.TransformerLayer (pre-LN encoder), batch-first (B, S, D) layout."""
    bp, s, d = x.shape
    xf = x.reshape(bp * s, d)

    # attention branch: LN1 fused into the QKV GEMM, residual fused into the out-proj GEMM
    # NOTE: TE's fuse_qkv_params uses a per-head-interleaved weight layout; with synthetic
    #       weights the plain (q|k|v) split used here is permutation-equivalent.
    qkv = fused_linear(xf, p["qkv_w"], p["qkv_b"], gamma=p["ln1_g"], beta=p["ln1_b"])
    ctx = attention(qkv.reshape(bp, s, 3 * d), num_heads)                 # (Bp, S, D) bf16
    x1 = fused_linear(ctx.reshape(bp * s, d), p["proj_w"], p["proj_b"], residual=xf)

    # MLP branch: LN2 + GELU fused into FC1, residual fused into FC2
    h = fused_linear(x1, p["fc1_w"], p["fc1_b"],
                     gamma=p["ln2_g"], beta=p["ln2_b"], activation="gelu")
    x2 = fused_linear(h, p["fc2_w"], p["fc2_b"], residual=x1)
    return x2.reshape(bp, s, d)


# ---------------------------------------- full ViT -----------------------------------------

def vit_forward(img, params, *, patch_size, num_heads):
    b, c, hh, ww = img.shape
    d = params["pos_embed"].shape[-1]
    ph, pw = hh // patch_size, ww // patch_size

    # patch embed: Conv2d(k=p, stride=p) == im2col reshape + fused GEMM
    patches = img.reshape(b, c, ph, patch_size, pw, patch_size)
    patches = patches.transpose(0, 2, 4, 1, 3, 5).reshape(b * ph * pw,
                                                          c * patch_size * patch_size)
    x = fused_linear(patches, params["patch_w"], params["patch_b"]).reshape(b, ph * pw, d)

    cls = jnp.broadcast_to(params["cls_token"], (b, 1, d))
    x = jnp.concatenate([cls, x.astype(jnp.float32)], axis=1) + params["pos_embed"]
    x = x.astype(ACT_DTYPE)                    # pos_drop is identity (p=0); bf16 residual stream

    # The reference runs seq-first (S, B, D) and zero-pads the batch to a multiple of 16 inside
    # every FP8Block (TE fp8 GEMM alignment).  With bf16 GEMMs and no attention mask the padded
    # samples never touch real ones, so both the transpose and the pad are dropped (same output).
    for blk in params["blocks"]:
        x = block_forward(x, blk, num_heads)

    cls_out = x[:, 0, :]                       # LN is row-wise: norm(x)[0] == norm(x[0])
    # final LayerNorm fused into the classification-head GEMM; pad the head to a lane-dense
    # 128-wide output so the store path uses full (unmasked) vector stores.
    nc = params["head_w"].shape[1]
    ncp = ((nc + 127) // 128) * 128
    hw = jnp.pad(params["head_w"], ((0, 0), (0, ncp - nc)))
    hb = jnp.pad(params["head_b"], ((0, ncp - nc),))
    logits = fused_linear(cls_out, hw, hb, gamma=params["norm_g"], beta=params["norm_b"],
                          out_dtype=jnp.float32)
    return logits[:, :nc]


# -------------------------------------- param init -----------------------------------------

def init_params(key, *, img_size, in_chans, patch_size, embed_dim, depth, num_heads,
                mlp_ratio, num_classes):
    std = 0.02                                               # trunc_normal_(std=0.02)
    hidden = int(embed_dim * mlp_ratio)
    patch_dim = in_chans * patch_size * patch_size
    num_patches = (img_size // patch_size) ** 2
    seq = num_patches + 1

    def tn_(k, shape, dtype=jnp.float32):
        return (std * jax.random.truncated_normal(k, -2.0, 2.0, shape)).astype(dtype)

    zeros = lambda *s: jnp.zeros(s, jnp.float32)
    ones = lambda *s: jnp.ones(s, jnp.float32)

    keys = iter(jax.random.split(key, 4 + 4 * depth))

    blocks = []
    for _ in range(depth):
        blocks.append({
            "ln1_g": ones(embed_dim), "ln1_b": zeros(embed_dim),
            "qkv_w": tn_(next(keys), (embed_dim, 3 * embed_dim), MXU_DTYPE),
            "qkv_b": zeros(3 * embed_dim),
            "proj_w": tn_(next(keys), (embed_dim, embed_dim), MXU_DTYPE),
            "proj_b": zeros(embed_dim),
            "ln2_g": ones(embed_dim), "ln2_b": zeros(embed_dim),
            "fc1_w": tn_(next(keys), (embed_dim, hidden), MXU_DTYPE), "fc1_b": zeros(hidden),
            "fc2_w": tn_(next(keys), (hidden, embed_dim), MXU_DTYPE), "fc2_b": zeros(embed_dim),
        })

    return {
        # GEMM weights stored in bf16 (halves HBM weight traffic; MXU-native on all gens)
        "patch_w": tn_(next(keys), (patch_dim, embed_dim), MXU_DTYPE),
        "patch_b": zeros(embed_dim),
        "cls_token": tn_(next(keys), (1, 1, embed_dim)),
        "pos_embed": tn_(next(keys), (1, seq, embed_dim)),
        "blocks": blocks,
        "norm_g": ones(embed_dim), "norm_b": zeros(embed_dim),
        "head_w": tn_(next(keys), (embed_dim, num_classes), MXU_DTYPE),
        "head_b": zeros(num_classes),
    }


# ------------------------------- pure-JAX reference (f32) ----------------------------------

def _reference_forward(img, params, *, patch_size, num_heads, eps=1e-5):
    def ln(x, g, b):
        mu = x.mean(-1, keepdims=True)
        var = ((x - mu) ** 2).mean(-1, keepdims=True)
        return (x - mu) * jax.lax.rsqrt(var + eps) * g + b

    f32 = lambda t: t.astype(jnp.float32)
    b_, c, hh, ww = img.shape
    d = params["pos_embed"].shape[-1]
    ph, pw = hh // patch_size, ww // patch_size
    hdim = d // num_heads

    patches = img.reshape(b_, c, ph, patch_size, pw, patch_size)
    patches = patches.transpose(0, 2, 4, 1, 3, 5).reshape(b_, ph * pw, -1)
    x = patches @ f32(params["patch_w"]) + f32(params["patch_b"])
    x = jnp.concatenate([jnp.broadcast_to(f32(params["cls_token"]), (b_, 1, d)), x], axis=1)
    x = x + f32(params["pos_embed"])
    for p in params["blocks"]:
        qkv = ln(x, p["ln1_g"], p["ln1_b"]) @ f32(p["qkv_w"]) + f32(p["qkv_b"])
        q, k, v = jnp.split(qkv, 3, axis=-1)
        sh = lambda t: t.reshape(b_, -1, num_heads, hdim).transpose(0, 2, 1, 3)
        q, k, v = sh(q), sh(k), sh(v)
        att = jax.nn.softmax(q @ k.transpose(0, 1, 3, 2) / math.sqrt(hdim), axis=-1)
        ctx = (att @ v).transpose(0, 2, 1, 3).reshape(b_, -1, d)
        x = x + ctx @ f32(p["proj_w"]) + f32(p["proj_b"])
        h = ln(x, p["ln2_g"], p["ln2_b"]) @ f32(p["fc1_w"]) + f32(p["fc1_b"])
        h = 0.5 * h * (1.0 + jax.lax.erf(h / math.sqrt(2.0)))
        x = x + h @ f32(p["fc2_w"]) + f32(p["fc2_b"])
    cls_out = ln(x, params["norm_g"], params["norm_b"])[:, 0]
    return cls_out @ f32(params["head_w"]) + f32(params["head_b"])


# ------------------------------------------ main -------------------------------------------

if __name__ == "__main__":
    img_size, patch_size, in_chans = 16, 8, 3
    embed_dim, depth, num_heads, mlp_ratio = 128, 2, 4, 4.0     # embed_dim % 16 == 0
    num_classes, batch = 10, 2

    key = jax.random.PRNGKey(0)
    k_img, k_par, k_t = jax.random.split(key, 3)
    img = jax.random.normal(k_img, (batch, in_chans, img_size, img_size), dtype=jnp.float32)
    params = init_params(k_par, img_size=img_size, in_chans=in_chans, patch_size=patch_size,
                         embed_dim=embed_dim, depth=depth, num_heads=num_heads,
                         mlp_ratio=mlp_ratio, num_classes=num_classes)

    fwd = jax.jit(partial(vit_forward, patch_size=patch_size, num_heads=num_heads))
    logits = jax.block_until_ready(fwd(img, params))
    assert logits.shape == (batch, num_classes), logits.shape
    assert bool(jnp.all(jnp.isfinite(logits)))

    # numerics check vs a pure-JAX f32 reference (bf16 activations/operands + approx reciprocal
    # give ~1% relative error; tolerance is generous but catches structural mistakes)
    ref = _reference_forward(img, params, patch_size=patch_size, num_heads=num_heads)
    assert bool(jnp.allclose(logits, ref, atol=5e-2, rtol=5e-2)), \
        float(jnp.max(jnp.abs(logits - ref)))

    # exercise the K-split accumulator + ragged-row (n not divisible by tm) GEMM paths,
    # which the small ViT shapes above do not reach
    k1, k2, k3, k4 = jax.random.split(k_t, 4)
    xt = (0.5 * jax.random.normal(k1, (300, 384))).astype(ACT_DTYPE)
    wt = (0.05 * jax.random.normal(k2, (384, 256))).astype(MXU_DTYPE)
    bt = 0.05 * jax.random.normal(k3, (256,))
    rt = (0.5 * jax.random.normal(k4, (300, 256))).astype(ACT_DTYPE)
    yt = jax.block_until_ready(fused_linear(xt, wt, bt, residual=rt, tm=128, tn=256, tk=128))
    yr = xt.astype(jnp.float32) @ wt.astype(jnp.float32) + bt + rt.astype(jnp.float32)
    assert bool(jnp.allclose(yt.astype(jnp.float32), yr, atol=3e-2, rtol=3e-2)), \
        float(jnp.max(jnp.abs(yt.astype(jnp.float32) - yr)))

    print("KERNEL_OK")
</pallas_src>

<mosaic_0001>
module attributes {stable_mosaic.version = 11 : i64} {
  func.func @kernel(%arg0: i32, %arg1: i32, %arg2: i32, %arg3: memref<8x192xf32, #tpu.memory_space<vmem>>, %arg4: memref<192x128xbf16, #tpu.memory_space<vmem>>, %arg5: memref<1x128xf32, #tpu.memory_space<vmem>>, %arg6: memref<8x128xbf16, #tpu.memory_space<vmem>>) attributes {dimension_semantics = [#tpu.dimension_semantics<parallel>, #tpu.dimension_semantics<parallel>, #tpu.dimension_semantics<arbitrary>], iteration_bounds = array<i64: 1, 1, 1>, scalar_prefetch = 0 : i64, scratch_operands = 0 : i64, tpu.core_type = #tpu.core_type<tc>, window_params = [{transform_indices = @transform_0, window_bounds = array<i64: 8, 192>}, {transform_indices = @transform_1, window_bounds = array<i64: 192, 128>}, {transform_indices = @transform_2, window_bounds = array<i64: 1, 128>}, {transform_indices = @transform_3, window_bounds = array<i64: 8, 128>}]} {
    %c0 = arith.constant 0 : index
    %c0_0 = arith.constant 0 : index
    %0 = vector.load %arg3[%c0, %c0_0] : memref<8x192xf32, #tpu.memory_space<vmem>>, vector<8x192xf32>
    %1 = arith.truncf %0 : vector<8x192xf32> to vector<8x192xbf16>
    %c0_1 = arith.constant 0 : index
    %c0_2 = arith.constant 0 : index
    %2 = vector.load %arg4[%c0_1, %c0_2] : memref<192x128xbf16, #tpu.memory_space<vmem>>, vector<192x128xbf16>
    %cst = arith.constant dense<0.000000e+00> : vector<8x128xf32>
    %3 = tpu.matmul %1, %2, %cst {dimension_numbers = #tpu.dot_dimension_numbers<[1], [0], [0], [1], [0, 0, 1, 1], [], []>} : vector<8x192xbf16>, vector<192x128xbf16>, vector<8x128xf32> -> vector<8x128xf32>
    %c0_3 = arith.constant 0 : index
    %c0_4 = arith.constant 0 : index
    %4 = vector.load %arg5[%c0_3, %c0_4] : memref<1x128xf32, #tpu.memory_space<vmem>>, vector<1x128xf32>
    %5 = vector.broadcast %4 : vector<1x128xf32> to vector<8x128xf32>
    %6 = arith.addf %3, %5 : vector<8x128xf32>
    %7 = arith.truncf %6 : vector<8x128xf32> to vector<8x128xbf16>
    %c0_5 = arith.constant 0 : index
    %c0_6 = arith.constant 0 : index
    %8 = vector.load %arg6[%c0_5, %c0_6] : memref<8x128xbf16, #tpu.memory_space<vmem>>, vector<8x128xbf16>
    tpu.vector_store %arg6[%c0_5, %c0_6], %7 {strides = array<i32>} : memref<8x128xbf16, #tpu.memory_space<vmem>>, vector<8x128xbf16>,
    return
  }
  func.func @transform_0(%arg0: i32, %arg1: i32, %arg2: i32) -> (i32, i32) {
    %c0_i32 = arith.constant 0 : i32
    return %arg0, %arg2 : i32, i32
  }
  func.func @transform_1(%arg0: i32, %arg1: i32, %arg2: i32) -> (i32, i32) {
    %c0_i32 = arith.constant 0 : i32
    return %arg2, %arg1 : i32, i32
  }
  func.func @transform_2(%arg0: i32, %arg1: i32, %arg2: i32) -> (i32, i32) {
    %c0_i32 = arith.constant 0 : i32
    %c0_i32_0 = arith.constant 0 : i32
    return %c0_i32, %arg1 : i32, i32
  }
  func.func @transform_3(%arg0: i32, %arg1: i32, %arg2: i32) -> (i32, i32) {
    %c0_i32 = arith.constant 0 : i32
    return %arg0, %arg1 : i32, i32
  }
}

module attributes {stable_mosaic.version = 11 : i64} {
  func.func @kernel(%arg0: i32, %arg1: i32, %arg2: i32, %arg3: memref<10x128xbf16, #tpu.memory_space<vmem>>, %arg4: memref<128x128xbf16, #tpu.memory_space<vmem>>, %arg5: memref<1x128xf32, #tpu.memory_space<vmem>>, %arg6: memref<1x128xf32, #tpu.memory_space<vmem>>, %arg7: memref<1x128xf32, #tpu.memory_space<vmem>>, %arg8: memref<10x128xbf16, #tpu.memory_space<vmem>>, %arg9: memref<10x128xbf16, #tpu.memory_space<vmem>>) attributes {dimension_semantics = [#tpu.dimension_semantics<parallel>, #tpu.dimension_semantics<arbitrary>, #tpu.dimension_semantics<arbitrary>], iteration_bounds = array<i64: 1, 3, 1>, scalar_prefetch = 0 : i64, scratch_operands = 1 : i64, tpu.core_type = #tpu.core_type<tc>, window_params = [{transform_indices = @transform_0, window_bounds = array<i64: 10, 128>}, {transform_indices = @transform_1, window_bounds = array<i64: 128, 128>}, {transform_indices = @transform_2, window_bounds = array<i64: 1, 128>}, {transform_indices = @transform_3, window_bounds = array<i64: 1, 128>}, {transform_indices = @transform_4, window_bounds = array<i64: 1, 128>}, {transform_indices = @transform_5, window_bounds = array<i64: 10, 128>}]} {
    %c0_i32 = arith.constant 0 : i32
    %0 = arith.cmpi eq, %arg1, %c0_i32 : i32
    %1 = arith.extui %0 : i1 to i32
    %c0_i32_0 = arith.constant 0 : i32
    %2 = arith.cmpi ne, %1, %c0_i32_0 : i32
    scf.if %2 {
      %c0_8 = arith.constant 0 : index
      %c0_9 = arith.constant 0 : index
      %11 = vector.load %arg3[%c0_8, %c0_9] : memref<10x128xbf16, #tpu.memory_space<vmem>>, vector<10x128xbf16>
      %12 = arith.extf %11 : vector<10x128xbf16> to vector<10x128xf32>
      %cst_10 = arith.constant dense<0.000000e+00> : vector<10xf32>
      %13 = vector.multi_reduction <add>, %12, %cst_10 [1] : vector<10x128xf32> to vector<10xf32>
      %14 = vector.shape_cast %13 : vector<10xf32> to vector<10x1xf32>
      %cst_11 = arith.constant 1.280000e+02 : f32
      %15 = vector.broadcast %cst_11 : f32 to vector<10x1xf32>
      %16 = arith.divf %14, %15 : vector<10x1xf32>
      %17 = vector.broadcast %16 : vector<10x1xf32> to vector<10x128xf32>
      %18 = arith.subf %12, %17 : vector<10x128xf32>
      %19 = arith.mulf %18, %18 : vector<10x128xf32>
      %cst_12 = arith.constant dense<0.000000e+00> : vector<10xf32>
      %20 = vector.multi_reduction <add>, %19, %cst_12 [1] : vector<10x128xf32> to vector<10xf32>
      %21 = vector.shape_cast %20 : vector<10xf32> to vector<10x1xf32>
      %cst_13 = arith.constant 1.280000e+02 : f32
      %22 = vector.broadcast %cst_13 : f32 to vector<10x1xf32>
      %23 = arith.divf %21, %22 : vector<10x1xf32>
      %24 = vector.broadcast %16 : vector<10x1xf32> to vector<10x128xf32>
      %25 = arith.subf %12, %24 : vector<10x128xf32>
      %cst_14 = arith.constant 9.99999974E-6 : f32
      %26 = vector.broadcast %cst_14 : f32 to vector<10x1xf32>
      %27 = arith.addf %23, %26 : vector<10x1xf32>
      %28 = math.rsqrt %27 : vector<10x1xf32>
      %29 = vector.broadcast %28 : vector<10x1xf32> to vector<10x128xf32>
      %30 = arith.mulf %25, %29 : vector<10x128xf32>
      %c0_15 = arith.constant 0 : index
      %c0_16 = arith.constant 0 : index
      %31 = vector.load %arg6[%c0_15, %c0_16] : memref<1x128xf32, #tpu.memory_space<vmem>>, vector<1x128xf32>
      %32 = vector.broadcast %31 : vector<1x128xf32> to vector<10x128xf32>
      %33 = arith.mulf %30, %32 : vector<10x128xf32>
      %c0_17 = arith.constant 0 : index
      %c0_18 = arith.constant 0 : index
      %34 = vector.load %arg7[%c0_17, %c0_18] : memref<1x128xf32, #tpu.memory_space<vmem>>, vector<1x128xf32>
      %35 = vector.broadcast %34 : vector<1x128xf32> to vector<10x128xf32>
      %36 = arith.addf %33, %35 : vector<10x128xf32>
      %37 = arith.truncf %36 : vector<10x128xf32> to vector<10x128xbf16>
      %c0_19 = arith.constant 0 : index
      %c0_20 = arith.constant 0 : index
      %38 = vector.load %arg9[%c0_19, %c0_20] : memref<10x128xbf16, #tpu.memory_space<vmem>>, vector<10x128xbf16>
      tpu.vector_store %arg9[%c0_19, %c0_20], %37 {strides = array<i32>} : memref<10x128xbf16, #tpu.memory_space<vmem>>, vector<10x128xbf16>,
    } else {
    }
    %c0 = arith.constant 0 : index
    %c0_1 = arith.constant 0 : index
    %3 = vector.load %arg9[%c0, %c0_1] : memref<10x128xbf16, #tpu.memory_space<vmem>>, vector<10x128xbf16>
    %c0_2 = arith.constant 0 : index
    %c0_3 = arith.constant 0 : index
    %4 = vector.load %arg4[%c0_2, %c0_3] : memref<128x128xbf16, #tpu.memory_space<vmem>>, vector<128x128xbf16>
    %cst = arith.constant dense<0.000000e+00> : vector<10x128xf32>
    %5 = tpu.matmul %3, %4, %cst {dimension_numbers = #tpu.dot_dimension_numbers<[1], [0], [0], [1], [0, 0, 1, 1], [], []>} : vector<10x128xbf16>, vector<128x128xbf16>, vector<10x128xf32> -> vector<10x128xf32>
    %c0_4 = arith.constant 0 : index
    %c0_5 = arith.constant 0 : index
    %6 = vector.load %arg5[%c0_4, %c0_5] : memref<1x128xf32, #tpu.memory_space<vmem>>, vector<1x128xf32>
    %7 = vector.broadcast %6 : vector<1x128xf32> to vector<10x128xf32>
    %8 = arith.addf %5, %7 : vector<10x128xf32>
    %9 = arith.truncf %8 : vector<10x128xf32> to vector<10x128xbf16>
    %c0_6 = arith.constant 0 : index
    %c0_7 = arith.constant 0 : index
    %10 = vector.load %arg8[%c0_6, %c0_7] : memref<10x128xbf16, #tpu.memory_space<vmem>>, vector<10x128xbf16>
    tpu.vector_store %arg8[%c0_6, %c0_7], %9 {strides = array<i32>} : memref<10x128xbf16, #tpu.memory_space<vmem>>, vector<10x128xbf16>,
    return
  }
  func.func @transform_0(%arg0: i32, %arg1: i32, %arg2: i32) -> (i32, i32) {
    %c0_i32 = arith.constant 0 : i32
    return %arg0, %arg2 : i32, i32
  }
  func.func @transform_1(%arg0: i32, %arg1: i32, %arg2: i32) -> (i32, i32) {
    %c0_i32 = arith.constant 0 : i32
    return %arg2, %arg1 : i32, i32
  }
  func.func @transform_2(%arg0: i32, %arg1: i32, %arg2: i32) -> (i32, i32) {
    %c0_i32 = arith.constant 0 : i32
    %c0_i32_0 = arith.constant 0 : i32
    return %c0_i32, %arg1 : i32, i32
  }
  func.func @transform_3(%arg0: i32, %arg1: i32, %arg2: i32) -> (i32, i32) {
    %c0_i32 = arith.constant 0 : i32
    %c0_i32_0 = arith.constant 0 : i32
    return %c0_i32, %arg2 : i32, i32
  }
  func.func @transform_4(%arg0: i32, %arg1: i32, %arg2: i32) -> (i32, i32) {
    %c0_i32 = arith.constant 0 : i32
    %c0_i32_0 = arith.constant 0 : i32
    return %c0_i32, %arg2 : i32, i32
  }
  func.func @transform_5(%arg0: i32, %arg1: i32, %arg2: i32) -> (i32, i32) {
    %c0_i32 = arith.constant 0 : i32
    return %arg0, %arg1 : i32, i32
  }
}

module attributes {stable_mosaic.version = 11 : i64} {
  func.func @kernel(%arg0: i32, %arg1: i32, %arg2: i32, %arg3: memref<10x128xbf16, #tpu.memory_space<vmem>>, %arg4: memref<128x128xbf16, #tpu.memory_space<vmem>>, %arg5: memref<1x128xf32, #tpu.memory_space<vmem>>, %arg6: memref<10x128xbf16, #tpu.memory_space<vmem>>, %arg7: memref<10x128xbf16, #tpu.memory_space<vmem>>) attributes {dimension_semantics = [#tpu.dimension_semantics<parallel>, #tpu.dimension_semantics<parallel>, #tpu.dimension_semantics<arbitrary>], iteration_bounds = array<i64: 1, 1, 1>, scalar_prefetch = 0 : i64, scratch_operands = 0 : i64, tpu.core_type = #tpu.core_type<tc>, window_params = [{transform_indices = @transform_0, window_bounds = array<i64: 10, 128>}, {transform_indices = @transform_1, window_bounds = array<i64: 128, 128>}, {transform_indices = @transform_2, window_bounds = array<i64: 1, 128>}, {transform_indices = @transform_3, window_bounds = array<i64: 10, 128>}, {transform_indices = @transform_4, window_bounds = array<i64: 10, 128>}]} {
    %c0 = arith.constant 0 : index
    %c0_0 = arith.constant 0 : index
    %0 = vector.load %arg3[%c0, %c0_0] : memref<10x128xbf16, #tpu.memory_space<vmem>>, vector<10x128xbf16>
    %c0_1 = arith.constant 0 : index
    %c0_2 = arith.constant 0 : index
    %1 = vector.load %arg4[%c0_1, %c0_2] : memref<128x128xbf16, #tpu.memory_space<vmem>>, vector<128x128xbf16>
    %cst = arith.constant dense<0.000000e+00> : vector<10x128xf32>
    %2 = tpu.matmul %0, %1, %cst {dimension_numbers = #tpu.dot_dimension_numbers<[1], [0], [0], [1], [0, 0, 1, 1], [], []>} : vector<10x128xbf16>, vector<128x128xbf16>, vector<10x128xf32> -> vector<10x128xf32>
    %c0_3 = arith.constant 0 : index
    %c0_4 = arith.constant 0 : index
    %3 = vector.load %arg5[%c0_3, %c0_4] : memref<1x128xf32, #tpu.memory_space<vmem>>, vector<1x128xf32>
    %4 = vector.broadcast %3 : vector<1x128xf32> to vector<10x128xf32>
    %5 = arith.addf %2, %4 : vector<10x128xf32>
    %c0_5 = arith.constant 0 : index
    %c0_6 = arith.constant 0 : index
    %6 = vector.load %arg6[%c0_5, %c0_6] : memref<10x128xbf16, #tpu.memory_space<vmem>>, vector<10x128xbf16>
    %7 = arith.extf %6 : vector<10x128xbf16> to vector<10x128xf32>
    %8 = arith.addf %5, %7 : vector<10x128xf32>
    %9 = arith.truncf %8 : vector<10x128xf32> to vector<10x128xbf16>
    %c0_7 = arith.constant 0 : index
    %c0_8 = arith.constant 0 : index
    %10 = vector.load %arg7[%c0_7, %c0_8] : memref<10x128xbf16, #tpu.memory_space<vmem>>, vector<10x128xbf16>
    tpu.vector_store %arg7[%c0_7, %c0_8], %9 {strides = array<i32>} : memref<10x128xbf16, #tpu.memory_space<vmem>>, vector<10x128xbf16>,
    return
  }
  func.func @transform_0(%arg0: i32, %arg1: i32, %arg2: i32) -> (i32, i32) {
    %c0_i32 = arith.constant 0 : i32
    return %arg0, %arg2 : i32, i32
  }
  func.func @transform_1(%arg0: i32, %arg1: i32, %arg2: i32) -> (i32, i32) {
    %c0_i32 = arith.constant 0 : i32
    return %arg2, %arg1 : i32, i32
  }
  func.func @transform_2(%arg0: i32, %arg1: i32, %arg2: i32) -> (i32, i32) {
    %c0_i32 = arith.constant 0 : i32
    %c0_i32_0 = arith.constant 0 : i32
    return %c0_i32, %arg1 : i32, i32
  }
  func.func @transform_3(%arg0: i32, %arg1: i32, %arg2: i32) -> (i32, i32) {
    %c0_i32 = arith.constant 0 : i32
    return %arg0, %arg1 : i32, i32
  }
  func.func @transform_4(%arg0: i32, %arg1: i32, %arg2: i32) -> (i32, i32) {
    %c0_i32 = arith.constant 0 : i32
    return %arg0, %arg1 : i32, i32
  }
}

module attributes {stable_mosaic.version = 11 : i64} {
  func.func @_attention_kernel(%arg0: i32, %arg1: memref<1x5x384xbf16, #tpu.memory_space<vmem>>, %arg2: memref<1x5x128xbf16, #tpu.memory_space<vmem>>) attributes {dimension_semantics = [#tpu.dimension_semantics<parallel>], iteration_bounds = array<i64: 2>, scalar_prefetch = 0 : i64, scratch_operands = 0 : i64, tpu.core_type = #tpu.core_type<tc>, window_params = [{transform_indices = @transform_0, window_bounds = array<i64: 1, 5, 384>}, {transform_indices = @transform_1, window_bounds = array<i64: 1, 5, 128>}]} {
    %c0 = arith.constant 0 : index
    %c0_0 = arith.constant 0 : index
    %c0_1 = arith.constant 0 : index
    %0 = vector.load %arg1[%c0, %c0_0, %c0_1] : memref<1x5x384xbf16, #tpu.memory_space<vmem>>, vector<1x5x384xbf16>
    %1 = vector.shape_cast %0 : vector<1x5x384xbf16> to vector<5x384xbf16>
    %2 = vector.shape_cast %1 : vector<5x384xbf16> to vector<5x12x32xbf16>
    %3 = tpu.transpose %2, [1, 0, 2] : vector<5x12x32xbf16> -> vector<12x5x32xbf16>
    %4 = vector.extract_strided_slice %3 {offsets = [0, 0, 0], sizes = [4, 5, 32], strides = [1, 1, 1]} : vector<12x5x32xbf16> to vector<4x5x32xbf16>
    %5 = vector.extract_strided_slice %3 {offsets = [4, 0, 0], sizes = [4, 5, 32], strides = [1, 1, 1]} : vector<12x5x32xbf16> to vector<4x5x32xbf16>
    %6 = vector.extract_strided_slice %3 {offsets = [8, 0, 0], sizes = [4, 5, 32], strides = [1, 1, 1]} : vector<12x5x32xbf16> to vector<4x5x32xbf16>
    "tpu.trace_start"() <{level = 10 : i32, message = "hqd,hkd->hqk"}> : () -> ()
    %cst = arith.constant dense<0.000000e+00> : vector<4x5x5xf32>
    %7 = tpu.matmul %4, %5, %cst {dimension_numbers = #tpu.dot_dimension_numbers<[2], [2], [1], [1], [0, 0, 0, 1, 1, 1], [0], [0]>} : vector<4x5x32xbf16>, vector<4x5x32xbf16>, vector<4x5x5xf32> -> vector<4x5x5xf32>
    "tpu.trace_stop"() : () -> ()
    %cst_2 = arith.constant 0.176776692 : f32
    %8 = vector.broadcast %cst_2 : f32 to vector<4x5x5xf32>
    %9 = arith.mulf %7, %8 : vector<4x5x5xf32>
    %cst_3 = arith.constant dense<0xFF800000> : vector<4x5xf32>
    %10 = vector.multi_reduction <maximumf>, %9, %cst_3 [2] : vector<4x5x5xf32> to vector<4x5xf32>
    %11 = vector.shape_cast %10 : vector<4x5xf32> to vector<4x5x1xf32>
    %12 = vector.broadcast %11 : vector<4x5x1xf32> to vector<4x5x5xf32>
    %13 = arith.subf %9, %12 : vector<4x5x5xf32>
    %14 = math.exp %13 : vector<4x5x5xf32>
    %cst_4 = arith.constant dense<0.000000e+00> : vector<4x5xf32>
    %15 = vector.multi_reduction <add>, %14, %cst_4 [2] : vector<4x5x5xf32> to vector<4x5xf32>
    %16 = vector.shape_cast %15 : vector<4x5xf32> to vector<4x5x1xf32>
    %17 = arith.truncf %14 : vector<4x5x5xf32> to vector<4x5x5xbf16>
    "tpu.trace_start"() <{level = 10 : i32, message = "hqk,hkd->hqd"}> : () -> ()
    %cst_5 = arith.constant dense<0.000000e+00> : vector<4x5x32xf32>
    %18 = tpu.matmul %17, %6, %cst_5 {dimension_numbers = #tpu.dot_dimension_numbers<[2], [1], [1], [2], [0, 0, 0, 1, 1, 2], [0], [0]>} : vector<4x5x5xbf16>, vector<4x5x32xbf16>, vector<4x5x32xf32> -> vector<4x5x32xf32>
    "tpu.trace_stop"() : () -> ()
    %19 = tpu.reciprocal %16 {approx = true} : vector<4x5x1xf32> -> vector<4x5x1xf32>
    %20 = vector.broadcast %19 : vector<4x5x1xf32> to vector<4x5x32xf32>
    %21 = arith.mulf %18, %20 : vector<4x5x32xf32>
    %22 = tpu.transpose %21, [1, 0, 2] : vector<4x5x32xf32> -> vector<5x4x32xf32>
    %23 = vector.shape_cast %22 : vector<5x4x32xf32> to vector<5x128xf32>
    %24 = arith.truncf %23 : vector<5x128xf32> to vector<5x128xbf16>
    %c0_6 = arith.constant 0 : index
    %c0_7 = arith.constant 0 : index
    %c0_8 = arith.constant 0 : index
    %25 = vector.load %arg2[%c0_6, %c0_7, %c0_8] : memref<1x5x128xbf16, #tpu.memory_space<vmem>>, vector<1x5x128xbf16>
    %26 = vector.shape_cast %25 : vector<1x5x128xbf16> to vector<5x128xbf16>
    %27 = vector.shape_cast %24 : vector<5x128xbf16> to vector<1x5x128xbf16>
    tpu.vector_store %arg2[%c0_6, %c0_7, %c0_8], %27 {strides = array<i32>} : memref<1x5x128xbf16, #tpu.memory_space<vmem>>, vector<1x5x128xbf16>,
    return
  }
  func.func @transform_0(%arg0: i32) -> (i32, i32, i32) {
    %c0_i32 = arith.constant 0 : i32
    %c0_i32_0 = arith.constant 0 : i32
    %c0_i32_1 = arith.constant 0 : i32
    return %arg0, %c0_i32, %c0_i32_0 : i32, i32, i32
  }
  func.func @transform_1(%arg0: i32) -> (i32, i32, i32) {
    %c0_i32 = arith.constant 0 : i32
    %c0_i32_0 = arith.constant 0 : i32
    %c0_i32_1 = arith.constant 0 : i32
    return %arg0, %c0_i32, %c0_i32_0 : i32, i32, i32
  }
}

module attributes {stable_mosaic.version = 11 : i64} {
  func.func @kernel(%arg0: i32, %arg1: i32, %arg2: i32, %arg3: memref<10x128xbf16, #tpu.memory_space<vmem>>, %arg4: memref<128x256xbf16, #tpu.memory_space<vmem>>, %arg5: memref<1x256xf32, #tpu.memory_space<vmem>>, %arg6: memref<1x128xf32, #tpu.memory_space<vmem>>, %arg7: memref<1x128xf32, #tpu.memory_space<vmem>>, %arg8: memref<10x256xbf16, #tpu.memory_space<vmem>>, %arg9: memref<10x128xbf16, #tpu.memory_space<vmem>>) attributes {dimension_semantics = [#tpu.dimension_semantics<parallel>, #tpu.dimension_semantics<arbitrary>, #tpu.dimension_semantics<arbitrary>], iteration_bounds = array<i64: 1, 2, 1>, scalar_prefetch = 0 : i64, scratch_operands = 1 : i64, tpu.core_type = #tpu.core_type<tc>, window_params = [{transform_indices = @transform_0, window_bounds = array<i64: 10, 128>}, {transform_indices = @transform_1, window_bounds = array<i64: 128, 256>}, {transform_indices = @transform_2, window_bounds = array<i64: 1, 256>}, {transform_indices = @transform_3, window_bounds = array<i64: 1, 128>}, {transform_indices = @transform_4, window_bounds = array<i64: 1, 128>}, {transform_indices = @transform_5, window_bounds = array<i64: 10, 256>}]} {
    %c0_i32 = arith.constant 0 : i32
    %0 = arith.cmpi eq, %arg1, %c0_i32 : i32
    %1 = arith.extui %0 : i1 to i32
    %c0_i32_0 = arith.constant 0 : i32
    %2 = arith.cmpi ne, %1, %c0_i32_0 : i32
    scf.if %2 {
      %c0_11 = arith.constant 0 : index
      %c0_12 = arith.constant 0 : index
      %19 = vector.load %arg3[%c0_11, %c0_12] : memref<10x128xbf16, #tpu.memory_space<vmem>>, vector<10x128xbf16>
      %20 = arith.extf %19 : vector<10x128xbf16> to vector<10x128xf32>
      %cst_13 = arith.constant dense<0.000000e+00> : vector<10xf32>
      %21 = vector.multi_reduction <add>, %20, %cst_13 [1] : vector<10x128xf32> to vector<10xf32>
      %22 = vector.shape_cast %21 : vector<10xf32> to vector<10x1xf32>
      %cst_14 = arith.constant 1.280000e+02 : f32
      %23 = vector.broadcast %cst_14 : f32 to vector<10x1xf32>
      %24 = arith.divf %22, %23 : vector<10x1xf32>
      %25 = vector.broadcast %24 : vector<10x1xf32> to vector<10x128xf32>
      %26 = arith.subf %20, %25 : vector<10x128xf32>
      %27 = arith.mulf %26, %26 : vector<10x128xf32>
      %cst_15 = arith.constant dense<0.000000e+00> : vector<10xf32>
      %28 = vector.multi_reduction <add>, %27, %cst_15 [1] : vector<10x128xf32> to vector<10xf32>
      %29 = vector.shape_cast %28 : vector<10xf32> to vector<10x1xf32>
      %cst_16 = arith.constant 1.280000e+02 : f32
      %30 = vector.broadcast %cst_16 : f32 to vector<10x1xf32>
      %31 = arith.divf %29, %30 : vector<10x1xf32>
      %32 = vector.broadcast %24 : vector<10x1xf32> to vector<10x128xf32>
      %33 = arith.subf %20, %32 : vector<10x128xf32>
      %cst_17 = arith.constant 9.99999974E-6 : f32
      %34 = vector.broadcast %cst_17 : f32 to vector<10x1xf32>
      %35 = arith.addf %31, %34 : vector<10x1xf32>
      %36 = math.rsqrt %35 : vector<10x1xf32>
      %37 = vector.broadcast %36 : vector<10x1xf32> to vector<10x128xf32>
      %38 = arith.mulf %33, %37 : vector<10x128xf32>
      %c0_18 = arith.constant 0 : index
      %c0_19 = arith.constant 0 : index
      %39 = vector.load %arg6[%c0_18, %c0_19] : memref<1x128xf32, #tpu.memory_space<vmem>>, vector<1x128xf32>
      %40 = vector.broadcast %39 : vector<1x128xf32> to vector<10x128xf32>
      %41 = arith.mulf %38, %40 : vector<10x128xf32>
      %c0_20 = arith.constant 0 : index
      %c0_21 = arith.constant 0 : index
      %42 = vector.load %arg7[%c0_20, %c0_21] : memref<1x128xf32, #tpu.memory_space<vmem>>, vector<1x128xf32>
      %43 = vector.broadcast %42 : vector<1x128xf32> to vector<10x128xf32>
      %44 = arith.addf %41, %43 : vector<10x128xf32>
      %45 = arith.truncf %44 : vector<10x128xf32> to vector<10x128xbf16>
      %c0_22 = arith.constant 0 : index
      %c0_23 = arith.constant 0 : index
      %46 = vector.load %arg9[%c0_22, %c0_23] : memref<10x128xbf16, #tpu.memory_space<vmem>>, vector<10x128xbf16>
      tpu.vector_store %arg9[%c0_22, %c0_23], %45 {strides = array<i32>} : memref<10x128xbf16, #tpu.memory_space<vmem>>, vector<10x128xbf16>,
    } else {
    }
    %c0 = arith.constant 0 : index
    %c0_1 = arith.constant 0 : index
    %3 = vector.load %arg9[%c0, %c0_1] : memref<10x128xbf16, #tpu.memory_space<vmem>>, vector<10x128xbf16>
    %c0_2 = arith.constant 0 : index
    %c0_3 = arith.constant 0 : index
    %4 = vector.load %arg4[%c0_2, %c0_3] : memref<128x256xbf16, #tpu.memory_space<vmem>>, vector<128x256xbf16>
    %cst = arith.constant dense<0.000000e+00> : vector<10x256xf32>
    %5 = tpu.matmul %3, %4, %cst {dimension_numbers = #tpu.dot_dimension_numbers<[1], [0], [0], [1], [0, 0, 1, 1], [], []>} : vector<10x128xbf16>, vector<128x256xbf16>, vector<10x256xf32> -> vector<10x256xf32>
    %c0_4 = arith.constant 0 : index
    %c0_5 = arith.constant 0 : index
    %6 = vector.load %arg5[%c0_4, %c0_5] : memref<1x256xf32, #tpu.memory_space<vmem>>, vector<1x256xf32>
    %7 = vector.broadcast %6 : vector<1x256xf32> to vector<10x256xf32>
    %8 = arith.addf %5, %7 : vector<10x256xf32>
    %cst_6 = arith.constant 5.000000e-01 : f32
    %9 = vector.broadcast %cst_6 : f32 to vector<10x256xf32>
    %10 = arith.mulf %9, %8 : vector<10x256xf32>
    %cst_7 = arith.constant 0.707106769 : f32
    %11 = vector.broadcast %cst_7 : f32 to vector<10x256xf32>
    %12 = arith.mulf %8, %11 : vector<10x256xf32>
    %13 = math.erf %12 : vector<10x256xf32>
    %cst_8 = arith.constant 1.000000e+00 : f32
    %14 = vector.broadcast %cst_8 : f32 to vector<10x256xf32>
    %15 = arith.addf %14, %13 : vector<10x256xf32>
    %16 = arith.mulf %10, %15 : vector<10x256xf32>
    %17 = arith.truncf %16 : vector<10x256xf32> to vector<10x256xbf16>
    %c0_9 = arith.constant 0 : index
    %c0_10 = arith.constant 0 : index
    %18 = vector.load %arg8[%c0_9, %c0_10] : memref<10x256xbf16, #tpu.memory_space<vmem>>, vector<10x256xbf16>
    tpu.vector_store %arg8[%c0_9, %c0_10], %17 {strides = array<i32>} : memref<10x256xbf16, #tpu.memory_space<vmem>>, vector<10x256xbf16>,
    return
  }
  func.func @transform_0(%arg0: i32, %arg1: i32, %arg2: i32) -> (i32, i32) {
    %c0_i32 = arith.constant 0 : i32
    return %arg0, %arg2 : i32, i32
  }
  func.func @transform_1(%arg0: i32, %arg1: i32, %arg2: i32) -> (i32, i32) {
    %c0_i32 = arith.constant 0 : i32
    return %arg2, %arg1 : i32, i32
  }
  func.func @transform_2(%arg0: i32, %arg1: i32, %arg2: i32) -> (i32, i32) {
    %c0_i32 = arith.constant 0 : i32
    %c0_i32_0 = arith.constant 0 : i32
    return %c0_i32, %arg1 : i32, i32
  }
  func.func @transform_3(%arg0: i32, %arg1: i32, %arg2: i32) -> (i32, i32) {
    %c0_i32 = arith.constant 0 : i32
    %c0_i32_0 = arith.constant 0 : i32
    return %c0_i32, %arg2 : i32, i32
  }
  func.func @transform_4(%arg0: i32, %arg1: i32, %arg2: i32) -> (i32, i32) {
    %c0_i32 = arith.constant 0 : i32
    %c0_i32_0 = arith.constant 0 : i32
    return %c0_i32, %arg2 : i32, i32
  }
  func.func @transform_5(%arg0: i32, %arg1: i32, %arg2: i32) -> (i32, i32) {
    %c0_i32 = arith.constant 0 : i32
    return %arg0, %arg1 : i32, i32
  }
}

module attributes {stable_mosaic.version = 11 : i64} {
  func.func @kernel(%arg0: i32, %arg1: i32, %arg2: i32, %arg3: memref<10x512xbf16, #tpu.memory_space<vmem>>, %arg4: memref<512x128xbf16, #tpu.memory_space<vmem>>, %arg5: memref<1x128xf32, #tpu.memory_space<vmem>>, %arg6: memref<10x128xbf16, #tpu.memory_space<vmem>>, %arg7: memref<10x128xbf16, #tpu.memory_space<vmem>>) attributes {dimension_semantics = [#tpu.dimension_semantics<parallel>, #tpu.dimension_semantics<parallel>, #tpu.dimension_semantics<arbitrary>], iteration_bounds = array<i64: 1, 1, 1>, scalar_prefetch = 0 : i64, scratch_operands = 0 : i64, tpu.core_type = #tpu.core_type<tc>, window_params = [{transform_indices = @transform_0, window_bounds = array<i64: 10, 512>}, {transform_indices = @transform_1, window_bounds = array<i64: 512, 128>}, {transform_indices = @transform_2, window_bounds = array<i64: 1, 128>}, {transform_indices = @transform_3, window_bounds = array<i64: 10, 128>}, {transform_indices = @transform_4, window_bounds = array<i64: 10, 128>}]} {
    %c0 = arith.constant 0 : index
    %c0_0 = arith.constant 0 : index
    %0 = vector.load %arg3[%c0, %c0_0] : memref<10x512xbf16, #tpu.memory_space<vmem>>, vector<10x512xbf16>
    %c0_1 = arith.constant 0 : index
    %c0_2 = arith.constant 0 : index
    %1 = vector.load %arg4[%c0_1, %c0_2] : memref<512x128xbf16, #tpu.memory_space<vmem>>, vector<512x128xbf16>
    %cst = arith.constant dense<0.000000e+00> : vector<10x128xf32>
    %2 = tpu.matmul %0, %1, %cst {dimension_numbers = #tpu.dot_dimension_numbers<[1], [0], [0], [1], [0, 0, 1, 1], [], []>} : vector<10x512xbf16>, vector<512x128xbf16>, vector<10x128xf32> -> vector<10x128xf32>
    %c0_3 = arith.constant 0 : index
    %c0_4 = arith.constant 0 : index
    %3 = vector.load %arg5[%c0_3, %c0_4] : memref<1x128xf32, #tpu.memory_space<vmem>>, vector<1x128xf32>
    %4 = vector.broadcast %3 : vector<1x128xf32> to vector<10x128xf32>
    %5 = arith.addf %2, %4 : vector<10x128xf32>
    %c0_5 = arith.constant 0 : index
    %c0_6 = arith.constant 0 : index
    %6 = vector.load %arg6[%c0_5, %c0_6] : memref<10x128xbf16, #tpu.memory_space<vmem>>, vector<10x128xbf16>
    %7 = arith.extf %6 : vector<10x128xbf16> to vector<10x128xf32>
    %8 = arith.addf %5, %7 : vector<10x128xf32>
    %9 = arith.truncf %8 : vector<10x128xf32> to vector<10x128xbf16>
    %c0_7 = arith.constant 0 : index
    %c0_8 = arith.constant 0 : index
    %10 = vector.load %arg7[%c0_7, %c0_8] : memref<10x128xbf16, #tpu.memory_space<vmem>>, vector<10x128xbf16>
    tpu.vector_store %arg7[%c0_7, %c0_8], %9 {strides = array<i32>} : memref<10x128xbf16, #tpu.memory_space<vmem>>, vector<10x128xbf16>,
    return
  }
  func.func @transform_0(%arg0: i32, %arg1: i32, %arg2: i32) -> (i32, i32) {
    %c0_i32 = arith.constant 0 : i32
    return %arg0, %arg2 : i32, i32
  }
  func.func @transform_1(%arg0: i32, %arg1: i32, %arg2: i32) -> (i32, i32) {
    %c0_i32 = arith.constant 0 : i32
    return %arg2, %arg1 : i32, i32
  }
  func.func @transform_2(%arg0: i32, %arg1: i32, %arg2: i32) -> (i32, i32) {
    %c0_i32 = arith.constant 0 : i32
    %c0_i32_0 = arith.constant 0 : i32
    return %c0_i32, %arg1 : i32, i32
  }
  func.func @transform_3(%arg0: i32, %arg1: i32, %arg2: i32) -> (i32, i32) {
    %c0_i32 = arith.constant 0 : i32
    return %arg0, %arg1 : i32, i32
  }
  func.func @transform_4(%arg0: i32, %arg1: i32, %arg2: i32) -> (i32, i32) {
    %c0_i32 = arith.constant 0 : i32
    return %arg0, %arg1 : i32, i32
  }
}

module attributes {stable_mosaic.version = 11 : i64} {
  func.func @kernel(%arg0: i32, %arg1: i32, %arg2: i32, %arg3: memref<2x128xbf16, #tpu.memory_space<vmem>>, %arg4: memref<128x128xbf16, #tpu.memory_space<vmem>>, %arg5: memref<1x128xf32, #tpu.memory_space<vmem>>, %arg6: memref<1x128xf32, #tpu.memory_space<vmem>>, %arg7: memref<1x128xf32, #tpu.memory_space<vmem>>, %arg8: memref<2x128xf32, #tpu.memory_space<vmem>>) attributes {dimension_semantics = [#tpu.dimension_semantics<parallel>, #tpu.dimension_semantics<parallel>, #tpu.dimension_semantics<arbitrary>], iteration_bounds = array<i64: 1, 1, 1>, scalar_prefetch = 0 : i64, scratch_operands = 0 : i64, tpu.core_type = #tpu.core_type<tc>, window_params = [{transform_indices = @transform_0, window_bounds = array<i64: 2, 128>}, {transform_indices = @transform_1, window_bounds = array<i64: 128, 128>}, {transform_indices = @transform_2, window_bounds = array<i64: 1, 128>}, {transform_indices = @transform_3, window_bounds = array<i64: 1, 128>}, {transform_indices = @transform_4, window_bounds = array<i64: 1, 128>}, {transform_indices = @transform_5, window_bounds = array<i64: 2, 128>}]} {
    %c0 = arith.constant 0 : index
    %c0_0 = arith.constant 0 : index
    %0 = vector.load %arg3[%c0, %c0_0] : memref<2x128xbf16, #tpu.memory_space<vmem>>, vector<2x128xbf16>
    %1 = arith.extf %0 : vector<2x128xbf16> to vector<2x128xf32>
    %cst = arith.constant dense<0.000000e+00> : vector<2xf32>
    %2 = vector.multi_reduction <add>, %1, %cst [1] : vector<2x128xf32> to vector<2xf32>
    %3 = vector.shape_cast %2 : vector<2xf32> to vector<2x1xf32>
    %cst_1 = arith.constant 1.280000e+02 : f32
    %4 = vector.broadcast %cst_1 : f32 to vector<2x1xf32>
    %5 = arith.divf %3, %4 : vector<2x1xf32>
    %6 = vector.broadcast %5 : vector<2x1xf32> to vector<2x128xf32>
    %7 = arith.subf %1, %6 : vector<2x128xf32>
    %8 = arith.mulf %7, %7 : vector<2x128xf32>
    %cst_2 = arith.constant dense<0.000000e+00> : vector<2xf32>
    %9 = vector.multi_reduction <add>, %8, %cst_2 [1] : vector<2x128xf32> to vector<2xf32>
    %10 = vector.shape_cast %9 : vector<2xf32> to vector<2x1xf32>
    %cst_3 = arith.constant 1.280000e+02 : f32
    %11 = vector.broadcast %cst_3 : f32 to vector<2x1xf32>
    %12 = arith.divf %10, %11 : vector<2x1xf32>
    %13 = vector.broadcast %5 : vector<2x1xf32> to vector<2x128xf32>
    %14 = arith.subf %1, %13 : vector<2x128xf32>
    %cst_4 = arith.constant 9.99999974E-6 : f32
    %15 = vector.broadcast %cst_4 : f32 to vector<2x1xf32>
    %16 = arith.addf %12, %15 : vector<2x1xf32>
    %17 = math.rsqrt %16 : vector<2x1xf32>
    %18 = vector.broadcast %17 : vector<2x1xf32> to vector<2x128xf32>
    %19 = arith.mulf %14, %18 : vector<2x128xf32>
    %c0_5 = arith.constant 0 : index
    %c0_6 = arith.constant 0 : index
    %20 = vector.load %arg6[%c0_5, %c0_6] : memref<1x128xf32, #tpu.memory_space<vmem>>, vector<1x128xf32>
    %21 = vector.broadcast %20 : vector<1x128xf32> to vector<2x128xf32>
    %22 = arith.mulf %19, %21 : vector<2x128xf32>
    %c0_7 = arith.constant 0 : index
    %c0_8 = arith.constant 0 : index
    %23 = vector.load %arg7[%c0_7, %c0_8] : memref<1x128xf32, #tpu.memory_space<vmem>>, vector<1x128xf32>
    %24 = vector.broadcast %23 : vector<1x128xf32> to vector<2x128xf32>
    %25 = arith.addf %22, %24 : vector<2x128xf32>
    %26 = arith.truncf %25 : vector<2x128xf32> to vector<2x128xbf16>
    %c0_9 = arith.constant 0 : index
    %c0_10 = arith.constant 0 : index
    %27 = vector.load %arg4[%c0_9, %c0_10] : memref<128x128xbf16, #tpu.memory_space<vmem>>, vector<128x128xbf16>
    %cst_11 = arith.constant dense<0.000000e+00> : vector<2x128xf32>
    %28 = tpu.matmul %26, %27, %cst_11 {dimension_numbers = #tpu.dot_dimension_numbers<[1], [0], [0], [1], [0, 0, 1, 1], [], []>} : vector<2x128xbf16>, vector<128x128xbf16>, vector<2x128xf32> -> vector<2x128xf32>
    %c0_12 = arith.constant 0 : index
    %c0_13 = arith.constant 0 : index
    %29 = vector.load %arg5[%c0_12, %c0_13] : memref<1x128xf32, #tpu.memory_space<vmem>>, vector<1x128xf32>
    %30 = vector.broadcast %29 : vector<1x128xf32> to vector<2x128xf32>
    %31 = arith.addf %28, %30 : vector<2x128xf32>
    %c0_14 = arith.constant 0 : index
    %c0_15 = arith.constant 0 : index
    %32 = vector.load %arg8[%c0_14, %c0_15] : memref<2x128xf32, #tpu.memory_space<vmem>>, vector<2x128xf32>
    tpu.vector_store %arg8[%c0_14, %c0_15], %31 {strides = array<i32>} : memref<2x128xf32, #tpu.memory_space<vmem>>, vector<2x128xf32>,
    return
  }
  func.func @transform_0(%arg0: i32, %arg1: i32, %arg2: i32) -> (i32, i32) {
    %c0_i32 = arith.constant 0 : i32
    return %arg0, %arg2 : i32, i32
  }
  func.func @transform_1(%arg0: i32, %arg1: i32, %arg2: i32) -> (i32, i32) {
    %c0_i32 = arith.constant 0 : i32
    return %arg2, %arg1 : i32, i32
  }
  func.func @transform_2(%arg0: i32, %arg1: i32, %arg2: i32) -> (i32, i32) {
    %c0_i32 = arith.constant 0 : i32
    %c0_i32_0 = arith.constant 0 : i32
    return %c0_i32, %arg1 : i32, i32
  }
  func.func @transform_3(%arg0: i32, %arg1: i32, %arg2: i32) -> (i32, i32) {
    %c0_i32 = arith.constant 0 : i32
    %c0_i32_0 = arith.constant 0 : i32
    return %c0_i32, %arg2 : i32, i32
  }
  func.func @transform_4(%arg0: i32, %arg1: i32, %arg2: i32) -> (i32, i32) {
    %c0_i32 = arith.constant 0 : i32
    %c0_i32_0 = arith.constant 0 : i32
    return %c0_i32, %arg2 : i32, i32
  }
  func.func @transform_5(%arg0: i32, %arg1: i32, %arg2: i32) -> (i32, i32) {
    %c0_i32 = arith.constant 0 : i32
    return %arg0, %arg1 : i32, i32
  }
}

</mosaic_0001>

<llo_original>
// kernel: vit_forward.12
$region0: #{vit_forward.12}
  #allocation0 [shape = 'u32[]', space=smem, size = 0x4, offset = 0x4, fixed_abs, tag = 'smem constant byte address 0x4 - core index']
  #allocation1 [shape = 'u32[144,128]{1,0:T(1,128)}', space=vmem, size = 0x12000, scoped, tag = 'internal scratch']
  %s0 = inlined_call_operand.vmem [shape: f32[8,192], index: 0, kind: input, shape index: {}]
  %s1 = inlined_call_operand.vmem [shape: bf16[192,128], index: 1, kind: input, shape index: {}]
  %s2 = inlined_call_operand.vmem [shape: f32[1,128], index: 2, kind: input, shape index: {}]
  %s3 = inlined_call_operand.vmem [shape: bf16[8,128], index: 3, kind: output, shape index: {}]
  %s4 = sld [smem:[#allocation0]]
  $region22: #{vit_forward.12} parent=0
    _
  %s6 = ssub.s32 1, %s4
  %s7 = scalar_select 0, %s6, %s4
  // Predicated region
  $region2: #{vit_forward.12} parent=0 // pred_check
    _
  $region3: #{vit_forward.12} parent=0 // pred_check_branch
    %9 = sbr.rel (0) target = $region5
  $region4: #{vit_forward.12} parent=0 // pred_region
    _
  $region5: #{vit_forward.12} parent=0 // pred_fallthru
    _
  // Predicated region
  $region6: #{vit_forward.12} parent=0 // pred_check
    _
  $region7: #{vit_forward.12} parent=0 // pred_check_branch
    %11 = sbr.rel (0) target = $region9
  $region8: #{vit_forward.12} parent=0 // pred_region
    _
  $region9: #{vit_forward.12} parent=0 // pred_fallthru
    _
  // Predicated region
  $region10: #{vit_forward.12} parent=0 // pred_check
    _
  $region11: #{vit_forward.12} parent=0 // pred_check_branch
    %13 = sbr.rel (0) target = $region13
  $region12: #{vit_forward.12} parent=0 // pred_region
    _
  $region13: #{vit_forward.12} parent=0 // pred_fallthru
    _
  %v15 = vld [vmem:[%s0] sm:$0xff]
  %v16 = vld [vmem:[%s0 + $0x8] sm:$0xff]
  %v17 = vpack.c.bf16 %v15, %v15
  %v18 = vpack.c.bf16 %v16, %v16
  %v19 = vld [vmem:[%s1] sm:$0xf]
  %v20 = vld [vmem:[%s1 + $0x4] sm:$0xf]
  %v21 = vld [vmem:[%s1 + $0x8] sm:$0xf]
  %v22 = vld [vmem:[%s1 + $0xc] sm:$0xf]
  %v23 = vld [vmem:[%s1 + $0x10] sm:$0xf]
  %v24 = vld [vmem:[%s1 + $0x14] sm:$0xf]
  %v25 = vld [vmem:[%s1 + $0x18] sm:$0xf]
  %v26 = vld [vmem:[%s1 + $0x1c] sm:$0xf]
  %v27 = vld [vmem:[%s1 + $0x20] sm:$0xf]
  %v28 = vld [vmem:[%s1 + $0x24] sm:$0xf]
  %v29 = vld [vmem:[%s1 + $0x28] sm:$0xf]
  %v30 = vld [vmem:[%s1 + $0x2c] sm:$0xf]
  %v31 = vld [vmem:[%s1 + $0x30] sm:$0xf]
  %v32 = vld [vmem:[%s1 + $0x34] sm:$0xf]
  %v33 = vld [vmem:[%s1 + $0x38] sm:$0xf]
  %v34 = vld [vmem:[%s1 + $0x3c] sm:$0xf]
  %v35 = vld [vmem:[%s1 + $0x40] sm:$0xf]
  %v36 = vld [vmem:[%s1 + $0x44] sm:$0xf]
  %v37 = vld [vmem:[%s1 + $0x48] sm:$0xf]
  %v38 = vld [vmem:[%s1 + $0x4c] sm:$0xf]
  %v39 = vld [vmem:[%s1 + $0x50] sm:$0xf]
  %v40 = vld [vmem:[%s1 + $0x54] sm:$0xf]
  %v41 = vld [vmem:[%s1 + $0x58] sm:$0xf]
  %v42 = vld [vmem:[%s1 + $0x5c] sm:$0xf]
  %v43 = vld [vmem:[%s2] sm:$0x1]
  %v45 = vlaneseq
  %v46 = vshrl.u32 %v45, 7
  %v47 = vsub.s32 0, %v46
  %v48 = vrot.slane %v43, %v47
  %v74 = vunpack.c.l.b16 %v19
  %v75 = vunpack.c.l.b16 %v20
  %v76 = vunpack.c.l.b16 %v21
  %v77 = vunpack.c.l.b16 %v22
  %v78 = vunpack.c.l.b16 %v23
  %v79 = vunpack.c.l.b16 %v24
  %v80 = vunpack.c.l.b16 %v25
  %v81 = vunpack.c.l.b16 %v26
  %v82 = vunpack.c.l.b16 %v27
  %v83 = vunpack.c.l.b16 %v28
  %v84 = vunpack.c.l.b16 %v29
  %v85 = vunpack.c.l.b16 %v30
  %v86 = vunpack.c.l.b16 %v31
  %v87 = vunpack.c.l.b16 %v32
  %v88 = vunpack.c.l.b16 %v33
  %v89 = vunpack.c.l.b16 %v34
  %v90 = vunpack.c.l.b16 %v35
  %v91 = vunpack.c.l.b16 %v36
  %v92 = vunpack.c.l.b16 %v37
  %v93 = vunpack.c.l.b16 %v38
  %v94 = vunpack.c.l.b16 %v39
  %v95 = vunpack.c.l.b16 %v40
  %v96 = vunpack.c.l.b16 %v41
  %v97 = vunpack.c.l.b16 %v42
  %v98 = vpack.c.b16 %v75, %v74
  %v99 = vpack.c.b16 %v77, %v76
  %v100 = vpack.c.b16 %v79, %v78
  %v101 = vpack.c.b16 %v81, %v80
  %v102 = vpack.c.b16 %v83, %v82
  %v103 = vpack.c.b16 %v85, %v84
  %v104 = vpack.c.b16 %v87, %v86
  %v105 = vpack.c.b16 %v89, %v88
  %v106 = vpack.c.b16 %v91, %v90
  %v107 = vpack.c.b16 %v93, %v92
  %v108 = vpack.c.b16 %v95, %v94
  %v109 = vpack.c.b16 %v97, %v96
  %vm122 = vcmask 523264
  %v124 = vsel %vm122, %v18, 0
  %126 = vmatprep.subr.bf16.mxu0 0
  %127 = vmatpush1.bf16.msra.mxu0 %v98
  %128 = vmatprep.subr.bf16.mxu0 0
  %129 = vmatpush1.bf16.msra.mxu0 %v99
  %130 = vmatprep.subr.bf16.mxu0 0
  %131 = vmatpush1.bf16.msra.mxu0 %v100
  %132 = vmatprep.subr.bf16.mxu0 0
  %133 = vmatpush1.bf16.msra.mxu0 %v101
  %134 = vmatprep.subr.bf16.mxu0 0
  %135 = vmatpush1.bf16.msra.mxu0 %v102
  %136 = vmatprep.subr.bf16.mxu0 0
  %137 = vmatpush1.bf16.msra.mxu0 %v103
  %138 = vmatprep.subr.bf16.mxu0 0
  %139 = vmatpush1.bf16.msra.mxu0 %v104
  %140 = vmatprep.subr.bf16.mxu0 0
  %141 = vmatpush1.bf16.msra.mxu0 %v105
  %142 = vmatprep.subr.bf16.mxu0 0
  %143 = vmatpush1.bf16.msra.mxu0 %v106
  %144 = vmatprep.subr.bf16.mxu0 0
  %145 = vmatpush1.bf16.msra.mxu0 %v107
  %146 = vmatprep.subr.bf16.mxu0 0
  %147 = vmatpush1.bf16.msra.mxu0 %v108
  %148 = vmatprep.subr.bf16.mxu0 0
  %149 = vmatpush1.bf16.msra.mxu0 %v109
  %150 = vmatprep.subr.bf16.mxu0 0
  %151 = vmatpush1.bf16.msra.mxu0 0
  %152 = vmatprep.subr.bf16.mxu0 0
  %153 = vmatpush1.bf16.msra.mxu0 0
  %154 = vmatprep.subr.bf16.mxu0 0
  %155 = vmatpush1.bf16.msra.mxu0 0
  %156 = vmatprep.subr.bf16.mxu0 0
  %157 = vmatpush1.bf16.msra.mxu0 0
  %158 = vmatprep.mubr.bf16.mxu0 %v124
  %159 = vmatmul.mubr.bf16.gmra.mrb[0].mxu0 %v17
  %v160 = vpop.f32.mrb[0].mxu0
  %v161 = vadd.f32 %v48, %v160
  %v162 = vpop.f32.mrb[0].mxu0
  %v163 = vpop.f32.mrb[0].mxu0
  %v164 = vpop.f32.mrb[0].mxu0
  %165 = vdwg.mxu0
  %v166 = vpack.c.bf16 %v161, %v161
  %167 = vst [vmem:[%s3] sm:$0xf] %v166
  // Predicated region
  $region14: #{vit_forward.12} parent=0 // pred_check
    _
  $region15: #{vit_forward.12} parent=0 // pred_check_branch
    %169 = sbr.rel (0) target = $region17
  $region16: #{vit_forward.12} parent=0 // pred_region
    _
  $region17: #{vit_forward.12} parent=0 // pred_fallthru
    _
  // Predicated region
  $region18: #{vit_forward.12} parent=0 // pred_check
    _
  $region19: #{vit_forward.12} parent=0 // pred_check_branch
    %171 = sbr.rel (0) target = $region21
  $region20: #{vit_forward.12} parent=0 // pred_region
    _
  $region21: #{vit_forward.12} parent=0 // pred_fallthru
    _

// kernel: vit_forward.15
$region0: #{vit_forward.15}
  #allocation0 [shape = 'u32[]', space=smem, size = 0x4, offset = 0x4, fixed_abs, tag = 'smem constant byte address 0x4 - core index']
  #allocation1 [shape = 'u32[144,128]{1,0:T(1,128)}', space=vmem, size = 0x12000, scoped, tag = 'internal scratch']
  %s0 = inlined_call_operand.vmem [shape: bf16[10,128], index: 0, kind: input, shape index: {}]
  %s1 = inlined_call_operand.vmem [shape: bf16[128,128], index: 1, kind: input, shape index: {}]
  %s2 = inlined_call_operand.vmem [shape: f32[1,128], index: 2, kind: input, shape index: {}]
  %s3 = inlined_call_operand.vmem [shape: bf16[10,128], index: 3, kind: input, shape index: {}]
  %s4 = inlined_call_operand.vmem [shape: bf16[10,128], index: 4, kind: output, shape index: {}]
  %s5 = sld [smem:[#allocation0]]
  $region26: #{vit_forward.15} parent=0
    _
  %s7 = ssub.s32 1, %s5
  %s8 = scalar_select 0, %s7, %s5
  // Predicated region
  $region2: #{vit_forward.15} parent=0 // pred_check
    _
  $region3: #{vit_forward.15} parent=0 // pred_check_branch
    %10 = sbr.rel (0) target = $region5
  $region4: #{vit_forward.15} parent=0 // pred_region
    _
  $region5: #{vit_forward.15} parent=0 // pred_fallthru
    _
  // Predicated region
  $region6: #{vit_forward.15} parent=0 // pred_check
    _
  $region7: #{vit_forward.15} parent=0 // pred_check_branch
    %12 = sbr.rel (0) target = $region9
  $region8: #{vit_forward.15} parent=0 // pred_region
    _
  $region9: #{vit_forward.15} parent=0 // pred_fallthru
    _
  // Predicated region
  $region10: #{vit_forward.15} parent=0 // pred_check
    _
  $region11: #{vit_forward.15} parent=0 // pred_check_branch
    %14 = sbr.rel (0) target = $region13
  $region12: #{vit_forward.15} parent=0 // pred_region
    _
  $region13: #{vit_forward.15} parent=0 // pred_fallthru
    _
  // Predicated region
  $region14: #{vit_forward.15} parent=0 // pred_check
    _
  $region15: #{vit_forward.15} parent=0 // pred_check_branch
    %16 = sbr.rel (0) target = $region17
  $region16: #{vit_forward.15} parent=0 // pred_region
    _
  $region17: #{vit_forward.15} parent=0 // pred_fallthru
    _
  %v18 = vld [vmem:[%s0] sm:$0xf]
  %v19 = vld [vmem:[%s0 + $0x4] sm:$0x1]
  %v20 = vld [vmem:[%s1] sm:$0xf]
  %v21 = vld [vmem:[%s1 + $0x4] sm:$0xf]
  %v22 = vld [vmem:[%s1 + $0x8] sm:$0xf]
  %v23 = vld [vmem:[%s1 + $0xc] sm:$0xf]
  %v24 = vld [vmem:[%s1 + $0x10] sm:$0xf]
  %v25 = vld [vmem:[%s1 + $0x14] sm:$0xf]
  %v26 = vld [vmem:[%s1 + $0x18] sm:$0xf]
  %v27 = vld [vmem:[%s1 + $0x1c] sm:$0xf]
  %v28 = vld [vmem:[%s1 + $0x20] sm:$0xf]
  %v29 = vld [vmem:[%s1 + $0x24] sm:$0xf]
  %v30 = vld [vmem:[%s1 + $0x28] sm:$0xf]
  %v31 = vld [vmem:[%s1 + $0x2c] sm:$0xf]
  %v32 = vld [vmem:[%s1 + $0x30] sm:$0xf]
  %v33 = vld [vmem:[%s1 + $0x34] sm:$0xf]
  %v34 = vld [vmem:[%s1 + $0x38] sm:$0xf]
  %v35 = vld [vmem:[%s1 + $0x3c] sm:$0xf]
  %v36 = vld [vmem:[%s2] sm:$0x1]
  %v38 = vlaneseq
  %v39 = vshrl.u32 %v38, 7
  %v40 = vsub.s32 0, %v39
  %v41 = vrot.slane %v36, %v40
  %v45 = vunpack.c.l.b16 %v18
  %v46 = vunpack.c.l.b16 %v19
  %v47 = vpack.c.b16 %v46, %v45
  %v65 = vunpack.c.l.b16 %v20
  %v66 = vunpack.c.l.b16 %v21
  %v67 = vunpack.c.l.b16 %v22
  %v68 = vunpack.c.l.b16 %v23
  %v69 = vunpack.c.l.b16 %v24
  %v70 = vunpack.c.l.b16 %v25
  %v71 = vunpack.c.l.b16 %v26
  %v72 = vunpack.c.l.b16 %v27
  %v73 = vunpack.c.l.b16 %v28
  %v74 = vunpack.c.l.b16 %v29
  %v75 = vunpack.c.l.b16 %v30
  %v76 = vunpack.c.l.b16 %v31
  %v77 = vunpack.c.l.b16 %v32
  %v78 = vunpack.c.l.b16 %v33
  %v79 = vunpack.c.l.b16 %v34
  %v80 = vunpack.c.l.b16 %v35
  %v81 = vpack.c.b16 %v66, %v65
  %v82 = vpack.c.b16 %v68, %v67
  %v83 = vpack.c.b16 %v70, %v69
  %v84 = vpack.c.b16 %v72, %v71
  %v85 = vpack.c.b16 %v74, %v73
  %v86 = vpack.c.b16 %v76, %v75
  %v87 = vpack.c.b16 %v78, %v77
  %v88 = vpack.c.b16 %v80, %v79
  %97 = vmatprep.subr.bf16.mxu0 0
  %98 = vmatpush1.bf16.msra.mxu0 %v81
  %99 = vmatprep.subr.bf16.mxu0 0
  %100 = vmatpush1.bf16.msra.mxu0 %v82
  %101 = vmatprep.subr.bf16.mxu0 0
  %102 = vmatpush1.bf16.msra.mxu0 %v83
  %103 = vmatprep.subr.bf16.mxu0 0
  %104 = vmatpush1.bf16.msra.mxu0 %v84
  %105 = vmatprep.subr.bf16.mxu0 0
  %106 = vmatpush1.bf16.msra.mxu0 %v85
  %107 = vmatprep.subr.bf16.mxu0 0
  %108 = vmatpush1.bf16.msra.mxu0 %v86
  %109 = vmatprep.subr.bf16.mxu0 0
  %110 = vmatpush1.bf16.msra.mxu0 %v87
  %111 = vmatprep.subr.bf16.mxu0 0
  %112 = vmatpush1.bf16.msra.mxu0 %v88
  %113 = vmatprep.subr.bf16.mxu0 0
  %114 = vmatpush1.bf16.msra.mxu0 0
  %115 = vmatprep.subr.bf16.mxu0 0
  %116 = vmatpush1.bf16.msra.mxu0 0
  %117 = vmatprep.subr.bf16.mxu0 0
  %118 = vmatpush1.bf16.msra.mxu0 0
  %119 = vmatprep.subr.bf16.mxu0 0
  %120 = vmatpush1.bf16.msra.mxu0 0
  %121 = vmatprep.subr.bf16.mxu0 0
  %122 = vmatpush1.bf16.msra.mxu0 0
  %123 = vmatprep.subr.bf16.mxu0 0
  %124 = vmatpush1.bf16.msra.mxu0 0
  %125 = vmatprep.subr.bf16.mxu0 0
  %126 = vmatpush1.bf16.msra.mxu0 0
  %127 = vmatprep.subr.bf16.mxu0 0
  %128 = vmatpush1.bf16.msra.mxu0 0
  %129 = vmatprep.mubr.bf16.mxu0 0
  %130 = vmatmul.mubr.bf16.gmra.mrb[0].mxu0 %v47
  %v131 = vpop.f32.mrb[0].mxu0
  %v132 = vadd.f32 %v41, %v131
  %v133 = vpop.f32.mrb[0].mxu0
  %v134 = vpop.f32.mrb[0].mxu0
  %v135 = vadd.f32 %v41, %v134
  %v136 = vpop.f32.mrb[0].mxu0
  %137 = vdwg.mxu0
  %v138 = vld [vmem:[%s3] sm:$0xf]
  %v139 = vld [vmem:[%s3 + $0x4] sm:$0x1]
  %v140 = vunpack.c.l.bf16 %v138
  %v141 = vunpack.c.l.bf16 %v139
  %v142 = vadd.f32 %v132, %v140
  %v143 = vadd.f32 %v135, %v141
  %v144 = vpack.c.bf16 %v143, %v142
  %v146 = vunpack.c.l.b16 %v144
  %v147 = vunpack.c.h.b16 %v144
  %v148 = vpack.c.b16 %v146, %v146
  %v149 = vpack.c.b16 %v147, %v147
  %152 = vst [vmem:[%s4] sm:$0xf] %v148
  %153 = vst [vmem:[%s4 + $0x4] sm:$0x1] %v149
  // Predicated region
  $region18: #{vit_forward.15} parent=0 // pred_check
    _
  $region19: #{vit_forward.15} parent=0 // pred_check_branch
    %155 = sbr.rel (0) target = $region21
  $region20: #{vit_forward.15} parent=0 // pred_region
    _
  $region21: #{vit_forward.15} parent=0 // pred_fallthru
    _
  // Predicated region
  $region22: #{vit_forward.15} parent=0 // pred_check
    _
  $region23: #{vit_forward.15} parent=0 // pred_check_branch
    %157 = sbr.rel (0) target = $region25
  $region24: #{vit_forward.15} parent=0 // pred_region
    _
  $region25: #{vit_forward.15} parent=0 // pred_fallthru
    _

// kernel: vit_forward.13
$region0: #{vit_forward.13}
  #allocation0 [shape = 'u32[]', space=smem, size = 0x4, offset = 0x4, fixed_abs, tag = 'smem constant byte address 0x4 - core index']
  #allocation1 [shape = 'u32[144,128]{1,0:T(1,128)}', space=vmem, size = 0x12000, scoped, tag = 'internal scratch']
  #allocation2 [shape = 'bf16[10,128]{1,0:T(8,128)(2,1)}', space=vmem, size = 0x1000, scoped, tag = 'scratch operand']
  %s0 = inlined_call_operand.vmem [shape: bf16[10,128], index: 0, kind: input, shape index: {}]
  %s1 = inlined_call_operand.vmem [shape: bf16[128,384], index: 1, kind: input, shape index: {}]
  %s2 = inlined_call_operand.vmem [shape: f32[1,384], index: 2, kind: input, shape index: {}]
  %s3 = inlined_call_operand.vmem [shape: f32[1,128], index: 3, kind: input, shape index: {}]
  %s4 = inlined_call_operand.vmem [shape: f32[1,128], index: 4, kind: input, shape index: {}]
  %s5 = inlined_call_operand.vmem [shape: bf16[10,384], index: 5, kind: output, shape index: {}]
  %s6 = sld [smem:[#allocation0]]
  $region135: #{vit_forward.13} parent=0
    _
  %s8 = ssub.s32 1, %s6
  %s9 = scalar_select 0, %s8, %s6
  $region1: #{vit_forward.13} parent=0
    #allocation3 [shape = 'u8[65536]{0}', space=vmem, size = 0x10000, scoped, tag = 'input window, operand 1']
    #allocation4 [shape = 'u8[8192]{0}', space=vmem, size = 0x2000, scoped, tag = 'output window, operand 0']
    loop: start=0, step=1, limit=5
    $region2: #{vit_forward.13} parent=1 // loop_pre_header
      _
    $region3: #{vit_forward.13} parent=1 // loop_header
      %s11 = sphi 0, %s15
      %p12 = scmp.ge.s32.totalorder %s11, 5
      %s18 = sphi 0, %s37
      %s19 = sphi 0, %s33
      %s20 = sphi 0, %s29
      %s21 = sphi 0, %s18
      %s22 = sphi 0, %s19
      %s23 = sphi 0, %s20
      %s24 = sphi 0, %s21
      %s25 = sphi 0, %s22
      %s26 = sphi 0, %s23
      %s42 = sphi 0, %s44
      %s45 = sphi 0, %s42
      %s46 = sphi 0, %s45
      %s62 = sphi 0, %s46
      %s70 = sphi 0, %s72
      %s73 = sphi 0, %s70
      %s74 = sphi 0, %s73
      %s90 = sphi 0, %s74
      %s96 = sphi 0, %s98
      %s99 = sphi 0, %s96
      %s100 = sphi 0, %s99
      %s116 = sphi 0, %s100
      %s122 = sphi 0, %s124
      %s125 = sphi 0, %s122
      %s126 = sphi 0, %s125
      %s142 = sphi 0, %s126
      %s148 = sphi 0, %s150
      %s151 = sphi 0, %s148
      %s152 = sphi 0, %s151
      %s168 = sphi 0, %s152
      %s176 = sphi 0, %s178
      %s179 = sphi 0, %s176
      %s180 = sphi 0, %s179
      %s196 = sphi 0, %s180
    $region4: #{vit_forward.13} parent=1 // loop_header_branch
      %14 = sbr.rel (%p12) target = $region8
    $region5: #{vit_forward.13} parent=1 // loop_body
      %s16 = ssub.s32 %s11, 1
      %s17 = ssub.s32 %s11, 2
      %s27 = sadd.s32 1, %s20
      %p28 = scmp.ge.s32.totalorder %s27, 1
      %s29 = scalar_select %p28, 0, %s27
      %s30 = sadd.s32 1, %s19
      %s31 = scalar_select %p28, %s30, %s19
      %p32 = scmp.ge.s32.totalorder %s31, 3
      %s33 = scalar_select %p32, 0, %s31
      %s34 = sadd.s32 1, %s18
      %s35 = scalar_select %p32, %s34, %s18
      %p36 = scmp.ge.s32.totalorder %s35, 1
      %s37 = scalar_select %p36, 0, %s35
      %s38 = ssub.s32 %s18, %s37
      %s39 = ssub.s32 %s20, %s29
      %s40 = sor.u32 %s38, %s39
      %p41 = scmp.eq.s32.totalorder %s40, 0
      %s43 = sadd.s32 %s42, 1
      %s44 = scalar_select %p41, %s42, %s43
      %p47 = pneg %p41
      %p48 = scmp.eq.s32.totalorder %s11, 2
      %p49 = por %p47, %p48
      %p50 = scmp.ne.s32.totalorder %s42, %s45
      %p51 = scmp.eq.s32.totalorder %s11, 0
      %p52 = por %p50, %p51
      %p53 = scmp.ne.s32.totalorder %s42, %s45
      %p54 = scmp.eq.s32.totalorder %s16, 2
      %p55 = por %p53, %p54
      %p56 = scmp.ne.s32.totalorder %s45, %s46
      %p57 = scmp.eq.s32.totalorder %s16, 0
      %p58 = por %p56, %p57
      %p59 = scmp.ne.s32.totalorder %s45, %s46
      %p60 = scmp.eq.s32.totalorder %s17, 2
      %p61 = por %p59, %p60
      %p63 = scmp.ne.s32.totalorder %s46, %s62
      %p64 = scmp.eq.s32.totalorder %s17, 0
      %p65 = por %p63, %p64
      %s66 = ssub.s32 %s20, %s29
      %s67 = ssub.s32 %s19, %s33
      %s68 = sor.u32 %s66, %s67
      %p69 = scmp.eq.s32.totalorder %s68, 0
      %s71 = sadd.s32 %s70, 1
      %s72 = scalar_select %p69, %s70, %s71
      %p75 = pneg %p69
      %p76 = scmp.eq.s32.totalorder %s11, 2
      %p77 = por %p75, %p76
      %p78 = scmp.ne.s32.totalorder %s70, %s73
      %p79 = scmp.eq.s32.totalorder %s11, 0
      %p80 = por %p78, %p79
      %p81 = scmp.ne.s32.totalorder %s70, %s73
      %p82 = scmp.eq.s32.totalorder %s16, 2
      %p83 = por %p81, %p82
      %p84 = scmp.ne.s32.totalorder %s73, %s74
      %p85 = scmp.eq.s32.totalorder %s16, 0
      %p86 = por %p84, %p85
      %p87 = scmp.ne.s32.totalorder %s73, %s74
      %p88 = scmp.eq.s32.totalorder %s17, 2
      %p89 = por %p87, %p88
      %p91 = scmp.ne.s32.totalorder %s74, %s90
      %p92 = scmp.eq.s32.totalorder %s17, 0
      %p93 = por %p91, %p92
      %s94 = ssub.s32 %s19, %s33
      %p95 = scmp.eq.s32.totalorder %s94, 0
      %s97 = sadd.s32 %s96, 1
      %s98 = scalar_select %p95, %s96, %s97
      %p101 = pneg %p95
      %p102 = scmp.eq.s32.totalorder %s11, 2
      %p103 = por %p101, %p102
      %p104 = scmp.ne.s32.totalorder %s96, %s99
      %p105 = scmp.eq.s32.totalorder %s11, 0
      %p106 = por %p104, %p105
      %p107 = scmp.ne.s32.totalorder %s96, %s99
      %p108 = scmp.eq.s32.totalorder %s16, 2
      %p109 = por %p107, %p108
      %p110 = scmp.ne.s32.totalorder %s99, %s100
      %p111 = scmp.eq.s32.totalorder %s16, 0
      %p112 = por %p110, %p111
      %p113 = scmp.ne.s32.totalorder %s99, %s100
      %p114 = scmp.eq.s32.totalorder %s17, 2
      %p115 = por %p113, %p114
      %p117 = scmp.ne.s32.totalorder %s100, %s116
      %p118 = scmp.eq.s32.totalorder %s17, 0
      %p119 = por %p117, %p118
      %s120 = ssub.s32 %s20, %s29
      %p121 = scmp.eq.s32.totalorder %s120, 0
      %s123 = sadd.s32 %s122, 1
      %s124 = scalar_select %p121, %s122, %s123
      %p127 = pneg %p121
      %p128 = scmp.eq.s32.totalorder %s11, 2
      %p129 = por %p127, %p128
      %p130 = scmp.ne.s32.totalorder %s122, %s125
      %p131 = scmp.eq.s32.totalorder %s11, 0
      %p132 = por %p130, %p131
      %p133 = scmp.ne.s32.totalorder %s122, %s125
      %p134 = scmp.eq.s32.totalorder %s16, 2
      %p135 = por %p133, %p134
      %p136 = scmp.ne.s32.totalorder %s125, %s126
      %p137 = scmp.eq.s32.totalorder %s16, 0
      %p138 = por %p136, %p137
      %p139 = scmp.ne.s32.totalorder %s125, %s126
      %p140 = scmp.eq.s32.totalorder %s17, 2
      %p141 = por %p139, %p140
      %p143 = scmp.ne.s32.totalorder %s126, %s142
      %p144 = scmp.eq.s32.totalorder %s17, 0
      %p145 = por %p143, %p144
      %s146 = ssub.s32 %s20, %s29
      %p147 = scmp.eq.s32.totalorder %s146, 0
      %s149 = sadd.s32 %s148, 1
      %s150 = scalar_select %p147, %s148, %s149
      %p153 = pneg %p147
      %p154 = scmp.eq.s32.totalorder %s11, 2
      %p155 = por %p153, %p154
      %p156 = scmp.ne.s32.totalorder %s148, %s151
      %p157 = scmp.eq.s32.totalorder %s11, 0
      %p158 = por %p156, %p157
      %p159 = scmp.ne.s32.totalorder %s148, %s151
      %p160 = scmp.eq.s32.totalorder %s16, 2
      %p161 = por %p159, %p160
      %p162 = scmp.ne.s32.totalorder %s151, %s152
      %p163 = scmp.eq.s32.totalorder %s16, 0
      %p164 = por %p162, %p163
      %p165 = scmp.ne.s32.totalorder %s151, %s152
      %p166 = scmp.eq.s32.totalorder %s17, 2
      %p167 = por %p165, %p166
      %p169 = scmp.ne.s32.totalorder %s152, %s168
      %p170 = scmp.eq.s32.totalorder %s17, 0
      %p171 = por %p169, %p170
      %s172 = ssub.s32 %s18, %s37
      %s173 = ssub.s32 %s19, %s33
      %s174 = sor.u32 %s172, %s173
      %p175 = scmp.eq.s32.totalorder %s174, 0
      %s177 = sadd.s32 %s176, 1
      %s178 = scalar_select %p175, %s176, %s177
      %p181 = pneg %p175
      %p182 = scmp.eq.s32.totalorder %s11, 2
      %p183 = por %p181, %p182
      %p184 = scmp.ne.s32.totalorder %s176, %s179
      %p185 = scmp.eq.s32.totalorder %s11, 0
      %p186 = por %p184, %p185
      %p187 = scmp.ne.s32.totalorder %s176, %s179
      %p188 = scmp.eq.s32.totalorder %s16, 2
      %p189 = por %p187, %p188
      %p190 = scmp.ne.s32.totalorder %s179, %s180
      %p191 = scmp.eq.s32.totalorder %s16, 0
      %p192 = por %p190, %p191
      %p193 = scmp.ne.s32.totalorder %s179, %s180
      %p194 = scmp.eq.s32.totalorder %s17, 2
      %p195 = por %p193, %p194
      %p197 = scmp.ne.s32.totalorder %s180, %s196
      %p198 = scmp.eq.s32.totalorder %s17, 0
      %p199 = por %p197, %p198
      %p200 = scmp.le.s32.totalorder 1, %s11
      %p201 = scmp.lt.s32.totalorder %s11, 4
      %p202 = pnand %p200, %p201
      %p203 = pneg %p202
      // Predicated region
      $region9: #{vit_forward.13} parent=5 // pred_check
        _
      $region10: #{vit_forward.13} parent=5 // pred_check_branch
        %205 = sbr.rel (%p202) target = $region12
      $region11: #{vit_forward.13} parent=5 // pred_region
        %s206 = ssub.s32 %s11, 1
        // Predicated region
        $region13: #{vit_forward.13} parent=11 // pred_check
          %p207 = pneg %p58
        $region14: #{vit_forward.13} parent=11 // pred_check_branch
          %209 = sbr.rel (%p207) target = $region16
        $region15: #{vit_forward.13} parent=11 // pred_region
          %s210 = smul.u32 2, %s21
          %p211 = scmp.lt.s32.totalorder %s210, 1
          %s212 = scalar_select %p211, %s210, 1
          %p213 = scmp.lt.s32.totalorder %s23, 0
          %s214 = scalar_select %p213, %s23, 0
          %s215 = sadd.s32 %s214, %s212
          %s216 = smul.addr %s215, 4
          %s217 = scalar_lea.vmem %s0, %s216
          %s218 = smul.u32 2, %s21
        $region16: #{vit_forward.13} parent=11 // pred_fallthru
          _
        // Predicated region
        $region17: #{vit_forward.13} parent=11 // pred_check
          %p219 = pneg %p138
        $region18: #{vit_forward.13} parent=11 // pred_check_branch
          %221 = sbr.rel (%p219) target = $region20
        $region19: #{vit_forward.13} parent=11 // pred_region
          %p222 = scmp.lt.s32.totalorder %s23, 0
          %s223 = scalar_select %p222, %s23, 0
          %s224 = scalar_lea.vmem %s3, %s223
        $region20: #{vit_forward.13} parent=11 // pred_fallthru
          _
        // Predicated region
        $region21: #{vit_forward.13} parent=11 // pred_check
          %p225 = pneg %p164
        $region22: #{vit_forward.13} parent=11 // pred_check_branch
          %227 = sbr.rel (%p225) target = $region24
        $region23: #{vit_forward.13} parent=11 // pred_region
          %p228 = scmp.lt.s32.totalorder %s23, 0
          %s229 = scalar_select %p228, %s23, 0
          %s230 = scalar_lea.vmem %s4, %s229
        $region24: #{vit_forward.13} parent=11 // pred_fallthru
          _
      $region12: #{vit_forward.13} parent=5 // pred_fallthru
        _
      %p231 = scmp.lt.s32.totalorder %s11, 3
      // Predicated region
      $region25: #{vit_forward.13} parent=5 // pred_check
        %p232 = pneg %p231
      $region26: #{vit_forward.13} parent=5 // pred_check_branch
        %234 = sbr.rel (%p232) target = $region28
      $region27: #{vit_forward.13} parent=5 // pred_region
        // Predicated region
        $region29: #{vit_forward.13} parent=27 // pred_check
          %p235 = pneg %p80
        $region30: #{vit_forward.13} parent=27 // pred_check_branch
          %237 = sbr.rel (%p235) target = $region32
        $region31: #{vit_forward.13} parent=27 // pred_region
          %s238 = sand.u32 %s70, 1
          %s239 = sand.u32 %s70, 1
          %s240 = smul.addr %s239, 64
          %s241 = scalar_lea.vmem [#allocation3], %s240
          %s242 = smul.u32 16, %s20
          %s243 = smul.addr %s242, 3
          %s244 = sadd.s32 %s19, %s243
          %s245 = smul.addr %s244, 4
          %s246 = scalar_lea.vmem %s1, %s245
          // Predicated region
          $region33: #{vit_forward.13} parent=31 // pred_check
            _
          $region34: #{vit_forward.13} parent=31 // pred_check_branch
            %248 = sbr.rel (0) target = $region36
          $region35: #{vit_forward.13} parent=31 // pred_region
            // Predicated region
            $region37: #{vit_forward.13} parent=35 // pred_check
              _
            $region38: #{vit_forward.13} parent=35 // pred_check_branch
              %250 = sbr.rel target = $region40
            $region39: #{vit_forward.13} parent=35 // pred_region
              // Predicated region
              $region52: #{vit_forward.13} parent=39 // pred_check
                _
              $region53: #{vit_forward.13} parent=39 // pred_check_branch
                %295 = sbr.rel (0) target = $region55
              $region54: #{vit_forward.13} parent=39 // pred_region
                loop: start=0, step=1, limit=1
                $region56: #{vit_forward.13} parent=54 // loop_pre_header
                  _
                $region57: #{vit_forward.13} parent=54 // loop_header
                  %s297 = sphi 0, %s301
                  %p298 = scmp.ge.s32.totalorder %s297, 1
                  %s302 = sphi %s246, %s246
                  %s303 = sphi %s241, %s241
                $region58: #{vit_forward.13} parent=54 // loop_header_branch
                  %300 = sbr.rel (%p298) target = $region62
                $region59: #{vit_forward.13} parent=54 // loop_body
                  _
                $region60: #{vit_forward.13} parent=54 // loop_footer
                  %s301 = sadd.s32 1, %s297
                $region61: #{vit_forward.13} parent=54 // loop_footer_branch
                  %296 = sbr.rel target = $region57
                $region62: #{vit_forward.13} parent=54 // loop_exit
                  _
                loop: start=0, step=1, limit=1
                $region63: #{vit_forward.13} parent=54 // loop_pre_header
                  _
                $region64: #{vit_forward.13} parent=54 // loop_header
                  %s306 = sphi 0, %s310
                  %p307 = scmp.ge.s32.totalorder %s306, 1
                  %s311 = sphi %s246, %s246
                  %s312 = sphi %s241, %s241
                $region65: #{vit_forward.13} parent=54 // loop_header_branch
                  %309 = sbr.rel (%p307) target = $region69
                $region66: #{vit_forward.13} parent=54 // loop_body
                  %v313 = vld [vmem:[%s311] sm:$0xf]
                  %314 = vst [vmem:[%s312] sm:$0xf] %v313
                  %v315 = vld [vmem:[%s311 + $0xc] sm:$0xf]
                  %316 = vst [vmem:[%s312 + $0x4] sm:$0xf] %v315
                  %v317 = vld [vmem:[%s311 + $0x18] sm:$0xf]
                  %318 = vst [vmem:[%s312 + $0x8] sm:$0xf] %v317
                  %v319 = vld [vmem:[%s311 + $0x24] sm:$0xf]
                  %320 = vst [vmem:[%s312 + $0xc] sm:$0xf] %v319
                  %v321 = vld [vmem:[%s311 + $0x30] sm:$0xf]
                  %322 = vst [vmem:[%s312 + $0x10] sm:$0xf] %v321
                  %v323 = vld [vmem:[%s311 + $0x3c] sm:$0xf]
                  %324 = vst [vmem:[%s312 + $0x14] sm:$0xf] %v323
                  %v325 = vld [vmem:[%s311 + $0x48] sm:$0xf]
                  %326 = vst [vmem:[%s312 + $0x18] sm:$0xf] %v325
                  %v327 = vld [vmem:[%s311 + $0x54] sm:$0xf]
                  %328 = vst [vmem:[%s312 + $0x1c] sm:$0xf] %v327
                  %v329 = vld [vmem:[%s311 + $0x60] sm:$0xf]
                  %330 = vst [vmem:[%s312 + $0x20] sm:$0xf] %v329
                  %v331 = vld [vmem:[%s311 + $0x6c] sm:$0xf]
                  %332 = vst [vmem:[%s312 + $0x24] sm:$0xf] %v331
                  %v333 = vld [vmem:[%s311 + $0x78] sm:$0xf]
                  %334 = vst [vmem:[%s312 + $0x28] sm:$0xf] %v333
                  %v335 = vld [vmem:[%s311 + $0x84] sm:$0xf]
                  %336 = vst [vmem:[%s312 + $0x2c] sm:$0xf] %v335
                  %v337 = vld [vmem:[%s311 + $0x90] sm:$0xf]
                  %338 = vst [vmem:[%s312 + $0x30] sm:$0xf] %v337
                  %v339 = vld [vmem:[%s311 + $0x9c] sm:$0xf]
                  %340 = vst [vmem:[%s312 + $0x34] sm:$0xf] %v339
                  %v341 = vld [vmem:[%s311 + $0xa8] sm:$0xf]
                  %342 = vst [vmem:[%s312 + $0x38] sm:$0xf] %v341
                  %v343 = vld [vmem:[%s311 + $0xb4] sm:$0xf]
                  %344 = vst [vmem:[%s312 + $0x3c] sm:$0xf] %v343
                $region67: #{vit_forward.13} parent=54 // loop_footer
                  %s310 = sadd.s32 1, %s306
                $region68: #{vit_forward.13} parent=54 // loop_footer_branch
                  %305 = sbr.rel target = $region64
                $region69: #{vit_forward.13} parent=54 // loop_exit
                  _
              $region55: #{vit_forward.13} parent=39 // pred_fallthru
                _
            $region40: #{vit_forward.13} parent=35 // pred_fallthru
              _
            // Predicated region
            $region41: #{vit_forward.13} parent=35 // pred_check
              _
            $region42: #{vit_forward.13} parent=35 // pred_check_branch
              %252 = sbr.rel (0) target = $region44
            $region43: #{vit_forward.13} parent=35 // pred_region
              loop: start=0, step=1, limit=1
              $region45: #{vit_forward.13} parent=43 // loop_pre_header
                _
              $region46: #{vit_forward.13} parent=43 // loop_header
                %s255 = sphi 0, %s259
                %p256 = scmp.ge.s32.totalorder %s255, 1
                %s260 = sphi %s246, %s246
                %s261 = sphi %s241, %s241
              $region47: #{vit_forward.13} parent=43 // loop_header_branch
                %258 = sbr.rel (%p256) target = $region51
              $region48: #{vit_forward.13} parent=43 // loop_body
                %v262 = vld [vmem:[%s260] sm:$0xf]
                %263 = vst [vmem:[%s261] sm:$0xf] %v262
                %v264 = vld [vmem:[%s260 + $0xc] sm:$0xf]
                %265 = vst [vmem:[%s261 + $0x4] sm:$0xf] %v264
                %v266 = vld [vmem:[%s260 + $0x18] sm:$0xf]
                %267 = vst [vmem:[%s261 + $0x8] sm:$0xf] %v266
                %v268 = vld [vmem:[%s260 + $0x24] sm:$0xf]
                %269 = vst [vmem:[%s261 + $0xc] sm:$0xf] %v268
                %v270 = vld [vmem:[%s260 + $0x30] sm:$0xf]
                %271 = vst [vmem:[%s261 + $0x10] sm:$0xf] %v270
                %v272 = vld [vmem:[%s260 + $0x3c] sm:$0xf]
                %273 = vst [vmem:[%s261 + $0x14] sm:$0xf] %v272
                %v274 = vld [vmem:[%s260 + $0x48] sm:$0xf]
                %275 = vst [vmem:[%s261 + $0x18] sm:$0xf] %v274
                %v276 = vld [vmem:[%s260 + $0x54] sm:$0xf]
                %277 = vst [vmem:[%s261 + $0x1c] sm:$0xf] %v276
                %v278 = vld [vmem:[%s260 + $0x60] sm:$0xf]
                %279 = vst [vmem:[%s261 + $0x20] sm:$0xf] %v278
                %v280 = vld [vmem:[%s260 + $0x6c] sm:$0xf]
                %281 = vst [vmem:[%s261 + $0x24] sm:$0xf] %v280
                %v282 = vld [vmem:[%s260 + $0x78] sm:$0xf]
                %283 = vst [vmem:[%s261 + $0x28] sm:$0xf] %v282
                %v284 = vld [vmem:[%s260 + $0x84] sm:$0xf]
                %285 = vst [vmem:[%s261 + $0x2c] sm:$0xf] %v284
                %v286 = vld [vmem:[%s260 + $0x90] sm:$0xf]
                %287 = vst [vmem:[%s261 + $0x30] sm:$0xf] %v286
                %v288 = vld [vmem:[%s260 + $0x9c] sm:$0xf]
                %289 = vst [vmem:[%s261 + $0x34] sm:$0xf] %v288
                %v290 = vld [vmem:[%s260 + $0xa8] sm:$0xf]
                %291 = vst [vmem:[%s261 + $0x38] sm:$0xf] %v290
                %v292 = vld [vmem:[%s260 + $0xb4] sm:$0xf]
                %293 = vst [vmem:[%s261 + $0x3c] sm:$0xf] %v292
              $region49: #{vit_forward.13} parent=43 // loop_footer
                %s259 = sadd.s32 1, %s255
              $region50: #{vit_forward.13} parent=43 // loop_footer_branch
                %254 = sbr.rel target = $region46
              $region51: #{vit_forward.13} parent=43 // loop_exit
                _
            $region44: #{vit_forward.13} parent=35 // pred_fallthru
              _
          $region36: #{vit_forward.13} parent=31 // pred_fallthru
            _
          %345 = vnop
        $region32: #{vit_forward.13} parent=27 // pred_fallthru
          _
        // Predicated region
        $region70: #{vit_forward.13} parent=27 // pred_check
          %p346 = pneg %p106
        $region71: #{vit_forward.13} parent=27 // pred_check_branch
          %348 = sbr.rel (%p346) target = $region73
        $region72: #{vit_forward.13} parent=27 // pred_region
          %p349 = scmp.lt.s32.totalorder %s19, 2
          %s350 = scalar_select %p349, %s19, 2
          %s351 = scalar_lea.vmem %s2, %s350
        $region73: #{vit_forward.13} parent=27 // pred_fallthru
          _
      $region28: #{vit_forward.13} parent=5 // pred_fallthru
        _
      %p352 = scmp.le.s32.totalorder 1, %s11
      %p353 = scmp.lt.s32.totalorder %s11, 4
      %p354 = pnand %p352, %p353
      %p355 = pneg %p354
      // Predicated region
      $region74: #{vit_forward.13} parent=5 // pred_check
        _
      $region75: #{vit_forward.13} parent=5 // pred_check_branch
        %357 = sbr.rel (%p354) target = $region77
      $region76: #{vit_forward.13} parent=5 // pred_region
        %s358 = ssub.s32 %s11, 1
        %s359 = sand.u32 %s73, 1
        %s360 = sand.u32 %s73, 1
        %s361 = smul.addr %s360, 64
        %s362 = scalar_lea.vmem [#allocation3], %s361
        // Predicated region
        $region78: #{vit_forward.13} parent=76 // pred_check
          %p363 = pneg %p86
        $region79: #{vit_forward.13} parent=76 // pred_check_branch
          %365 = sbr.rel (%p363) target = $region81
        $region80: #{vit_forward.13} parent=76 // pred_region
          _
        $region81: #{vit_forward.13} parent=76 // pred_fallthru
          _
        %s366 = smul.u32 2, %s21
        %p367 = scmp.lt.s32.totalorder %s366, 1
        %s368 = scalar_select %p367, %s366, 1
        %p369 = scmp.lt.s32.totalorder %s23, 0
        %s370 = scalar_select %p369, %s23, 0
        %s371 = sadd.s32 %s370, %s368
        %s372 = smul.addr %s371, 4
        %s373 = scalar_lea.vmem %s0, %s372
        %p374 = pneg %p58
        %p375 = pneg %p55
        %s376 = sand.u32 %s73, 1
        %s377 = sand.u32 %s73, 1
        %s378 = smul.addr %s377, 64
        %s379 = scalar_lea.vmem [#allocation3], %s378
        %p380 = pneg %p86
        %p381 = pneg %p83
        %p382 = scmp.lt.s32.totalorder %s22, 2
        %s383 = scalar_select %p382, %s22, 2
        %s384 = scalar_lea.vmem %s2, %s383
        %p385 = pneg %p112
        %p386 = pneg %p109
        %p387 = scmp.lt.s32.totalorder %s23, 0
        %s388 = scalar_select %p387, %s23, 0
        %s389 = scalar_lea.vmem %s3, %s388
        %p390 = pneg %p138
        %p391 = pneg %p135
        %p392 = scmp.lt.s32.totalorder %s23, 0
        %s393 = scalar_select %p392, %s23, 0
        %s394 = scalar_lea.vmem %s4, %s393
        %p395 = pneg %p164
        %p396 = pneg %p161
        %p397 = pneg %p192
        %p398 = pneg %p189
        %s399 = sand.u32 %s179, 1
        %s400 = sand.u32 %s179, 1
        %s401 = smul.addr %s400, 8
        %s402 = scalar_lea.vmem [#allocation4], %s401
        %s403 = smul.u32 2, %s21
        %p404 = scmp.lt.s32.totalorder %s403, 1
        %s405 = scalar_select %p404, %s403, 1
        %p406 = scmp.lt.s32.totalorder %s23, 0
        %s407 = scalar_select %p406, %s23, 0
        %s408 = sadd.s32 %s407, %s405
        %s409 = smul.addr %s408, 4
        %s410 = scalar_lea.vmem %s0, %s409
        %s411 = smul.u32 2, %s21
        %s412 = smul.u32 16, %s23
        %p413 = scmp.lt.s32.totalorder %s22, 2
        %s414 = scalar_select %p413, %s22, 2
        %s415 = scalar_lea.vmem %s2, %s414
        %p416 = scmp.lt.s32.totalorder %s23, 0
        %s417 = scalar_select %p416, %s23, 0
        %s418 = scalar_lea.vmem %s3, %s417
        %p419 = scmp.lt.s32.totalorder %s23, 0
        %s420 = scalar_select %p419, %s23, 0
        %s421 = scalar_lea.vmem %s4, %s420
        %s422 = smul.u32 2, %s21
        %p424 = scmp.eq.s32.totalorder %s22, 0
        // Predicated region
        $region82: #{vit_forward.13} parent=76 // pred_check
          %p425 = pneg %p424
        $region83: #{vit_forward.13} parent=76 // pred_check_branch
          %427 = sbr.rel (%p425) target = $region85
        $region84: #{vit_forward.13} parent=76 // pred_region
          %v428 = vld [vmem:[%s410] sm:$0xf]
          %v429 = vld [vmem:[%s410 + $0x4] sm:$0x1]
          %v430 = vunpack.c.l.bf16 %v428
          %v431 = vunpack.c.l.bf16 %v429
          %432 = vadd.xlane.f32.xlu0 %v430
          %v433 = vpop.xlane.xlu0 %432
          %vm434 = vcmask 1041408
          %v435 = vsel %vm434, %v431, 0.0
          %436 = vadd.xlane.f32.xlu0 %v435
          %v437 = vpop.xlane.xlu0 %436
          %v438 = vrcp.pop 128.0
          %v439 = vmul.f32 %v433, %v438
          %v440 = vmul.f32 %v437, %v438
          %v441 = vsub.f32 %v430, %v439
          %v442 = vsub.f32 %v431, %v440
          %v443 = vmul.f32 %v441, %v441
          %v444 = vmul.f32 %v442, %v442
          %445 = vadd.xlane.f32.xlu0 %v443
          %v446 = vpop.xlane.xlu0 %445
          %v447 = vsel %vm434, %v444, 0.0
          %448 = vadd.xlane.f32.xlu0 %v447
          %v449 = vpop.xlane.xlu0 %448
          %v450 = vmul.f32 %v446, %v438
          %v451 = vmul.f32 %v449, %v438
          %v452 = vadd.f32 %v450, 1e-05
          %v453 = vadd.f32 %v451, 1e-05
          %v454 = vrsqrt.pop %v452
          %v455 = vrsqrt.pop %v453
          %v456 = vmul.f32 %v441, %v454
          %v457 = vmul.f32 %v442, %v455
          %v458 = vld [vmem:[%s418] sm:$0x1]
          %v460 = vlaneseq
          %v461 = vshrl.u32 %v460, 7
          %v462 = vsub.s32 0, %v461
          %v463 = vrot.slane %v458, %v462
          %v465 = vmul.f32 %v456, %v463
          %v466 = vmul.f32 %v457, %v463
          %v467 = vld [vmem:[%s421] sm:$0x1]
          %v469 = vlaneseq
          %v470 = vshrl.u32 %v469, 7
          %v471 = vsub.s32 0, %v470
          %v472 = vrot.slane %v467, %v471
          %v474 = vadd.f32 %v465, %v472
          %v475 = vadd.f32 %v466, %v472
          %v476 = vpack.c.bf16 %v475, %v474
          %v478 = vunpack.c.l.b16 %v476
          %v479 = vunpack.c.h.b16 %v476
          %v480 = vpack.c.b16 %v478, %v478
          %v481 = vpack.c.b16 %v479, %v479
          %484 = vst [vmem:[#allocation2] sm:$0xf] %v480
          %485 = vst [vmem:[#allocation2 + $0x4] sm:$0x1] %v481
        $region85: #{vit_forward.13} parent=76 // pred_fallthru
          _
        %v486 = vld [vmem:[#allocation2] sm:$0xf]
        %v487 = vld [vmem:[#allocation2 + $0x4] sm:$0x1]
        %v488 = vld [vmem:[%s362] sm:$0xf]
        %v489 = vld [vmem:[%s362 + $0x4] sm:$0xf]
        %v490 = vld [vmem:[%s362 + $0x8] sm:$0xf]
        %v491 = vld [vmem:[%s362 + $0xc] sm:$0xf]
        %v492 = vld [vmem:[%s362 + $0x10] sm:$0xf]
        %v493 = vld [vmem:[%s362 + $0x14] sm:$0xf]
        %v494 = vld [vmem:[%s362 + $0x18] sm:$0xf]
        %v495 = vld [vmem:[%s362 + $0x1c] sm:$0xf]
        %v496 = vld [vmem:[%s362 + $0x20] sm:$0xf]
        %v497 = vld [vmem:[%s362 + $0x24] sm:$0xf]
        %v498 = vld [vmem:[%s362 + $0x28] sm:$0xf]
        %v499 = vld [vmem:[%s362 + $0x2c] sm:$0xf]
        %v500 = vld [vmem:[%s362 + $0x30] sm:$0xf]
        %v501 = vld [vmem:[%s362 + $0x34] sm:$0xf]
        %v502 = vld [vmem:[%s362 + $0x38] sm:$0xf]
        %v503 = vld [vmem:[%s362 + $0x3c] sm:$0xf]
        %v504 = vld [vmem:[%s415] sm:$0x1]
        %v506 = vlaneseq
        %v507 = vshrl.u32 %v506, 7
        %v508 = vsub.s32 0, %v507
        %v509 = vrot.slane %v504, %v508
        %v513 = vunpack.c.l.b16 %v486
        %v514 = vunpack.c.l.b16 %v487
        %v515 = vpack.c.b16 %v514, %v513
        %v533 = vunpack.c.l.b16 %v488
        %v534 = vunpack.c.l.b16 %v489
        %v535 = vunpack.c.l.b16 %v490
        %v536 = vunpack.c.l.b16 %v491
        %v537 = vunpack.c.l.b16 %v492
        %v538 = vunpack.c.l.b16 %v493
        %v539 = vunpack.c.l.b16 %v494
        %v540 = vunpack.c.l.b16 %v495
        %v541 = vunpack.c.l.b16 %v496
        %v542 = vunpack.c.l.b16 %v497
        %v543 = vunpack.c.l.b16 %v498
        %v544 = vunpack.c.l.b16 %v499
        %v545 = vunpack.c.l.b16 %v500
        %v546 = vunpack.c.l.b16 %v501
        %v547 = vunpack.c.l.b16 %v502
        %v548 = vunpack.c.l.b16 %v503
        %v549 = vpack.c.b16 %v534, %v533
        %v550 = vpack.c.b16 %v536, %v535
        %v551 = vpack.c.b16 %v538, %v537
        %v552 = vpack.c.b16 %v540, %v539
        %v553 = vpack.c.b16 %v542, %v541
        %v554 = vpack.c.b16 %v544, %v543
        %v555 = vpack.c.b16 %v546, %v545
        %v556 = vpack.c.b16 %v548, %v547
        %565 = vmatprep.subr.bf16.mxu0 0
        %566 = vmatpush1.bf16.msra.mxu0 %v549
        %567 = vmatprep.subr.bf16.mxu0 0
        %568 = vmatpush1.bf16.msra.mxu0 %v550
        %569 = vmatprep.subr.bf16.mxu0 0
        %570 = vmatpush1.bf16.msra.mxu0 %v551
        %571 = vmatprep.subr.bf16.mxu0 0
        %572 = vmatpush1.bf16.msra.mxu0 %v552
        %573 = vmatprep.subr.bf16.mxu0 0
        %574 = vmatpush1.bf16.msra.mxu0 %v553
        %575 = vmatprep.subr.bf16.mxu0 0
        %576 = vmatpush1.bf16.msra.mxu0 %v554
        %577 = vmatprep.subr.bf16.mxu0 0
        %578 = vmatpush1.bf16.msra.mxu0 %v555
        %579 = vmatprep.subr.bf16.mxu0 0
        %580 = vmatpush1.bf16.msra.mxu0 %v556
        %581 = vmatprep.subr.bf16.mxu0 0
        %582 = vmatpush1.bf16.msra.mxu0 0
        %583 = vmatprep.subr.bf16.mxu0 0
        %584 = vmatpush1.bf16.msra.mxu0 0
        %585 = vmatprep.subr.bf16.mxu0 0
        %586 = vmatpush1.bf16.msra.mxu0 0
        %587 = vmatprep.subr.bf16.mxu0 0
        %588 = vmatpush1.bf16.msra.mxu0 0
        %589 = vmatprep.subr.bf16.mxu0 0
        %590 = vmatpush1.bf16.msra.mxu0 0
        %591 = vmatprep.subr.bf16.mxu0 0
        %592 = vmatpush1.bf16.msra.mxu0 0
        %593 = vmatprep.subr.bf16.mxu0 0
        %594 = vmatpush1.bf16.msra.mxu0 0
        %595 = vmatprep.subr.bf16.mxu0 0
        %596 = vmatpush1.bf16.msra.mxu0 0
        %597 = vmatprep.mubr.bf16.mxu0 0
        %598 = vmatmul.mubr.bf16.gmra.mrb[0].mxu0 %v515
        %v599 = vpop.f32.mrb[0].mxu0
        %v600 = vadd.f32 %v509, %v599
        %v601 = vpop.f32.mrb[0].mxu0
        %v602 = vpop.f32.mrb[0].mxu0
        %v603 = vadd.f32 %v509, %v602
        %v604 = vpop.f32.mrb[0].mxu0
        %605 = vdwg.mxu0
        %v606 = vpack.c.bf16 %v603, %v600
        %v608 = vunpack.c.l.b16 %v606
        %v609 = vunpack.c.h.b16 %v606
        %v610 = vpack.c.b16 %v608, %v608
        %v611 = vpack.c.b16 %v609, %v609
        %614 = vst [vmem:[%s402] sm:$0xf] %v610
        %615 = vst [vmem:[%s402 + $0x4] sm:$0x1] %v611
        %s616 = sand.u32 %s179, 1
        %s617 = sand.u32 %s179, 1
        %s618 = smul.addr %s617, 8
        %s619 = scalar_lea.vmem [#allocation4], %s618
        // Predicated region
        $region86: #{vit_forward.13} parent=76 // pred_check
          %p620 = pneg %p189
        $region87: #{vit_forward.13} parent=76 // pred_check_branch
          %622 = sbr.rel (%p620) target = $region89
        $region88: #{vit_forward.13} parent=76 // pred_region
          %s623 = smul.u32 2, %s21
          %s624 = smul.addr %s623, 3
          %s625 = sadd.s32 %s22, %s624
          %s626 = smul.addr %s625, 4
          %s627 = scalar_lea.vmem %s5, %s626
          // Predicated region
          $region90: #{vit_forward.13} parent=88 // pred_check
            _
          $region91: #{vit_forward.13} parent=88 // pred_check_branch
            %629 = sbr.rel (0) target = $region93
          $region92: #{vit_forward.13} parent=88 // pred_region
            // Predicated region
            $region94: #{vit_forward.13} parent=92 // pred_check
              _
            $region95: #{vit_forward.13} parent=92 // pred_check_branch
              %631 = sbr.rel target = $region97
            $region96: #{vit_forward.13} parent=92 // pred_region
              // Predicated region
              $region109: #{vit_forward.13} parent=96 // pred_check
                _
              $region110: #{vit_forward.13} parent=96 // pred_check_branch
                %648 = sbr.rel (0) target = $region112
              $region111: #{vit_forward.13} parent=96 // pred_region
                loop: start=0, step=1, limit=1
                $region113: #{vit_forward.13} parent=111 // loop_pre_header
                  _
                $region114: #{vit_forward.13} parent=111 // loop_header
                  %s650 = sphi 0, %s654
                  %p651 = scmp.ge.s32.totalorder %s650, 1
                  %s655 = sphi %s619, %s619
                  %s656 = sphi %s627, %s627
                $region115: #{vit_forward.13} parent=111 // loop_header_branch
                  %653 = sbr.rel (%p651) target = $region119
                $region116: #{vit_forward.13} parent=111 // loop_body
                  _
                $region117: #{vit_forward.13} parent=111 // loop_footer
                  %s654 = sadd.s32 1, %s650
                $region118: #{vit_forward.13} parent=111 // loop_footer_branch
                  %649 = sbr.rel target = $region114
                $region119: #{vit_forward.13} parent=111 // loop_exit
                  _
                loop: start=0, step=1, limit=1
                $region120: #{vit_forward.13} parent=111 // loop_pre_header
                  _
                $region121: #{vit_forward.13} parent=111 // loop_header
                  %s659 = sphi 0, %s663
                  %p660 = scmp.ge.s32.totalorder %s659, 1
                  %s664 = sphi %s619, %s619
                  %s665 = sphi %s627, %s627
                $region122: #{vit_forward.13} parent=111 // loop_header_branch
                  %662 = sbr.rel (%p660) target = $region126
                $region123: #{vit_forward.13} parent=111 // loop_body
                  %v666 = vld [vmem:[%s664] sm:$0xf]
                  %667 = vst [vmem:[%s665] sm:$0xf] %v666
                  %v668 = vld [vmem:[%s664 + $0x4] sm:$0xf]
                  %669 = vst [vmem:[%s665 + $0xc] sm:$0xf] %v668
                $region124: #{vit_forward.13} parent=111 // loop_footer
                  %s663 = sadd.s32 1, %s659
                $region125: #{vit_forward.13} parent=111 // loop_footer_branch
                  %658 = sbr.rel target = $region121
                $region126: #{vit_forward.13} parent=111 // loop_exit
                  _
              $region112: #{vit_forward.13} parent=96 // pred_fallthru
                _
            $region97: #{vit_forward.13} parent=92 // pred_fallthru
              _
            // Predicated region
            $region98: #{vit_forward.13} parent=92 // pred_check
              _
            $region99: #{vit_forward.13} parent=92 // pred_check_branch
              %633 = sbr.rel (0) target = $region101
            $region100: #{vit_forward.13} parent=92 // pred_region
              loop: start=0, step=1, limit=1
              $region102: #{vit_forward.13} parent=100 // loop_pre_header
                _
              $region103: #{vit_forward.13} parent=100 // loop_header
                %s636 = sphi 0, %s640
                %p637 = scmp.ge.s32.totalorder %s636, 1
                %s641 = sphi %s619, %s619
                %s642 = sphi %s627, %s627
              $region104: #{vit_forward.13} parent=100 // loop_header_branch
                %639 = sbr.rel (%p637) target = $region108
              $region105: #{vit_forward.13} parent=100 // loop_body
                %v643 = vld [vmem:[%s641] sm:$0xf]
                %644 = vst [vmem:[%s642] sm:$0xf] %v643
                %v645 = vld [vmem:[%s641 + $0x4] sm:$0xf]
                %646 = vst [vmem:[%s642 + $0xc] sm:$0xf] %v645
              $region106: #{vit_forward.13} parent=100 // loop_footer
                %s640 = sadd.s32 1, %s636
              $region107: #{vit_forward.13} parent=100 // loop_footer_branch
                %635 = sbr.rel target = $region103
              $region108: #{vit_forward.13} parent=100 // loop_exit
                _
            $region101: #{vit_forward.13} parent=92 // pred_fallthru
              _
          $region93: #{vit_forward.13} parent=88 // pred_fallthru
            _
          %670 = vnop
        $region89: #{vit_forward.13} parent=76 // pred_fallthru
          _
      $region77: #{vit_forward.13} parent=5 // pred_fallthru
        _
      %p671 = scmp.le.s32.totalorder 2, %s11
      // Predicated region
      $region127: #{vit_forward.13} parent=5 // pred_check
        %p672 = pneg %p671
      $region128: #{vit_forward.13} parent=5 // pred_check_branch
        %674 = sbr.rel (%p672) target = $region130
      $region129: #{vit_forward.13} parent=5 // pred_region
        %s675 = ssub.s32 %s11, 2
        // Predicated region
        $region131: #{vit_forward.13} parent=129 // pred_check
          %p676 = pneg %p195
        $region132: #{vit_forward.13} parent=129 // pred_check_branch
          %678 = sbr.rel (%p676) target = $region134
        $region133: #{vit_forward.13} parent=129 // pred_region
          %s679 = sand.u32 %s180, 1
          %s680 = sand.u32 %s180, 1
          %s681 = smul.addr %s680, 8
          %s682 = scalar_lea.vmem [#allocation4], %s681
        $region134: #{vit_forward.13} parent=129 // pred_fallthru
          _
      $region130: #{vit_forward.13} parent=5 // pred_fallthru
        _
    $region6: #{vit_forward.13} parent=1 // loop_footer
      %s15 = sadd.s32 1, %s11
    $region7: #{vit_forward.13} parent=1 // loop_footer_branch
      %10 = sbr.rel target = $region3
    $region8: #{vit_forward.13} parent=1 // loop_exit
      _

// kernel: vit_forward.14
$region0: #{vit_forward.14}
  #allocation0 [shape = 'u32[]', space=smem, size = 0x4, offset = 0x4, fixed_abs, tag = 'smem constant byte address 0x4 - core index']
  #allocation1 [shape = 'u32[144,128]{1,0:T(1,128)}', space=vmem, size = 0x12000, scoped, tag = 'internal scratch']
  %s0 = inlined_call_operand.vmem [shape: bf16[2,5,384], index: 0, kind: input, shape index: {}]
  %s1 = inlined_call_operand.vmem [shape: bf16[2,5,128], index: 1, kind: output, shape index: {}]
  %s2 = sld [smem:[#allocation0]]
  $region37: #{vit_forward.14} parent=0
    _
  %s4 = ssub.s32 1, %s2
  %s5 = scalar_select 0, %s4, %s2
  loop: start=0, step=1, limit=4
  $region2: #{vit_forward.14} parent=0 // loop_pre_header
    _
  $region3: #{vit_forward.14} parent=0 // loop_header
    %s7 = sphi 0, %s11
    %p8 = scmp.ge.s32.totalorder %s7, 4
    %s17 = sphi 0, %s19
    %s20 = sphi 0, %s17
    %s21 = sphi 0, %s20
    %s37 = sphi 0, %s21
    %s43 = sphi 0, %s45
    %s46 = sphi 0, %s43
    %s47 = sphi 0, %s46
    %s63 = sphi 0, %s47
  $region4: #{vit_forward.14} parent=0 // loop_header_branch
    %10 = sbr.rel (%p8) target = $region8
  $region5: #{vit_forward.14} parent=0 // loop_body
    %s12 = ssub.s32 %s7, 1
    %s13 = ssub.s32 %s7, 2
    %s14 = sadd.s32 %s7, 1
    %s15 = ssub.s32 %s7, %s14
    %p16 = scmp.eq.s32.totalorder %s15, 0
    %s18 = sadd.s32 %s17, 1
    %s19 = scalar_select %p16, %s17, %s18
    %p22 = pneg %p16
    %p23 = scmp.eq.s32.totalorder %s7, 1
    %p24 = por %p22, %p23
    %p25 = scmp.ne.s32.totalorder %s17, %s20
    %p26 = scmp.eq.s32.totalorder %s7, 0
    %p27 = por %p25, %p26
    %p28 = scmp.ne.s32.totalorder %s17, %s20
    %p29 = scmp.eq.s32.totalorder %s12, 1
    %p30 = por %p28, %p29
    %p31 = scmp.ne.s32.totalorder %s20, %s21
    %p32 = scmp.eq.s32.totalorder %s12, 0
    %p33 = por %p31, %p32
    %p34 = scmp.ne.s32.totalorder %s20, %s21
    %p35 = scmp.eq.s32.totalorder %s13, 1
    %p36 = por %p34, %p35
    %p38 = scmp.ne.s32.totalorder %s21, %s37
    %p39 = scmp.eq.s32.totalorder %s13, 0
    %p40 = por %p38, %p39
    %s41 = ssub.s32 %s7, %s14
    %p42 = scmp.eq.s32.totalorder %s41, 0
    %s44 = sadd.s32 %s43, 1
    %s45 = scalar_select %p42, %s43, %s44
    %p48 = pneg %p42
    %p49 = scmp.eq.s32.totalorder %s7, 1
    %p50 = por %p48, %p49
    %p51 = scmp.ne.s32.totalorder %s43, %s46
    %p52 = scmp.eq.s32.totalorder %s7, 0
    %p53 = por %p51, %p52
    %p54 = scmp.ne.s32.totalorder %s43, %s46
    %p55 = scmp.eq.s32.totalorder %s12, 1
    %p56 = por %p54, %p55
    %p57 = scmp.ne.s32.totalorder %s46, %s47
    %p58 = scmp.eq.s32.totalorder %s12, 0
    %p59 = por %p57, %p58
    %p60 = scmp.ne.s32.totalorder %s46, %s47
    %p61 = scmp.eq.s32.totalorder %s13, 1
    %p62 = por %p60, %p61
    %p64 = scmp.ne.s32.totalorder %s47, %s63
    %p65 = scmp.eq.s32.totalorder %s13, 0
    %p66 = por %p64, %p65
    %p67 = scmp.le.s32.totalorder 1, %s7
    %p68 = scmp.lt.s32.totalorder %s7, 3
    %p69 = pnand %p67, %p68
    %p70 = pneg %p69
    // Predicated region
    $region9: #{vit_forward.14} parent=5 // pred_check
      _
    $region10: #{vit_forward.14} parent=5 // pred_check_branch
      %72 = sbr.rel (%p69) target = $region12
    $region11: #{vit_forward.14} parent=5 // pred_region
      %s73 = ssub.s32 %s7, 1
    $region12: #{vit_forward.14} parent=5 // pred_fallthru
      _
    %p74 = scmp.lt.s32.totalorder %s7, 2
    // Predicated region
    $region13: #{vit_forward.14} parent=5 // pred_check
      %p75 = pneg %p74
    $region14: #{vit_forward.14} parent=5 // pred_check_branch
      %77 = sbr.rel (%p75) target = $region16
    $region15: #{vit_forward.14} parent=5 // pred_region
      // Predicated region
      $region17: #{vit_forward.14} parent=15 // pred_check
        %p78 = pneg %p27
      $region18: #{vit_forward.14} parent=15 // pred_check_branch
        %80 = sbr.rel (%p78) target = $region20
      $region19: #{vit_forward.14} parent=15 // pred_region
        %p81 = scmp.lt.s32.totalorder %s7, 1
        %s82 = scalar_select %p81, %s7, 1
        %s83 = smul.addr %s82, 3
        %s84 = smul.addr %s83, 4
        %s85 = scalar_lea.vmem %s0, %s84
      $region20: #{vit_forward.14} parent=15 // pred_fallthru
        _
    $region16: #{vit_forward.14} parent=5 // pred_fallthru
      _
    %p86 = scmp.le.s32.totalorder 1, %s7
    %p87 = scmp.lt.s32.totalorder %s7, 3
    %p88 = pnand %p86, %p87
    %p89 = pneg %p88
    // Predicated region
    $region21: #{vit_forward.14} parent=5 // pred_check
      _
    $region22: #{vit_forward.14} parent=5 // pred_check_branch
      %91 = sbr.rel (%p88) target = $region24
    $region23: #{vit_forward.14} parent=5 // pred_region
      %s92 = ssub.s32 %s7, 1
      %p93 = scmp.lt.s32.totalorder %s12, 1
      %s94 = scalar_select %p93, %s12, 1
      %s95 = smul.addr %s94, 3
      %s96 = smul.addr %s95, 4
      %s97 = scalar_lea.vmem %s0, %s96
      %p98 = pneg %p33
      %p99 = pneg %p30
      %p100 = pneg %p59
      %p101 = pneg %p56
      %p102 = scmp.lt.s32.totalorder %s12, 1
      %s103 = scalar_select %p102, %s12, 1
      %s104 = smul.addr %s103, 4
      %s105 = scalar_lea.vmem %s1, %s104
      %p106 = scmp.lt.s32.totalorder %s12, 1
      %s107 = scalar_select %p106, %s12, 1
      %s108 = smul.addr %s107, 3
      %s109 = smul.addr %s108, 4
      %s110 = scalar_lea.vmem %s0, %s109
      %p111 = scmp.lt.s32.totalorder %s12, 1
      %s112 = scalar_select %p111, %s12, 1
      %s113 = smul.addr %s112, 4
      %s114 = scalar_lea.vmem %s1, %s113
      %v116 = vld [vmem:[%s110] sm:$0x77]
      %v117 = vld [vmem:[%s110 + $0x8] sm:$0x7]
      %v119 = vrot.slane %v116, 4
      %121 = vrot.lane.b32.xlu0 %v116, 96
      %v122 = vpop.permute.xlu0 %121
      %v123 = vrot.slane %v122, 4
      %125 = vrot.lane.b32.xlu0 %v116, 64
      %v126 = vpop.permute.xlu0 %125
      %v127 = vrot.slane %v126, 4
      %129 = vrot.lane.b32.xlu0 %v116, 32
      %v130 = vpop.permute.xlu0 %129
      %v131 = vrot.slane %v130, 4
      %137 = vrot.lane.b32.xlu0 %v117, 96
      %v138 = vpop.permute.xlu0 %137
      %139 = vrot.lane.b32.xlu0 %v117, 64
      %v140 = vpop.permute.xlu0 %139
      %141 = vrot.lane.b32.xlu0 %v117, 32
      %v142 = vpop.permute.xlu0 %141
      %v143 = vcombine.low %v116, %v119
      %v145 = vunpack.c.l.s4 1983009808
      %v146 = vunpack.c.0.s8 %v145
      %v147 = vlaneseq
      %v148 = vshrl.u32 %v147, 7
      %v149 = vsub.s32 %v146, %v148
      %v150 = vrot.slane %v143, %v149
      %v151 = vcombine.low %v126, %v127
      %v153 = vunpack.c.l.s4 1983009808
      %v154 = vunpack.c.0.s8 %v153
      %v155 = vlaneseq
      %v156 = vshrl.u32 %v155, 7
      %v157 = vsub.s32 %v154, %v156
      %v158 = vrot.slane %v151, %v157
      %v159 = vcombine.low %v150, %v158
      %v160 = vcombine.high %v150, %v158
      %v162 = vunpack.c.l.s4 1934713408
      %v163 = vunpack.c.0.s8 %v162
      %v164 = vlaneseq
      %v165 = vshrl.u32 %v164, 7
      %v166 = vsub.s32 %v163, %v165
      %v167 = vrot.slane %v159, %v166
      %v168 = vcombine.high %v167, 0
      %v170 = vunpack.c.l.s4 1934713408
      %v171 = vunpack.c.0.s8 %v170
      %v172 = vlaneseq
      %v173 = vshrl.u32 %v172, 7
      %v174 = vsub.s32 %v171, %v173
      %v175 = vrot.slane %v160, %v174
      %v176 = vcombine.low %v122, %v123
      %v178 = vunpack.c.l.s4 1983009808
      %v179 = vunpack.c.0.s8 %v178
      %v180 = vlaneseq
      %v181 = vshrl.u32 %v180, 7
      %v182 = vsub.s32 %v179, %v181
      %v183 = vrot.slane %v176, %v182
      %v184 = vcombine.low %v130, %v131
      %v186 = vunpack.c.l.s4 1983009808
      %v187 = vunpack.c.0.s8 %v186
      %v188 = vlaneseq
      %v189 = vshrl.u32 %v188, 7
      %v190 = vsub.s32 %v187, %v189
      %v191 = vrot.slane %v184, %v190
      %v192 = vcombine.low %v183, %v191
      %v193 = vcombine.high %v183, %v191
      %v195 = vunpack.c.l.s4 1934713408
      %v196 = vunpack.c.0.s8 %v195
      %v197 = vlaneseq
      %v198 = vshrl.u32 %v197, 7
      %v199 = vsub.s32 %v196, %v198
      %v200 = vrot.slane %v192, %v199
      %v201 = vcombine.high %v200, 0
      %v203 = vunpack.c.l.s4 1934713408
      %v204 = vunpack.c.0.s8 %v203
      %v205 = vlaneseq
      %v206 = vshrl.u32 %v205, 7
      %v207 = vsub.s32 %v204, %v206
      %v208 = vrot.slane %v193, %v207
      %v210 = vunpack.c.l.s4 1983009808
      %v211 = vunpack.c.0.s8 %v210
      %v212 = vlaneseq
      %v213 = vshrl.u32 %v212, 7
      %v214 = vsub.s32 %v211, %v213
      %v215 = vrot.slane %v117, %v214
      %v218 = vunpack.c.l.s4 1983009808
      %v219 = vunpack.c.0.s8 %v218
      %v220 = vlaneseq
      %v221 = vshrl.u32 %v220, 7
      %v222 = vsub.s32 %v219, %v221
      %v223 = vrot.slane %v140, %v222
      %v224 = vcombine.low %v215, %v223
      %v225 = vcombine.high %v215, %v223
      %v227 = vunpack.c.l.s4 1934713408
      %v228 = vunpack.c.0.s8 %v227
      %v229 = vlaneseq
      %v230 = vshrl.u32 %v229, 7
      %v231 = vsub.s32 %v228, %v230
      %v232 = vrot.slane %v224, %v231
      %v233 = vcombine.high %v232, 0
      %v235 = vunpack.c.l.s4 1934713408
      %v236 = vunpack.c.0.s8 %v235
      %v237 = vlaneseq
      %v238 = vshrl.u32 %v237, 7
      %v239 = vsub.s32 %v236, %v238
      %v240 = vrot.slane %v225, %v239
      %v243 = vunpack.c.l.s4 1983009808
      %v244 = vunpack.c.0.s8 %v243
      %v245 = vlaneseq
      %v246 = vshrl.u32 %v245, 7
      %v247 = vsub.s32 %v244, %v246
      %v248 = vrot.slane %v138, %v247
      %v251 = vunpack.c.l.s4 1983009808
      %v252 = vunpack.c.0.s8 %v251
      %v253 = vlaneseq
      %v254 = vshrl.u32 %v253, 7
      %v255 = vsub.s32 %v252, %v254
      %v256 = vrot.slane %v142, %v255
      %v257 = vcombine.low %v248, %v256
      %v258 = vcombine.high %v248, %v256
      %v260 = vunpack.c.l.s4 1934713408
      %v261 = vunpack.c.0.s8 %v260
      %v262 = vlaneseq
      %v263 = vshrl.u32 %v262, 7
      %v264 = vsub.s32 %v261, %v263
      %v265 = vrot.slane %v257, %v264
      %v266 = vcombine.high %v265, 0
      %v268 = vunpack.c.l.s4 1934713408
      %v269 = vunpack.c.0.s8 %v268
      %v270 = vlaneseq
      %v271 = vshrl.u32 %v270, 7
      %v272 = vsub.s32 %v269, %v271
      %v273 = vrot.slane %v258, %v272
      %v276 = vpack.i.b16 %v200, %v167
      %v278 = vshrl.u32 %v167, 16
      %v279 = vshrl.u32 %v200, 16
      %v280 = vpack.i.b16 %v279, %v278
      %v283 = vpack.i.b16 %v201, %v168
      %v284 = vshrl.u32 %v168, 16
      %v285 = vshrl.u32 %v201, 16
      %v286 = vpack.i.b16 %v285, %v284
      %v289 = vpack.i.b16 %v208, %v175
      %v293 = vpack.i.b16 %v265, %v232
      %v295 = vshrl.u32 %v232, 16
      %v296 = vshrl.u32 %v265, 16
      %v297 = vpack.i.b16 %v296, %v295
      %v300 = vpack.i.b16 %v266, %v233
      %v301 = vshrl.u32 %v233, 16
      %v302 = vshrl.u32 %v266, 16
      %v303 = vpack.i.b16 %v302, %v301
      %v306 = vpack.i.b16 %v273, %v240
      %v308 = vcombine.low %v276, %v289
      %v310 = vunpack.c.l.s4 1983009808
      %v311 = vunpack.c.0.s8 %v310
      %v312 = vlaneseq
      %v313 = vshrl.u32 %v312, 7
      %v314 = vsub.s32 %v311, %v313
      %v315 = vrot.slane %v308, %v314
      %v318 = vunpack.c.l.s4 1983009808
      %v319 = vunpack.c.0.s8 %v318
      %v320 = vlaneseq
      %v321 = vshrl.u32 %v320, 7
      %v322 = vsub.s32 %v319, %v321
      %v323 = vrot.slane %v283, %v322
      %v324 = vcombine.low %v315, %v323
      %v325 = vcombine.high %v315, %v323
      %v327 = vunpack.c.l.s4 1934713408
      %v328 = vunpack.c.0.s8 %v327
      %v329 = vlaneseq
      %v330 = vshrl.u32 %v329, 7
      %v331 = vsub.s32 %v328, %v330
      %v332 = vrot.slane %v324, %v331
      %v334 = vunpack.c.l.s4 1934713408
      %v335 = vunpack.c.0.s8 %v334
      %v336 = vlaneseq
      %v337 = vshrl.u32 %v336, 7
      %v338 = vsub.s32 %v335, %v337
      %v339 = vrot.slane %v325, %v338
      %v340 = vcombine.high %v332, 0
      %v341 = vcombine.high %v339, 0
      %v344 = vunpack.c.l.s4 1983009808
      %v345 = vunpack.c.0.s8 %v344
      %v346 = vlaneseq
      %v347 = vshrl.u32 %v346, 7
      %v348 = vsub.s32 %v345, %v347
      %v349 = vrot.slane %v280, %v348
      %v352 = vunpack.c.l.s4 1983009808
      %v353 = vunpack.c.0.s8 %v352
      %v354 = vlaneseq
      %v355 = vshrl.u32 %v354, 7
      %v356 = vsub.s32 %v353, %v355
      %v357 = vrot.slane %v286, %v356
      %v358 = vcombine.low %v349, %v357
      %v359 = vcombine.high %v349, %v357
      %v361 = vunpack.c.l.s4 1934713408
      %v362 = vunpack.c.0.s8 %v361
      %v363 = vlaneseq
      %v364 = vshrl.u32 %v363, 7
      %v365 = vsub.s32 %v362, %v364
      %v366 = vrot.slane %v358, %v365
      %v368 = vunpack.c.l.s4 1934713408
      %v369 = vunpack.c.0.s8 %v368
      %v370 = vlaneseq
      %v371 = vshrl.u32 %v370, 7
      %v372 = vsub.s32 %v369, %v371
      %v373 = vrot.slane %v359, %v372
      %v374 = vcombine.high %v366, 0
      %v375 = vcombine.high %v373, 0
      %v376 = vcombine.low %v293, %v306
      %v378 = vunpack.c.l.s4 1983009808
      %v379 = vunpack.c.0.s8 %v378
      %v380 = vlaneseq
      %v381 = vshrl.u32 %v380, 7
      %v382 = vsub.s32 %v379, %v381
      %v383 = vrot.slane %v376, %v382
      %v385 = vcombine.low %v383, %v300
      %v387 = vunpack.c.l.s4 1934713408
      %v388 = vunpack.c.0.s8 %v387
      %v389 = vlaneseq
      %v390 = vshrl.u32 %v389, 7
      %v391 = vsub.s32 %v388, %v390
      %v392 = vrot.slane %v385, %v391
      %v393 = vcombine.high %v392, 0
      %v396 = vcombine.low %v297, %v303
      %v398 = vunpack.c.l.s4 1934713408
      %v399 = vunpack.c.0.s8 %v398
      %v400 = vlaneseq
      %v401 = vshrl.u32 %v400, 7
      %v402 = vsub.s32 %v399, %v401
      %v403 = vrot.slane %v396, %v402
      %v404 = vcombine.high %v403, 0
      %v407 = vpack.i.b16 %v366, %v332
      %v408 = vshrl.u32 %v332, 16
      %v409 = vshrl.u32 %v366, 16
      %v410 = vpack.i.b16 %v409, %v408
      %v413 = vpack.i.b16 %v374, %v340
      %v414 = vshrl.u32 %v340, 16
      %v415 = vshrl.u32 %v374, 16
      %v416 = vpack.i.b16 %v415, %v414
      %v419 = vpack.i.b16 %v373, %v339
      %v420 = vshrl.u32 %v339, 16
      %v421 = vshrl.u32 %v373, 16
      %v422 = vpack.i.b16 %v421, %v420
      %v425 = vpack.i.b16 %v375, %v341
      %v426 = vshrl.u32 %v341, 16
      %v427 = vshrl.u32 %v375, 16
      %v428 = vpack.i.b16 %v427, %v426
      %v431 = vpack.i.b16 %v403, %v392
      %v432 = vshrl.u32 %v392, 16
      %v433 = vshrl.u32 %v403, 16
      %v434 = vpack.i.b16 %v433, %v432
      %v437 = vpack.i.b16 %v404, %v393
      %v438 = vshrl.u32 %v393, 16
      %v439 = vshrl.u32 %v404, 16
      %v440 = vpack.i.b16 %v439, %v438
      %vm441 = vcmask 261120
      %v443 = vsel %vm441, %v407, 0
      %v446 = vsel %vm441, %v419, 0
      %448 = vmatprep.subr.bf16.mxu0 0
      %449 = vmatpush1.bf16.xpose.msra.mxu0 %v446
      %450 = vmatprep.subr.bf16.mxu0 0
      %451 = vmatpush1.bf16.xpose.msra.mxu0 0
      %452 = vmatprep.subr.bf16.mxu0 0
      %453 = vmatpush1.bf16.xpose.msra.mxu0 0
      %454 = vmatprep.subr.bf16.mxu0 0
      %455 = vmatpush1.bf16.xpose.msra.mxu0 0
      %456 = vmatprep.subr.bf16.mxu0 0
      %457 = vmatpush1.bf16.xpose.msra.mxu0 0
      %458 = vmatprep.subr.bf16.mxu0 0
      %459 = vmatpush1.bf16.xpose.msra.mxu0 0
      %460 = vmatprep.subr.bf16.mxu0 0
      %461 = vmatpush1.bf16.xpose.msra.mxu0 0
      %462 = vmatprep.subr.bf16.mxu0 0
      %463 = vmatpush1.bf16.xpose.msra.mxu0 0
      %464 = vmatprep.subr.bf16.mxu0 0
      %465 = vmatpush1.bf16.xpose.msra.mxu0 0
      %466 = vmatprep.subr.bf16.mxu0 0
      %467 = vmatpush1.bf16.xpose.msra.mxu0 0
      %468 = vmatprep.subr.bf16.mxu0 0
      %469 = vmatpush1.bf16.xpose.msra.mxu0 0
      %470 = vmatprep.subr.bf16.mxu0 0
      %471 = vmatpush1.bf16.xpose.msra.mxu0 0
      %472 = vmatprep.subr.bf16.mxu0 0
      %473 = vmatpush1.bf16.xpose.msra.mxu0 0
      %474 = vmatprep.subr.bf16.mxu0 0
      %475 = vmatpush1.bf16.xpose.msra.mxu0 0
      %476 = vmatprep.subr.bf16.mxu0 0
      %477 = vmatpush1.bf16.xpose.msra.mxu0 0
      %478 = vmatprep.subr.bf16.mxu0 0
      %479 = vmatpush1.bf16.xpose.msra.mxu0 0
      %480 = vmatprep.mubr.bf16.mxu0 0
      %481 = vmatmul.mubr.bf16.gmra.mrb[0].mxu0 %v443
      %v482 = vpop.f32.mrb[0].mxu0
      %v483 = vadd.f32 0.0, %v482
      %v484 = vpop.f32.mrb[0].mxu0
      %v485 = vpop.f32.mrb[0].mxu0
      %v486 = vpop.f32.mrb[0].mxu0
      %487 = vdwg.mxu0
      %v489 = vsel %vm441, %v410, 0
      %v492 = vsel %vm441, %v422, 0
      %494 = vmatprep.subr.bf16.mxu0 0
      %495 = vmatpush1.bf16.xpose.msra.mxu0 %v492
      %496 = vmatprep.subr.bf16.mxu0 0
      %497 = vmatpush1.bf16.xpose.msra.mxu0 0
      %498 = vmatprep.subr.bf16.mxu0 0
      %499 = vmatpush1.bf16.xpose.msra.mxu0 0
      %500 = vmatprep.subr.bf16.mxu0 0
      %501 = vmatpush1.bf16.xpose.msra.mxu0 0
      %502 = vmatprep.subr.bf16.mxu0 0
      %503 = vmatpush1.bf16.xpose.msra.mxu0 0
      %504 = vmatprep.subr.bf16.mxu0 0
      %505 = vmatpush1.bf16.xpose.msra.mxu0 0
      %506 = vmatprep.subr.bf16.mxu0 0
      %507 = vmatpush1.bf16.xpose.msra.mxu0 0
      %508 = vmatprep.subr.bf16.mxu0 0
      %509 = vmatpush1.bf16.xpose.msra.mxu0 0
      %510 = vmatprep.subr.bf16.mxu0 0
      %511 = vmatpush1.bf16.xpose.msra.mxu0 0
      %512 = vmatprep.subr.bf16.mxu0 0
      %513 = vmatpush1.bf16.xpose.msra.mxu0 0
      %514 = vmatprep.subr.bf16.mxu0 0
      %515 = vmatpush1.bf16.xpose.msra.mxu0 0
      %516 = vmatprep.subr.bf16.mxu0 0
      %517 = vmatpush1.bf16.xpose.msra.mxu0 0
      %518 = vmatprep.subr.bf16.mxu0 0
      %519 = vmatpush1.bf16.xpose.msra.mxu0 0
      %520 = vmatprep.subr.bf16.mxu0 0
      %521 = vmatpush1.bf16.xpose.msra.mxu0 0
      %522 = vmatprep.subr.bf16.mxu0 0
      %523 = vmatpush1.bf16.xpose.msra.mxu0 0
      %524 = vmatprep.subr.bf16.mxu0 0
      %525 = vmatpush1.bf16.xpose.msra.mxu0 0
      %526 = vmatprep.mubr.bf16.mxu0 0
      %527 = vmatmul.mubr.bf16.gmra.mrb[0].mxu0 %v489
      %v528 = vpop.f32.mrb[0].mxu0
      %v529 = vadd.f32 0.0, %v528
      %v530 = vpop.f32.mrb[0].mxu0
      %v531 = vpop.f32.mrb[0].mxu0
      %v532 = vpop.f32.mrb[0].mxu0
      %533 = vdwg.mxu0
      %v535 = vsel %vm441, %v413, 0
      %v538 = vsel %vm441, %v425, 0
      %540 = vmatprep.subr.bf16.mxu0 0
      %541 = vmatpush1.bf16.xpose.msra.mxu0 %v538
      %542 = vmatprep.subr.bf16.mxu0 0
      %543 = vmatpush1.bf16.xpose.msra.mxu0 0
      %544 = vmatprep.subr.bf16.mxu0 0
      %545 = vmatpush1.bf16.xpose.msra.mxu0 0
      %546 = vmatprep.subr.bf16.mxu0 0
      %547 = vmatpush1.bf16.xpose.msra.mxu0 0
      %548 = vmatprep.subr.bf16.mxu0 0
      %549 = vmatpush1.bf16.xpose.msra.mxu0 0
      %550 = vmatprep.subr.bf16.mxu0 0
      %551 = vmatpush1.bf16.xpose.msra.mxu0 0
      %552 = vmatprep.subr.bf16.mxu0 0
      %553 = vmatpush1.bf16.xpose.msra.mxu0 0
      %554 = vmatprep.subr.bf16.mxu0 0
      %555 = vmatpush1.bf16.xpose.msra.mxu0 0
      %556 = vmatprep.subr.bf16.mxu0 0
      %557 = vmatpush1.bf16.xpose.msra.mxu0 0
      %558 = vmatprep.subr.bf16.mxu0 0
      %559 = vmatpush1.bf16.xpose.msra.mxu0 0
      %560 = vmatprep.subr.bf16.mxu0 0
      %561 = vmatpush1.bf16.xpose.msra.mxu0 0
      %562 = vmatprep.subr.bf16.mxu0 0
      %563 = vmatpush1.bf16.xpose.msra.mxu0 0
      %564 = vmatprep.subr.bf16.mxu0 0
      %565 = vmatpush1.bf16.xpose.msra.mxu0 0
      %566 = vmatprep.subr.bf16.mxu0 0
      %567 = vmatpush1.bf16.xpose.msra.mxu0 0
      %568 = vmatprep.subr.bf16.mxu0 0
      %569 = vmatpush1.bf16.xpose.msra.mxu0 0
      %570 = vmatprep.subr.bf16.mxu0 0
      %571 = vmatpush1.bf16.xpose.msra.mxu0 0
      %572 = vmatprep.mubr.bf16.mxu0 0
      %573 = vmatmul.mubr.bf16.gmra.mrb[0].mxu0 %v535
      %v574 = vpop.f32.mrb[0].mxu0
      %v575 = vadd.f32 0.0, %v574
      %v576 = vpop.f32.mrb[0].mxu0
      %v577 = vpop.f32.mrb[0].mxu0
      %v578 = vpop.f32.mrb[0].mxu0
      %579 = vdwg.mxu0
      %v581 = vsel %vm441, %v416, 0
      %v584 = vsel %vm441, %v428, 0
      %586 = vmatprep.subr.bf16.mxu0 0
      %587 = vmatpush1.bf16.xpose.msra.mxu0 %v584
      %588 = vmatprep.subr.bf16.mxu0 0
      %589 = vmatpush1.bf16.xpose.msra.mxu0 0
      %590 = vmatprep.subr.bf16.mxu0 0
      %591 = vmatpush1.bf16.xpose.msra.mxu0 0
      %592 = vmatprep.subr.bf16.mxu0 0
      %593 = vmatpush1.bf16.xpose.msra.mxu0 0
      %594 = vmatprep.subr.bf16.mxu0 0
      %595 = vmatpush1.bf16.xpose.msra.mxu0 0
      %596 = vmatprep.subr.bf16.mxu0 0
      %597 = vmatpush1.bf16.xpose.msra.mxu0 0
      %598 = vmatprep.subr.bf16.mxu0 0
      %599 = vmatpush1.bf16.xpose.msra.mxu0 0
      %600 = vmatprep.subr.bf16.mxu0 0
      %601 = vmatpush1.bf16.xpose.msra.mxu0 0
      %602 = vmatprep.subr.bf16.mxu0 0
      %603 = vmatpush1.bf16.xpose.msra.mxu0 0
      %604 = vmatprep.subr.bf16.mxu0 0
      %605 = vmatpush1.bf16.xpose.msra.mxu0 0
      %606 = vmatprep.subr.bf16.mxu0 0
      %607 = vmatpush1.bf16.xpose.msra.mxu0 0
      %608 = vmatprep.subr.bf16.mxu0 0
      %609 = vmatpush1.bf16.xpose.msra.mxu0 0
      %610 = vmatprep.subr.bf16.mxu0 0
      %611 = vmatpush1.bf16.xpose.msra.mxu0 0
      %612 = vmatprep.subr.bf16.mxu0 0
      %613 = vmatpush1.bf16.xpose.msra.mxu0 0
      %614 = vmatprep.subr.bf16.mxu0 0
      %615 = vmatpush1.bf16.xpose.msra.mxu0 0
      %616 = vmatprep.subr.bf16.mxu0 0
      %617 = vmatpush1.bf16.xpose.msra.mxu0 0
      %618 = vmatprep.mubr.bf16.mxu0 0
      %619 = vmatmul.mubr.bf16.gmra.mrb[0].mxu0 %v581
      %v620 = vpop.f32.mrb[0].mxu0
      %v621 = vadd.f32 0.0, %v620
      %v622 = vpop.f32.mrb[0].mxu0
      %v623 = vpop.f32.mrb[0].mxu0
      %v624 = vpop.f32.mrb[0].mxu0
      %625 = vdwg.mxu0
      %v626 = vmul.f32 %v483, 0.17677669
      %v627 = vmul.f32 %v529, 0.17677669
      %v628 = vmul.f32 %v575, 0.17677669
      %v629 = vmul.f32 %v621, 0.17677669
      %vm630 = vcmask 36864
      %v631 = vsel %vm630, %v626, -inf
      %632 = vmax.xlane.f32.xlu0 %v631
      %v633 = vpop.xlane.xlu0 %632
      %v634 = vsel %vm630, %v627, -inf
      %635 = vmax.xlane.f32.xlu0 %v634
      %v636 = vpop.xlane.xlu0 %635
      %v637 = vsel %vm630, %v628, -inf
      %638 = vmax.xlane.f32.xlu0 %v637
      %v639 = vpop.xlane.xlu0 %638
      %v640 = vsel %vm630, %v629, -inf
      %641 = vmax.xlane.f32.xlu0 %v640
      %v642 = vpop.xlane.xlu0 %641
      %v643 = vsub.f32 %v626, %v633
      %v644 = vsub.f32 %v627, %v636
      %v645 = vsub.f32 %v628, %v639
      %v646 = vsub.f32 %v629, %v642
      %v647 = vmul.f32 %v643, 1.442695
      %v648 = vpow.pop %v647
      %v649 = vmul.f32 %v644, 1.442695
      %v650 = vpow.pop %v649
      %v651 = vmul.f32 %v645, 1.442695
      %v652 = vpow.pop %v651
      %v653 = vmul.f32 %v646, 1.442695
      %v654 = vpow.pop %v653
      %v655 = vsel %vm630, %v648, 0.0
      %656 = vadd.xlane.f32.xlu0 %v655
      %v657 = vpop.xlane.xlu0 %656
      %v658 = vsel %vm630, %v650, 0.0
      %659 = vadd.xlane.f32.xlu0 %v658
      %v660 = vpop.xlane.xlu0 %659
      %v661 = vsel %vm630, %v652, 0.0
      %662 = vadd.xlane.f32.xlu0 %v661
      %v663 = vpop.xlane.xlu0 %662
      %v664 = vsel %vm630, %v654, 0.0
      %665 = vadd.xlane.f32.xlu0 %v664
      %v666 = vpop.xlane.xlu0 %665
      %v667 = vpack.c.bf16 %v648, %v648
      %v668 = vpack.c.bf16 %v650, %v650
      %v669 = vpack.c.bf16 %v652, %v652
      %v670 = vpack.c.bf16 %v654, %v654
      %vm671 = vcmask 39936
      %v673 = vsel %vm671, %v667, 0
      %vm675 = vcmask 1041408
      %vm676 = vcmask 1042432
      %v677 = vsel %vm675, 4294967295, 65535
      %v678 = vsel %vm676, %v677, 0
      %v680 = vand.u32 %v431, %v678
      %682 = vmatprep.subr.bf16.mxu0 0
      %683 = vmatpush1.bf16.msra.mxu0 %v680
      %684 = vmatprep.subr.bf16.mxu0 0
      %685 = vmatpush1.bf16.msra.mxu0 0
      %686 = vmatprep.subr.bf16.mxu0 0
      %687 = vmatpush1.bf16.msra.mxu0 0
      %688 = vmatprep.subr.bf16.mxu0 0
      %689 = vmatpush1.bf16.msra.mxu0 0
      %690 = vmatprep.subr.bf16.mxu0 0
      %691 = vmatpush1.bf16.msra.mxu0 0
      %692 = vmatprep.subr.bf16.mxu0 0
      %693 = vmatpush1.bf16.msra.mxu0 0
      %694 = vmatprep.subr.bf16.mxu0 0
      %695 = vmatpush1.bf16.msra.mxu0 0
      %696 = vmatprep.subr.bf16.mxu0 0
      %697 = vmatpush1.bf16.msra.mxu0 0
      %698 = vmatprep.subr.bf16.mxu0 0
      %699 = vmatpush1.bf16.msra.mxu0 0
      %700 = vmatprep.subr.bf16.mxu0 0
      %701 = vmatpush1.bf16.msra.mxu0 0
      %702 = vmatprep.subr.bf16.mxu0 0
      %703 = vmatpush1.bf16.msra.mxu0 0
      %704 = vmatprep.subr.bf16.mxu0 0
      %705 = vmatpush1.bf16.msra.mxu0 0
      %706 = vmatprep.subr.bf16.mxu0 0
      %707 = vmatpush1.bf16.msra.mxu0 0
      %708 = vmatprep.subr.bf16.mxu0 0
      %709 = vmatpush1.bf16.msra.mxu0 0
      %710 = vmatprep.subr.bf16.mxu0 0
      %711 = vmatpush1.bf16.msra.mxu0 0
      %712 = vmatprep.subr.bf16.mxu0 0
      %713 = vmatpush1.bf16.msra.mxu0 0
      %714 = vmatprep.mubr.bf16.mxu0 0
      %715 = vmatmul.mubr.bf16.gmra.mrb[0].mxu0 %v673
      %v716 = vpop.f32.mrb[0].mxu0
      %v717 = vadd.f32 0.0, %v716
      %v718 = vpop.f32.mrb[0].mxu0
      %v719 = vpop.f32.mrb[0].mxu0
      %v720 = vpop.f32.mrb[0].mxu0
      %721 = vdwg.mxu0
      %v723 = vsel %vm671, %v668, 0
      %v726 = vand.u32 %v434, %v678
      %728 = vmatprep.subr.bf16.mxu0 0
      %729 = vmatpush1.bf16.msra.mxu0 %v726
      %730 = vmatprep.subr.bf16.mxu0 0
      %731 = vmatpush1.bf16.msra.mxu0 0
      %732 = vmatprep.subr.bf16.mxu0 0
      %733 = vmatpush1.bf16.msra.mxu0 0
      %734 = vmatprep.subr.bf16.mxu0 0
      %735 = vmatpush1.bf16.msra.mxu0 0
      %736 = vmatprep.subr.bf16.mxu0 0
      %737 = vmatpush1.bf16.msra.mxu0 0
      %738 = vmatprep.subr.bf16.mxu0 0
      %739 = vmatpush1.bf16.msra.mxu0 0
      %740 = vmatprep.subr.bf16.mxu0 0
      %741 = vmatpush1.bf16.msra.mxu0 0
      %742 = vmatprep.subr.bf16.mxu0 0
      %743 = vmatpush1.bf16.msra.mxu0 0
      %744 = vmatprep.subr.bf16.mxu0 0
      %745 = vmatpush1.bf16.msra.mxu0 0
      %746 = vmatprep.subr.bf16.mxu0 0
      %747 = vmatpush1.bf16.msra.mxu0 0
      %748 = vmatprep.subr.bf16.mxu0 0
      %749 = vmatpush1.bf16.msra.mxu0 0
      %750 = vmatprep.subr.bf16.mxu0 0
      %751 = vmatpush1.bf16.msra.mxu0 0
      %752 = vmatprep.subr.bf16.mxu0 0
      %753 = vmatpush1.bf16.msra.mxu0 0
      %754 = vmatprep.subr.bf16.mxu0 0
      %755 = vmatpush1.bf16.msra.mxu0 0
      %756 = vmatprep.subr.bf16.mxu0 0
      %757 = vmatpush1.bf16.msra.mxu0 0
      %758 = vmatprep.subr.bf16.mxu0 0
      %759 = vmatpush1.bf16.msra.mxu0 0
      %760 = vmatprep.mubr.bf16.mxu0 0
      %761 = vmatmul.mubr.bf16.gmra.mrb[0].mxu0 %v723
      %v762 = vpop.f32.mrb[0].mxu0
      %v763 = vadd.f32 0.0, %v762
      %v764 = vpop.f32.mrb[0].mxu0
      %v765 = vpop.f32.mrb[0].mxu0
      %v766 = vpop.f32.mrb[0].mxu0
      %767 = vdwg.mxu0
      %v769 = vsel %vm671, %v669, 0
      %v772 = vand.u32 %v437, %v678
      %774 = vmatprep.subr.bf16.mxu0 0
      %775 = vmatpush1.bf16.msra.mxu0 %v772
      %776 = vmatprep.subr.bf16.mxu0 0
      %777 = vmatpush1.bf16.msra.mxu0 0
      %778 = vmatprep.subr.bf16.mxu0 0
      %779 = vmatpush1.bf16.msra.mxu0 0
      %780 = vmatprep.subr.bf16.mxu0 0
      %781 = vmatpush1.bf16.msra.mxu0 0
      %782 = vmatprep.subr.bf16.mxu0 0
      %783 = vmatpush1.bf16.msra.mxu0 0
      %784 = vmatprep.subr.bf16.mxu0 0
      %785 = vmatpush1.bf16.msra.mxu0 0
      %786 = vmatprep.subr.bf16.mxu0 0
      %787 = vmatpush1.bf16.msra.mxu0 0
      %788 = vmatprep.subr.bf16.mxu0 0
      %789 = vmatpush1.bf16.msra.mxu0 0
      %790 = vmatprep.subr.bf16.mxu0 0
      %791 = vmatpush1.bf16.msra.mxu0 0
      %792 = vmatprep.subr.bf16.mxu0 0
      %793 = vmatpush1.bf16.msra.mxu0 0
      %794 = vmatprep.subr.bf16.mxu0 0
      %795 = vmatpush1.bf16.msra.mxu0 0
      %796 = vmatprep.subr.bf16.mxu0 0
      %797 = vmatpush1.bf16.msra.mxu0 0
      %798 = vmatprep.subr.bf16.mxu0 0
      %799 = vmatpush1.bf16.msra.mxu0 0
      %800 = vmatprep.subr.bf16.mxu0 0
      %801 = vmatpush1.bf16.msra.mxu0 0
      %802 = vmatprep.subr.bf16.mxu0 0
      %803 = vmatpush1.bf16.msra.mxu0 0
      %804 = vmatprep.subr.bf16.mxu0 0
      %805 = vmatpush1.bf16.msra.mxu0 0
      %806 = vmatprep.mubr.bf16.mxu0 0
      %807 = vmatmul.mubr.bf16.gmra.mrb[0].mxu0 %v769
      %v808 = vpop.f32.mrb[0].mxu0
      %v809 = vadd.f32 0.0, %v808
      %v810 = vpop.f32.mrb[0].mxu0
      %v811 = vpop.f32.mrb[0].mxu0
      %v812 = vpop.f32.mrb[0].mxu0
      %813 = vdwg.mxu0
      %v815 = vsel %vm671, %v670, 0
      %v818 = vand.u32 %v440, %v678
      %820 = vmatprep.subr.bf16.mxu0 0
      %821 = vmatpush1.bf16.msra.mxu0 %v818
      %822 = vmatprep.subr.bf16.mxu0 0
      %823 = vmatpush1.bf16.msra.mxu0 0
      %824 = vmatprep.subr.bf16.mxu0 0
      %825 = vmatpush1.bf16.msra.mxu0 0
      %826 = vmatprep.subr.bf16.mxu0 0
      %827 = vmatpush1.bf16.msra.mxu0 0
      %828 = vmatprep.subr.bf16.mxu0 0
      %829 = vmatpush1.bf16.msra.mxu0 0
      %830 = vmatprep.subr.bf16.mxu0 0
      %831 = vmatpush1.bf16.msra.mxu0 0
      %832 = vmatprep.subr.bf16.mxu0 0
      %833 = vmatpush1.bf16.msra.mxu0 0
      %834 = vmatprep.subr.bf16.mxu0 0
      %835 = vmatpush1.bf16.msra.mxu0 0
      %836 = vmatprep.subr.bf16.mxu0 0
      %837 = vmatpush1.bf16.msra.mxu0 0
      %838 = vmatprep.subr.bf16.mxu0 0
      %839 = vmatpush1.bf16.msra.mxu0 0
      %840 = vmatprep.subr.bf16.mxu0 0
      %841 = vmatpush1.bf16.msra.mxu0 0
      %842 = vmatprep.subr.bf16.mxu0 0
      %843 = vmatpush1.bf16.msra.mxu0 0
      %844 = vmatprep.subr.bf16.mxu0 0
      %845 = vmatpush1.bf16.msra.mxu0 0
      %846 = vmatprep.subr.bf16.mxu0 0
      %847 = vmatpush1.bf16.msra.mxu0 0
      %848 = vmatprep.subr.bf16.mxu0 0
      %849 = vmatpush1.bf16.msra.mxu0 0
      %850 = vmatprep.subr.bf16.mxu0 0
      %851 = vmatpush1.bf16.msra.mxu0 0
      %852 = vmatprep.mubr.bf16.mxu0 0
      %853 = vmatmul.mubr.bf16.gmra.mrb[0].mxu0 %v815
      %v854 = vpop.f32.mrb[0].mxu0
      %v855 = vadd.f32 0.0, %v854
      %v856 = vpop.f32.mrb[0].mxu0
      %v857 = vpop.f32.mrb[0].mxu0
      %v858 = vpop.f32.mrb[0].mxu0
      %859 = vdwg.mxu0
      %v860 = vrcp.pop %v657
      %v861 = vrcp.pop %v660
      %v862 = vrcp.pop %v663
      %v863 = vrcp.pop %v666
      %v864 = vmul.f32 %v717, %v860
      %v865 = vmul.f32 %v763, %v861
      %v866 = vmul.f32 %v809, %v862
      %v867 = vmul.f32 %v855, %v863
      %v868 = vcombine.low %v864, %v866
      %v869 = vcombine.high %v864, %v866
      %v871 = vunpack.c.l.s4 1983009808
      %v872 = vunpack.c.0.s8 %v871
      %v873 = vlaneseq
      %v874 = vshrl.u32 %v873, 7
      %v875 = vsub.s32 %v872, %v874
      %v876 = vrot.slane %v868, %v875
      %v878 = vunpack.c.l.s4 1983009808
      %v879 = vunpack.c.0.s8 %v878
      %v880 = vlaneseq
      %v881 = vshrl.u32 %v880, 7
      %v882 = vsub.s32 %v879, %v881
      %v883 = vrot.slane %v869, %v882
      %v884 = vcombine.low %v865, %v867
      %v885 = vcombine.high %v865, %v867
      %v887 = vunpack.c.l.s4 1983009808
      %v888 = vunpack.c.0.s8 %v887
      %v889 = vlaneseq
      %v890 = vshrl.u32 %v889, 7
      %v891 = vsub.s32 %v888, %v890
      %v892 = vrot.slane %v884, %v891
      %v894 = vunpack.c.l.s4 1983009808
      %v895 = vunpack.c.0.s8 %v894
      %v896 = vlaneseq
      %v897 = vshrl.u32 %v896, 7
      %v898 = vsub.s32 %v895, %v897
      %v899 = vrot.slane %v885, %v898
      %v900 = vcombine.low %v876, %v892
      %v901 = vcombine.high %v876, %v892
      %v903 = vunpack.c.l.s4 1934713408
      %v904 = vunpack.c.0.s8 %v903
      %v905 = vlaneseq
      %v906 = vshrl.u32 %v905, 7
      %v907 = vsub.s32 %v904, %v906
      %v908 = vrot.slane %v900, %v907
      %v910 = vunpack.c.l.s4 1934713408
      %v911 = vunpack.c.0.s8 %v910
      %v912 = vlaneseq
      %v913 = vshrl.u32 %v912, 7
      %v914 = vsub.s32 %v911, %v913
      %v915 = vrot.slane %v901, %v914
      %v916 = vcombine.low %v883, %v899
      %v917 = vcombine.high %v908, 0.0
      %v918 = vcombine.high %v915, 0.0
      %v919 = vcombine.low %v908, %v915
      %v921 = vunpack.c.l.s4 1983009808
      %v922 = vunpack.c.0.s8 %v921
      %v923 = vlaneseq
      %v924 = vshrl.u32 %v923, 7
      %v925 = vsub.s32 %v922, %v924
      %v926 = vrot.slane %v919, %v925
      %v927 = vcombine.low %v917, %v918
      %v929 = vunpack.c.l.s4 1983009808
      %v930 = vunpack.c.0.s8 %v929
      %v931 = vlaneseq
      %v932 = vshrl.u32 %v931, 7
      %v933 = vsub.s32 %v930, %v932
      %v934 = vrot.slane %v927, %v933
      %v936 = vunpack.c.l.s4 1934713408
      %v937 = vunpack.c.0.s8 %v936
      %v938 = vlaneseq
      %v939 = vshrl.u32 %v938, 7
      %v940 = vsub.s32 %v937, %v939
      %v941 = vrot.slane %v916, %v940
      %v943 = vunpack.c.l.s4 1983009808
      %v944 = vunpack.c.0.s8 %v943
      %v945 = vlaneseq
      %v946 = vshrl.u32 %v945, 7
      %v947 = vsub.s32 %v944, %v946
      %v948 = vrot.slane %v941, %v947
      %v949 = vcombine.low %v926, %v934
      %v950 = vcombine.high %v926, %v934
      %v952 = vunpack.c.l.s4 1934713408
      %v953 = vunpack.c.0.s8 %v952
      %v954 = vlaneseq
      %v955 = vshrl.u32 %v954, 7
      %v956 = vsub.s32 %v953, %v955
      %v957 = vrot.slane %v949, %v956
      %v959 = vunpack.c.l.s4 1934713408
      %v960 = vunpack.c.0.s8 %v959
      %v961 = vlaneseq
      %v962 = vshrl.u32 %v961, 7
      %v963 = vsub.s32 %v960, %v962
      %v964 = vrot.slane %v950, %v963
      %v965 = vcombine.high %v948, 0.0
      %v967 = vunpack.c.l.s4 1934713408
      %v968 = vunpack.c.0.s8 %v967
      %v969 = vlaneseq
      %v970 = vshrl.u32 %v969, 7
      %v971 = vsub.s32 %v968, %v970
      %v972 = vrot.slane %v948, %v971
      %v974 = vunpack.c.l.s4 1934713408
      %v975 = vunpack.c.0.s8 %v974
      %v976 = vlaneseq
      %v977 = vshrl.u32 %v976, 7
      %v978 = vsub.s32 %v975, %v977
      %v979 = vrot.slane %v965, %v978
      %v980 = vcombine.low %v957, %v972
      %v981 = vcombine.high %v957, %v972
      %v982 = vcombine.low %v964, %v979
      %v983 = vcombine.high %v964, %v979
      %985 = vrot.lane.b32.xlu0 %v981, 32
      %v986 = vpop.permute.xlu0 %985
      %989 = vrot.lane.b32.xlu0 %v982, 64
      %v990 = vpop.permute.xlu0 %989
      %993 = vrot.lane.b32.xlu0 %v983, 96
      %v994 = vpop.permute.xlu0 %993
      %v996 = vsel %vm441, %v980, %v986
      %vm997 = vcmask 523264
      %v998 = vsel %vm997, %v996, %v990
      %vm999 = vcmask 785408
      %v1000 = vsel %vm999, %v998, %v994
      %v1001 = vpack.c.bf16 %v1000, %v1000
      %vm1002 = vcmask 1042432
      %vm1003 = vsmask.f32 2304
      %vm1004 = vmand %vm1002, %vm1003
      %v1005 = vld [vmem:[%s114] sm:$0x7]
      %v1006 = vsel %vm1004, %v1001, %v1005
      %1007 = vst [vmem:[%s114] sm:$0x7] %v1006
      %p1008 = scmp.lt.s32.totalorder %s12, 1
      %s1009 = scalar_select %p1008, %s12, 1
      %s1010 = smul.addr %s1009, 4
      %s1011 = scalar_lea.vmem %s1, %s1010
      // Predicated region
      $region25: #{vit_forward.14} parent=23 // pred_check
        %p1012 = pneg %p56
      $region26: #{vit_forward.14} parent=23 // pred_check_branch
        %1014 = sbr.rel (%p1012) target = $region28
      $region27: #{vit_forward.14} parent=23 // pred_region
        _
      $region28: #{vit_forward.14} parent=23 // pred_fallthru
        _
    $region24: #{vit_forward.14} parent=5 // pred_fallthru
      _
    %p1015 = scmp.le.s32.totalorder 2, %s7
    // Predicated region
    $region29: #{vit_forward.14} parent=5 // pred_check
      %p1016 = pneg %p1015
    $region30: #{vit_forward.14} parent=5 // pred_check_branch
      %1018 = sbr.rel (%p1016) target = $region32
    $region31: #{vit_forward.14} parent=5 // pred_region
      %s1019 = ssub.s32 %s7, 2
      // Predicated region
      $region33: #{vit_forward.14} parent=31 // pred_check
        %p1020 = pneg %p62
      $region34: #{vit_forward.14} parent=31 // pred_check_branch
        %1022 = sbr.rel (%p1020) target = $region36
      $region35: #{vit_forward.14} parent=31 // pred_region
        %p1023 = scmp.lt.s32.totalorder %s13, 1
        %s1024 = scalar_select %p1023, %s13, 1
        %s1025 = smul.addr %s1024, 4
        %s1026 = scalar_lea.vmem %s1, %s1025
      $region36: #{vit_forward.14} parent=31 // pred_fallthru
        _
    $region32: #{vit_forward.14} parent=5 // pred_fallthru
      _
  $region6: #{vit_forward.14} parent=0 // loop_footer
    %s11 = sadd.s32 1, %s7
  $region7: #{vit_forward.14} parent=0 // loop_footer_branch
    %6 = sbr.rel target = $region3
  $region8: #{vit_forward.14} parent=0 // loop_exit
    _

// kernel: vit_forward.16
$region0: #{vit_forward.16}
  #allocation0 [shape = 'u32[]', space=smem, size = 0x4, offset = 0x4, fixed_abs, tag = 'smem constant byte address 0x4 - core index']
  #allocation1 [shape = 'u32[144,128]{1,0:T(1,128)}', space=vmem, size = 0x12000, scoped, tag = 'internal scratch']
  #allocation2 [shape = 'bf16[10,128]{1,0:T(8,128)(2,1)}', space=vmem, size = 0x1000, scoped, tag = 'scratch operand']
  %s0 = inlined_call_operand.vmem [shape: bf16[10,128], index: 0, kind: input, shape index: {}]
  %s1 = inlined_call_operand.vmem [shape: bf16[128,512], index: 1, kind: input, shape index: {}]
  %s2 = inlined_call_operand.vmem [shape: f32[1,512], index: 2, kind: input, shape index: {}]
  %s3 = inlined_call_operand.vmem [shape: f32[1,128], index: 3, kind: input, shape index: {}]
  %s4 = inlined_call_operand.vmem [shape: f32[1,128], index: 4, kind: input, shape index: {}]
  %s5 = inlined_call_operand.vmem [shape: bf16[10,512], index: 5, kind: output, shape index: {}]
  %s6 = sld [smem:[#allocation0]]
  $region129: #{vit_forward.16} parent=0
    _
  %s8 = ssub.s32 1, %s6
  %s9 = scalar_select 0, %s8, %s6
  $region1: #{vit_forward.16} parent=0
    #allocation3 [shape = 'u8[131072]{0}', space=vmem, size = 0x20000, scoped, tag = 'input window, operand 1']
    #allocation4 [shape = 'u8[16384]{0}', space=vmem, size = 0x4000, scoped, tag = 'output window, operand 0']
    loop: start=0, step=1, limit=4
    $region2: #{vit_forward.16} parent=1 // loop_pre_header
      _
    $region3: #{vit_forward.16} parent=1 // loop_header
      %s11 = sphi 0, %s15
      %p12 = scmp.ge.s32.totalorder %s11, 4
      %s18 = sphi 0, %s37
      %s19 = sphi 0, %s33
      %s20 = sphi 0, %s29
      %s21 = sphi 0, %s18
      %s22 = sphi 0, %s19
      %s23 = sphi 0, %s20
      %s24 = sphi 0, %s21
      %s25 = sphi 0, %s22
      %s26 = sphi 0, %s23
      %s42 = sphi 0, %s44
      %s45 = sphi 0, %s42
      %s46 = sphi 0, %s45
      %s62 = sphi 0, %s46
      %s70 = sphi 0, %s72
      %s73 = sphi 0, %s70
      %s74 = sphi 0, %s73
      %s90 = sphi 0, %s74
      %s96 = sphi 0, %s98
      %s99 = sphi 0, %s96
      %s100 = sphi 0, %s99
      %s116 = sphi 0, %s100
      %s122 = sphi 0, %s124
      %s125 = sphi 0, %s122
      %s126 = sphi 0, %s125
      %s142 = sphi 0, %s126
      %s148 = sphi 0, %s150
      %s151 = sphi 0, %s148
      %s152 = sphi 0, %s151
      %s168 = sphi 0, %s152
      %s176 = sphi 0, %s178
      %s179 = sphi 0, %s176
      %s180 = sphi 0, %s179
      %s196 = sphi 0, %s180
    $region4: #{vit_forward.16} parent=1 // loop_header_branch
      %14 = sbr.rel (%p12) target = $region8
    $region5: #{vit_forward.16} parent=1 // loop_body
      %s16 = ssub.s32 %s11, 1
      %s17 = ssub.s32 %s11, 2
      %s27 = sadd.s32 1, %s20
      %p28 = scmp.ge.s32.totalorder %s27, 1
      %s29 = scalar_select %p28, 0, %s27
      %s30 = sadd.s32 1, %s19
      %s31 = scalar_select %p28, %s30, %s19
      %p32 = scmp.ge.s32.totalorder %s31, 2
      %s33 = scalar_select %p32, 0, %s31
      %s34 = sadd.s32 1, %s18
      %s35 = scalar_select %p32, %s34, %s18
      %p36 = scmp.ge.s32.totalorder %s35, 1
      %s37 = scalar_select %p36, 0, %s35
      %s38 = ssub.s32 %s18, %s37
      %s39 = ssub.s32 %s20, %s29
      %s40 = sor.u32 %s38, %s39
      %p41 = scmp.eq.s32.totalorder %s40, 0
      %s43 = sadd.s32 %s42, 1
      %s44 = scalar_select %p41, %s42, %s43
      %p47 = pneg %p41
      %p48 = scmp.eq.s32.totalorder %s11, 1
      %p49 = por %p47, %p48
      %p50 = scmp.ne.s32.totalorder %s42, %s45
      %p51 = scmp.eq.s32.totalorder %s11, 0
      %p52 = por %p50, %p51
      %p53 = scmp.ne.s32.totalorder %s42, %s45
      %p54 = scmp.eq.s32.totalorder %s16, 1
      %p55 = por %p53, %p54
      %p56 = scmp.ne.s32.totalorder %s45, %s46
      %p57 = scmp.eq.s32.totalorder %s16, 0
      %p58 = por %p56, %p57
      %p59 = scmp.ne.s32.totalorder %s45, %s46
      %p60 = scmp.eq.s32.totalorder %s17, 1
      %p61 = por %p59, %p60
      %p63 = scmp.ne.s32.totalorder %s46, %s62
      %p64 = scmp.eq.s32.totalorder %s17, 0
      %p65 = por %p63, %p64
      %s66 = ssub.s32 %s20, %s29
      %s67 = ssub.s32 %s19, %s33
      %s68 = sor.u32 %s66, %s67
      %p69 = scmp.eq.s32.totalorder %s68, 0
      %s71 = sadd.s32 %s70, 1
      %s72 = scalar_select %p69, %s70, %s71
      %p75 = pneg %p69
      %p76 = scmp.eq.s32.totalorder %s11, 1
      %p77 = por %p75, %p76
      %p78 = scmp.ne.s32.totalorder %s70, %s73
      %p79 = scmp.eq.s32.totalorder %s11, 0
      %p80 = por %p78, %p79
      %p81 = scmp.ne.s32.totalorder %s70, %s73
      %p82 = scmp.eq.s32.totalorder %s16, 1
      %p83 = por %p81, %p82
      %p84 = scmp.ne.s32.totalorder %s73, %s74
      %p85 = scmp.eq.s32.totalorder %s16, 0
      %p86 = por %p84, %p85
      %p87 = scmp.ne.s32.totalorder %s73, %s74
      %p88 = scmp.eq.s32.totalorder %s17, 1
      %p89 = por %p87, %p88
      %p91 = scmp.ne.s32.totalorder %s74, %s90
      %p92 = scmp.eq.s32.totalorder %s17, 0
      %p93 = por %p91, %p92
      %s94 = ssub.s32 %s19, %s33
      %p95 = scmp.eq.s32.totalorder %s94, 0
      %s97 = sadd.s32 %s96, 1
      %s98 = scalar_select %p95, %s96, %s97
      %p101 = pneg %p95
      %p102 = scmp.eq.s32.totalorder %s11, 1
      %p103 = por %p101, %p102
      %p104 = scmp.ne.s32.totalorder %s96, %s99
      %p105 = scmp.eq.s32.totalorder %s11, 0
      %p106 = por %p104, %p105
      %p107 = scmp.ne.s32.totalorder %s96, %s99
      %p108 = scmp.eq.s32.totalorder %s16, 1
      %p109 = por %p107, %p108
      %p110 = scmp.ne.s32.totalorder %s99, %s100
      %p111 = scmp.eq.s32.totalorder %s16, 0
      %p112 = por %p110, %p111
      %p113 = scmp.ne.s32.totalorder %s99, %s100
      %p114 = scmp.eq.s32.totalorder %s17, 1
      %p115 = por %p113, %p114
      %p117 = scmp.ne.s32.totalorder %s100, %s116
      %p118 = scmp.eq.s32.totalorder %s17, 0
      %p119 = por %p117, %p118
      %s120 = ssub.s32 %s20, %s29
      %p121 = scmp.eq.s32.totalorder %s120, 0
      %s123 = sadd.s32 %s122, 1
      %s124 = scalar_select %p121, %s122, %s123
      %p127 = pneg %p121
      %p128 = scmp.eq.s32.totalorder %s11, 1
      %p129 = por %p127, %p128
      %p130 = scmp.ne.s32.totalorder %s122, %s125
      %p131 = scmp.eq.s32.totalorder %s11, 0
      %p132 = por %p130, %p131
      %p133 = scmp.ne.s32.totalorder %s122, %s125
      %p134 = scmp.eq.s32.totalorder %s16, 1
      %p135 = por %p133, %p134
      %p136 = scmp.ne.s32.totalorder %s125, %s126
      %p137 = scmp.eq.s32.totalorder %s16, 0
      %p138 = por %p136, %p137
      %p139 = scmp.ne.s32.totalorder %s125, %s126
      %p140 = scmp.eq.s32.totalorder %s17, 1
      %p141 = por %p139, %p140
      %p143 = scmp.ne.s32.totalorder %s126, %s142
      %p144 = scmp.eq.s32.totalorder %s17, 0
      %p145 = por %p143, %p144
      %s146 = ssub.s32 %s20, %s29
      %p147 = scmp.eq.s32.totalorder %s146, 0
      %s149 = sadd.s32 %s148, 1
      %s150 = scalar_select %p147, %s148, %s149
      %p153 = pneg %p147
      %p154 = scmp.eq.s32.totalorder %s11, 1
      %p155 = por %p153, %p154
      %p156 = scmp.ne.s32.totalorder %s148, %s151
      %p157 = scmp.eq.s32.totalorder %s11, 0
      %p158 = por %p156, %p157
      %p159 = scmp.ne.s32.totalorder %s148, %s151
      %p160 = scmp.eq.s32.totalorder %s16, 1
      %p161 = por %p159, %p160
      %p162 = scmp.ne.s32.totalorder %s151, %s152
      %p163 = scmp.eq.s32.totalorder %s16, 0
      %p164 = por %p162, %p163
      %p165 = scmp.ne.s32.totalorder %s151, %s152
      %p166 = scmp.eq.s32.totalorder %s17, 1
      %p167 = por %p165, %p166
      %p169 = scmp.ne.s32.totalorder %s152, %s168
      %p170 = scmp.eq.s32.totalorder %s17, 0
      %p171 = por %p169, %p170
      %s172 = ssub.s32 %s18, %s37
      %s173 = ssub.s32 %s19, %s33
      %s174 = sor.u32 %s172, %s173
      %p175 = scmp.eq.s32.totalorder %s174, 0
      %s177 = sadd.s32 %s176, 1
      %s178 = scalar_select %p175, %s176, %s177
      %p181 = pneg %p175
      %p182 = scmp.eq.s32.totalorder %s11, 1
      %p183 = por %p181, %p182
      %p184 = scmp.ne.s32.totalorder %s176, %s179
      %p185 = scmp.eq.s32.totalorder %s11, 0
      %p186 = por %p184, %p185
      %p187 = scmp.ne.s32.totalorder %s176, %s179
      %p188 = scmp.eq.s32.totalorder %s16, 1
      %p189 = por %p187, %p188
      %p190 = scmp.ne.s32.totalorder %s179, %s180
      %p191 = scmp.eq.s32.totalorder %s16, 0
      %p192 = por %p190, %p191
      %p193 = scmp.ne.s32.totalorder %s179, %s180
      %p194 = scmp.eq.s32.totalorder %s17, 1
      %p195 = por %p193, %p194
      %p197 = scmp.ne.s32.totalorder %s180, %s196
      %p198 = scmp.eq.s32.totalorder %s17, 0
      %p199 = por %p197, %p198
      %p200 = scmp.le.s32.totalorder 1, %s11
      %p201 = scmp.lt.s32.totalorder %s11, 3
      %p202 = pnand %p200, %p201
      %p203 = pneg %p202
      // Predicated region
      $region9: #{vit_forward.16} parent=5 // pred_check
        _
      $region10: #{vit_forward.16} parent=5 // pred_check_branch
        %205 = sbr.rel (%p202) target = $region12
      $region11: #{vit_forward.16} parent=5 // pred_region
        %s206 = ssub.s32 %s11, 1
        // Predicated region
        $region13: #{vit_forward.16} parent=11 // pred_check
          %p207 = pneg %p58
        $region14: #{vit_forward.16} parent=11 // pred_check_branch
          %209 = sbr.rel (%p207) target = $region16
        $region15: #{vit_forward.16} parent=11 // pred_region
          %s210 = smul.u32 2, %s21
          %p211 = scmp.lt.s32.totalorder %s210, 1
          %s212 = scalar_select %p211, %s210, 1
          %p213 = scmp.lt.s32.totalorder %s23, 0
          %s214 = scalar_select %p213, %s23, 0
          %s215 = sadd.s32 %s214, %s212
          %s216 = smul.addr %s215, 4
          %s217 = scalar_lea.vmem %s0, %s216
          %s218 = smul.u32 2, %s21
        $region16: #{vit_forward.16} parent=11 // pred_fallthru
          _
        // Predicated region
        $region17: #{vit_forward.16} parent=11 // pred_check
          %p219 = pneg %p138
        $region18: #{vit_forward.16} parent=11 // pred_check_branch
          %221 = sbr.rel (%p219) target = $region20
        $region19: #{vit_forward.16} parent=11 // pred_region
          %p222 = scmp.lt.s32.totalorder %s23, 0
          %s223 = scalar_select %p222, %s23, 0
          %s224 = scalar_lea.vmem %s3, %s223
        $region20: #{vit_forward.16} parent=11 // pred_fallthru
          _
        // Predicated region
        $region21: #{vit_forward.16} parent=11 // pred_check
          %p225 = pneg %p164
        $region22: #{vit_forward.16} parent=11 // pred_check_branch
          %227 = sbr.rel (%p225) target = $region24
        $region23: #{vit_forward.16} parent=11 // pred_region
          %p228 = scmp.lt.s32.totalorder %s23, 0
          %s229 = scalar_select %p228, %s23, 0
          %s230 = scalar_lea.vmem %s4, %s229
        $region24: #{vit_forward.16} parent=11 // pred_fallthru
          _
      $region12: #{vit_forward.16} parent=5 // pred_fallthru
        _
      %p231 = scmp.lt.s32.totalorder %s11, 2
      // Predicated region
      $region25: #{vit_forward.16} parent=5 // pred_check
        %p232 = pneg %p231
      $region26: #{vit_forward.16} parent=5 // pred_check_branch
        %234 = sbr.rel (%p232) target = $region28
      $region27: #{vit_forward.16} parent=5 // pred_region
        // Predicated region
        $region29: #{vit_forward.16} parent=27 // pred_check
          %p235 = pneg %p80
        $region30: #{vit_forward.16} parent=27 // pred_check_branch
          %237 = sbr.rel (%p235) target = $region32
        $region31: #{vit_forward.16} parent=27 // pred_region
          %s238 = sand.u32 %s70, 1
          %s239 = sand.u32 %s70, 1
          %s240 = smul.addr %s239, 128
          %s241 = scalar_lea.vmem [#allocation3], %s240
          %s242 = smul.u32 16, %s20
          %s243 = smul.u32 2, %s19
          %s244 = smul.addr %s242, 4
          %s245 = sadd.s32 %s243, %s244
          %s246 = smul.addr %s245, 4
          %s247 = scalar_lea.vmem %s1, %s246
          // Predicated region
          $region33: #{vit_forward.16} parent=31 // pred_check
            _
          $region34: #{vit_forward.16} parent=31 // pred_check_branch
            %249 = sbr.rel (0) target = $region36
          $region35: #{vit_forward.16} parent=31 // pred_region
            // Predicated region
            $region37: #{vit_forward.16} parent=35 // pred_check
              _
            $region38: #{vit_forward.16} parent=35 // pred_check_branch
              %251 = sbr.rel (0) target = $region40
            $region39: #{vit_forward.16} parent=35 // pred_region
              // Predicated region
              $region52: #{vit_forward.16} parent=39 // pred_check
                _
              $region53: #{vit_forward.16} parent=39 // pred_check_branch
                %296 = sbr.rel (0) target = $region55
              $region54: #{vit_forward.16} parent=39 // pred_region
                loop: start=0, step=1, limit=1
                $region56: #{vit_forward.16} parent=54 // loop_pre_header
                  _
                $region57: #{vit_forward.16} parent=54 // loop_header
                  %s298 = sphi 0, %s302
                  %p299 = scmp.ge.s32.totalorder %s298, 1
                  %s303 = sphi %s247, %s247
                  %s304 = sphi %s241, %s241
                $region58: #{vit_forward.16} parent=54 // loop_header_branch
                  %301 = sbr.rel (%p299) target = $region62
                $region59: #{vit_forward.16} parent=54 // loop_body
                  %v305 = vld [vmem:[%s303] sm:$0xff]
                  %306 = vst [vmem:[%s304] sm:$0xff] %v305
                  %v307 = vld [vmem:[%s303 + $0x10] sm:$0xff]
                  %308 = vst [vmem:[%s304 + $0x8] sm:$0xff] %v307
                  %v309 = vld [vmem:[%s303 + $0x20] sm:$0xff]
                  %310 = vst [vmem:[%s304 + $0x10] sm:$0xff] %v309
                  %v311 = vld [vmem:[%s303 + $0x30] sm:$0xff]
                  %312 = vst [vmem:[%s304 + $0x18] sm:$0xff] %v311
                  %v313 = vld [vmem:[%s303 + $0x40] sm:$0xff]
                  %314 = vst [vmem:[%s304 + $0x20] sm:$0xff] %v313
                  %v315 = vld [vmem:[%s303 + $0x50] sm:$0xff]
                  %316 = vst [vmem:[%s304 + $0x28] sm:$0xff] %v315
                  %v317 = vld [vmem:[%s303 + $0x60] sm:$0xff]
                  %318 = vst [vmem:[%s304 + $0x30] sm:$0xff] %v317
                  %v319 = vld [vmem:[%s303 + $0x70] sm:$0xff]
                  %320 = vst [vmem:[%s304 + $0x38] sm:$0xff] %v319
                  %v321 = vld [vmem:[%s303 + $0x80] sm:$0xff]
                  %322 = vst [vmem:[%s304 + $0x40] sm:$0xff] %v321
                  %v323 = vld [vmem:[%s303 + $0x90] sm:$0xff]
                  %324 = vst [vmem:[%s304 + $0x48] sm:$0xff] %v323
                  %v325 = vld [vmem:[%s303 + $0xa0] sm:$0xff]
                  %326 = vst [vmem:[%s304 + $0x50] sm:$0xff] %v325
                  %v327 = vld [vmem:[%s303 + $0xb0] sm:$0xff]
                  %328 = vst [vmem:[%s304 + $0x58] sm:$0xff] %v327
                  %v329 = vld [vmem:[%s303 + $0xc0] sm:$0xff]
                  %330 = vst [vmem:[%s304 + $0x60] sm:$0xff] %v329
                  %v331 = vld [vmem:[%s303 + $0xd0] sm:$0xff]
                  %332 = vst [vmem:[%s304 + $0x68] sm:$0xff] %v331
                  %v333 = vld [vmem:[%s303 + $0xe0] sm:$0xff]
                  %334 = vst [vmem:[%s304 + $0x70] sm:$0xff] %v333
                  %v335 = vld [vmem:[%s303 + $0xf0] sm:$0xff]
                  %336 = vst [vmem:[%s304 + $0x78] sm:$0xff] %v335
                $region60: #{vit_forward.16} parent=54 // loop_footer
                  %s302 = sadd.s32 1, %s298
                $region61: #{vit_forward.16} parent=54 // loop_footer_branch
                  %297 = sbr.rel target = $region57
                $region62: #{vit_forward.16} parent=54 // loop_exit
                  _
              $region55: #{vit_forward.16} parent=39 // pred_fallthru
                _
              // Predicated region
              $region63: #{vit_forward.16} parent=39 // pred_check
                _
              $region64: #{vit_forward.16} parent=39 // pred_check_branch
                %338 = sbr.rel target = $region66
              $region65: #{vit_forward.16} parent=39 // pred_region
                _
              $region66: #{vit_forward.16} parent=39 // pred_fallthru
                _
            $region40: #{vit_forward.16} parent=35 // pred_fallthru
              _
            // Predicated region
            $region41: #{vit_forward.16} parent=35 // pred_check
              _
            $region42: #{vit_forward.16} parent=35 // pred_check_branch
              %253 = sbr.rel target = $region44
            $region43: #{vit_forward.16} parent=35 // pred_region
              loop: start=0, step=1, limit=1
              $region45: #{vit_forward.16} parent=43 // loop_pre_header
                _
              $region46: #{vit_forward.16} parent=43 // loop_header
                %s256 = sphi 0, %s260
                %p257 = scmp.ge.s32.totalorder %s256, 1
                %s261 = sphi %s247, %s247
                %s262 = sphi %s241, %s241
              $region47: #{vit_forward.16} parent=43 // loop_header_branch
                %259 = sbr.rel (%p257) target = $region51
              $region48: #{vit_forward.16} parent=43 // loop_body
                %v263 = vld [vmem:[%s261] sm:$0xff]
                %264 = vst [vmem:[%s262] sm:$0xff] %v263
                %v265 = vld [vmem:[%s261 + $0x10] sm:$0xff]
                %266 = vst [vmem:[%s262 + $0x8] sm:$0xff] %v265
                %v267 = vld [vmem:[%s261 + $0x20] sm:$0xff]
                %268 = vst [vmem:[%s262 + $0x10] sm:$0xff] %v267
                %v269 = vld [vmem:[%s261 + $0x30] sm:$0xff]
                %270 = vst [vmem:[%s262 + $0x18] sm:$0xff] %v269
                %v271 = vld [vmem:[%s261 + $0x40] sm:$0xff]
                %272 = vst [vmem:[%s262 + $0x20] sm:$0xff] %v271
                %v273 = vld [vmem:[%s261 + $0x50] sm:$0xff]
                %274 = vst [vmem:[%s262 + $0x28] sm:$0xff] %v273
                %v275 = vld [vmem:[%s261 + $0x60] sm:$0xff]
                %276 = vst [vmem:[%s262 + $0x30] sm:$0xff] %v275
                %v277 = vld [vmem:[%s261 + $0x70] sm:$0xff]
                %278 = vst [vmem:[%s262 + $0x38] sm:$0xff] %v277
                %v279 = vld [vmem:[%s261 + $0x80] sm:$0xff]
                %280 = vst [vmem:[%s262 + $0x40] sm:$0xff] %v279
                %v281 = vld [vmem:[%s261 + $0x90] sm:$0xff]
                %282 = vst [vmem:[%s262 + $0x48] sm:$0xff] %v281
                %v283 = vld [vmem:[%s261 + $0xa0] sm:$0xff]
                %284 = vst [vmem:[%s262 + $0x50] sm:$0xff] %v283
                %v285 = vld [vmem:[%s261 + $0xb0] sm:$0xff]
                %286 = vst [vmem:[%s262 + $0x58] sm:$0xff] %v285
                %v287 = vld [vmem:[%s261 + $0xc0] sm:$0xff]
                %288 = vst [vmem:[%s262 + $0x60] sm:$0xff] %v287
                %v289 = vld [vmem:[%s261 + $0xd0] sm:$0xff]
                %290 = vst [vmem:[%s262 + $0x68] sm:$0xff] %v289
                %v291 = vld [vmem:[%s261 + $0xe0] sm:$0xff]
                %292 = vst [vmem:[%s262 + $0x70] sm:$0xff] %v291
                %v293 = vld [vmem:[%s261 + $0xf0] sm:$0xff]
                %294 = vst [vmem:[%s262 + $0x78] sm:$0xff] %v293
              $region49: #{vit_forward.16} parent=43 // loop_footer
                %s260 = sadd.s32 1, %s256
              $region50: #{vit_forward.16} parent=43 // loop_footer_branch
                %255 = sbr.rel target = $region46
              $region51: #{vit_forward.16} parent=43 // loop_exit
                _
            $region44: #{vit_forward.16} parent=35 // pred_fallthru
              _
          $region36: #{vit_forward.16} parent=31 // pred_fallthru
            _
          %339 = vnop
        $region32: #{vit_forward.16} parent=27 // pred_fallthru
          _
        // Predicated region
        $region67: #{vit_forward.16} parent=27 // pred_check
          %p340 = pneg %p106
        $region68: #{vit_forward.16} parent=27 // pred_check_branch
          %342 = sbr.rel (%p340) target = $region70
        $region69: #{vit_forward.16} parent=27 // pred_region
          %s343 = smul.u32 2, %s19
          %p344 = scmp.lt.s32.totalorder %s343, 3
          %s345 = scalar_select %p344, %s343, 3
          %s346 = scalar_lea.vmem %s2, %s345
          %s347 = smul.u32 2, %s19
        $region70: #{vit_forward.16} parent=27 // pred_fallthru
          _
      $region28: #{vit_forward.16} parent=5 // pred_fallthru
        _
      %p348 = scmp.le.s32.totalorder 1, %s11
      %p349 = scmp.lt.s32.totalorder %s11, 3
      %p350 = pnand %p348, %p349
      %p351 = pneg %p350
      // Predicated region
      $region71: #{vit_forward.16} parent=5 // pred_check
        _
      $region72: #{vit_forward.16} parent=5 // pred_check_branch
        %353 = sbr.rel (%p350) target = $region74
      $region73: #{vit_forward.16} parent=5 // pred_region
        %s354 = ssub.s32 %s11, 1
        %s355 = sand.u32 %s73, 1
        %s356 = sand.u32 %s73, 1
        %s357 = smul.addr %s356, 128
        %s358 = scalar_lea.vmem [#allocation3], %s357
        // Predicated region
        $region75: #{vit_forward.16} parent=73 // pred_check
          %p359 = pneg %p86
        $region76: #{vit_forward.16} parent=73 // pred_check_branch
          %361 = sbr.rel (%p359) target = $region78
        $region77: #{vit_forward.16} parent=73 // pred_region
          _
        $region78: #{vit_forward.16} parent=73 // pred_fallthru
          _
        %s362 = smul.u32 2, %s21
        %p363 = scmp.lt.s32.totalorder %s362, 1
        %s364 = scalar_select %p363, %s362, 1
        %p365 = scmp.lt.s32.totalorder %s23, 0
        %s366 = scalar_select %p365, %s23, 0
        %s367 = sadd.s32 %s366, %s364
        %s368 = smul.addr %s367, 4
        %s369 = scalar_lea.vmem %s0, %s368
        %p370 = pneg %p58
        %p371 = pneg %p55
        %s372 = sand.u32 %s73, 1
        %s373 = sand.u32 %s73, 1
        %s374 = smul.addr %s373, 128
        %s375 = scalar_lea.vmem [#allocation3], %s374
        %p376 = pneg %p86
        %p377 = pneg %p83
        %s378 = smul.u32 2, %s22
        %p379 = scmp.lt.s32.totalorder %s378, 3
        %s380 = scalar_select %p379, %s378, 3
        %s381 = scalar_lea.vmem %s2, %s380
        %p382 = pneg %p112
        %p383 = pneg %p109
        %p384 = scmp.lt.s32.totalorder %s23, 0
        %s385 = scalar_select %p384, %s23, 0
        %s386 = scalar_lea.vmem %s3, %s385
        %p387 = pneg %p138
        %p388 = pneg %p135
        %p389 = scmp.lt.s32.totalorder %s23, 0
        %s390 = scalar_select %p389, %s23, 0
        %s391 = scalar_lea.vmem %s4, %s390
        %p392 = pneg %p164
        %p393 = pneg %p161
        %p394 = pneg %p192
        %p395 = pneg %p189
        %s396 = sand.u32 %s179, 1
        %s397 = sand.u32 %s179, 1
        %s398 = smul.addr %s397, 16
        %s399 = scalar_lea.vmem [#allocation4], %s398
        %s400 = smul.u32 2, %s21
        %p401 = scmp.lt.s32.totalorder %s400, 1
        %s402 = scalar_select %p401, %s400, 1
        %p403 = scmp.lt.s32.totalorder %s23, 0
        %s404 = scalar_select %p403, %s23, 0
        %s405 = sadd.s32 %s404, %s402
        %s406 = smul.addr %s405, 4
        %s407 = scalar_lea.vmem %s0, %s406
        %s408 = smul.u32 2, %s21
        %s409 = smul.u32 16, %s23
        %s410 = smul.u32 2, %s22
        %s411 = smul.u32 2, %s22
        %p412 = scmp.lt.s32.totalorder %s411, 3
        %s413 = scalar_select %p412, %s411, 3
        %s414 = scalar_lea.vmem %s2, %s413
        %s415 = smul.u32 2, %s22
        %p416 = scmp.lt.s32.totalorder %s23, 0
        %s417 = scalar_select %p416, %s23, 0
        %s418 = scalar_lea.vmem %s3, %s417
        %p419 = scmp.lt.s32.totalorder %s23, 0
        %s420 = scalar_select %p419, %s23, 0
        %s421 = scalar_lea.vmem %s4, %s420
        %s422 = smul.u32 2, %s21
        %s423 = smul.u32 2, %s22
        %p425 = scmp.eq.s32.totalorder %s22, 0
        // Predicated region
        $region79: #{vit_forward.16} parent=73 // pred_check
          %p426 = pneg %p425
        $region80: #{vit_forward.16} parent=73 // pred_check_branch
          %428 = sbr.rel (%p426) target = $region82
        $region81: #{vit_forward.16} parent=73 // pred_region
          %v429 = vld [vmem:[%s407] sm:$0xf]
          %v430 = vld [vmem:[%s407 + $0x4] sm:$0x1]
          %v431 = vunpack.c.l.bf16 %v429
          %v432 = vunpack.c.l.bf16 %v430
          %433 = vadd.xlane.f32.xlu0 %v431
          %v434 = vpop.xlane.xlu0 %433
          %vm435 = vcmask 1041408
          %v436 = vsel %vm435, %v432, 0.0
          %437 = vadd.xlane.f32.xlu0 %v436
          %v438 = vpop.xlane.xlu0 %437
          %v439 = vrcp.pop 128.0
          %v440 = vmul.f32 %v434, %v439
          %v441 = vmul.f32 %v438, %v439
          %v442 = vsub.f32 %v431, %v440
          %v443 = vsub.f32 %v432, %v441
          %v444 = vmul.f32 %v442, %v442
          %v445 = vmul.f32 %v443, %v443
          %446 = vadd.xlane.f32.xlu0 %v444
          %v447 = vpop.xlane.xlu0 %446
          %v448 = vsel %vm435, %v445, 0.0
          %449 = vadd.xlane.f32.xlu0 %v448
          %v450 = vpop.xlane.xlu0 %449
          %v451 = vmul.f32 %v447, %v439
          %v452 = vmul.f32 %v450, %v439
          %v453 = vadd.f32 %v451, 1e-05
          %v454 = vadd.f32 %v452, 1e-05
          %v455 = vrsqrt.pop %v453
          %v456 = vrsqrt.pop %v454
          %v457 = vmul.f32 %v442, %v455
          %v458 = vmul.f32 %v443, %v456
          %v459 = vld [vmem:[%s418] sm:$0x1]
          %v461 = vlaneseq
          %v462 = vshrl.u32 %v461, 7
          %v463 = vsub.s32 0, %v462
          %v464 = vrot.slane %v459, %v463
          %v466 = vmul.f32 %v457, %v464
          %v467 = vmul.f32 %v458, %v464
          %v468 = vld [vmem:[%s421] sm:$0x1]
          %v470 = vlaneseq
          %v471 = vshrl.u32 %v470, 7
          %v472 = vsub.s32 0, %v471
          %v473 = vrot.slane %v468, %v472
          %v475 = vadd.f32 %v466, %v473
          %v476 = vadd.f32 %v467, %v473
          %v477 = vpack.c.bf16 %v476, %v475
          %v479 = vunpack.c.l.b16 %v477
          %v480 = vunpack.c.h.b16 %v477
          %v481 = vpack.c.b16 %v479, %v479
          %v482 = vpack.c.b16 %v480, %v480
          %485 = vst [vmem:[#allocation2] sm:$0xf] %v481
          %486 = vst [vmem:[#allocation2 + $0x4] sm:$0x1] %v482
        $region82: #{vit_forward.16} parent=73 // pred_fallthru
          _
        %v487 = vld [vmem:[#allocation2] sm:$0xf]
        %v488 = vld [vmem:[#allocation2 + $0x4] sm:$0x1]
        %v489 = vld [vmem:[%s358] sm:$0xff]
        %v490 = vld [vmem:[%s358 + $0x8] sm:$0xff]
        %v491 = vld [vmem:[%s358 + $0x10] sm:$0xff]
        %v492 = vld [vmem:[%s358 + $0x18] sm:$0xff]
        %v493 = vld [vmem:[%s358 + $0x20] sm:$0xff]
        %v494 = vld [vmem:[%s358 + $0x28] sm:$0xff]
        %v495 = vld [vmem:[%s358 + $0x30] sm:$0xff]
        %v496 = vld [vmem:[%s358 + $0x38] sm:$0xff]
        %v497 = vld [vmem:[%s358 + $0x40] sm:$0xff]
        %v498 = vld [vmem:[%s358 + $0x48] sm:$0xff]
        %v499 = vld [vmem:[%s358 + $0x50] sm:$0xff]
        %v500 = vld [vmem:[%s358 + $0x58] sm:$0xff]
        %v501 = vld [vmem:[%s358 + $0x60] sm:$0xff]
        %v502 = vld [vmem:[%s358 + $0x68] sm:$0xff]
        %v503 = vld [vmem:[%s358 + $0x70] sm:$0xff]
        %v504 = vld [vmem:[%s358 + $0x78] sm:$0xff]
        %v505 = vld [vmem:[%s414] sm:$0x3]
        %v507 = vlaneseq
        %v508 = vshrl.u32 %v507, 7
        %v509 = vsub.s32 0, %v508
        %v510 = vrot.slane %v505, %v509
        %v511 = vlaneseq
        %v512 = vshrl.u32 %v511, 7
        %v513 = vsub.s32 1, %v512
        %v514 = vrot.slane %v505, %v513
        %v519 = vunpack.c.l.b16 %v487
        %v520 = vunpack.c.l.b16 %v488
        %v521 = vpack.c.b16 %v520, %v519
        %v539 = vunpack.c.l.b16 %v489
        %v540 = vunpack.c.h.b16 %v489
        %v541 = vunpack.c.l.b16 %v490
        %v542 = vunpack.c.h.b16 %v490
        %v543 = vunpack.c.l.b16 %v491
        %v544 = vunpack.c.h.b16 %v491
        %v545 = vunpack.c.l.b16 %v492
        %v546 = vunpack.c.h.b16 %v492
        %v547 = vunpack.c.l.b16 %v493
        %v548 = vunpack.c.h.b16 %v493
        %v549 = vunpack.c.l.b16 %v494
        %v550 = vunpack.c.h.b16 %v494
        %v551 = vunpack.c.l.b16 %v495
        %v552 = vunpack.c.h.b16 %v495
        %v553 = vunpack.c.l.b16 %v496
        %v554 = vunpack.c.h.b16 %v496
        %v555 = vunpack.c.l.b16 %v497
        %v556 = vunpack.c.h.b16 %v497
        %v557 = vunpack.c.l.b16 %v498
        %v558 = vunpack.c.h.b16 %v498
        %v559 = vunpack.c.l.b16 %v499
        %v560 = vunpack.c.h.b16 %v499
        %v561 = vunpack.c.l.b16 %v500
        %v562 = vunpack.c.h.b16 %v500
        %v563 = vunpack.c.l.b16 %v501
        %v564 = vunpack.c.h.b16 %v501
        %v565 = vunpack.c.l.b16 %v502
        %v566 = vunpack.c.h.b16 %v502
        %v567 = vunpack.c.l.b16 %v503
        %v568 = vunpack.c.h.b16 %v503
        %v569 = vunpack.c.l.b16 %v504
        %v570 = vunpack.c.h.b16 %v504
        %v571 = vpack.c.b16 %v541, %v539
        %v572 = vpack.c.b16 %v542, %v540
        %v573 = vpack.c.b16 %v545, %v543
        %v574 = vpack.c.b16 %v546, %v544
        %v575 = vpack.c.b16 %v549, %v547
        %v576 = vpack.c.b16 %v550, %v548
        %v577 = vpack.c.b16 %v553, %v551
        %v578 = vpack.c.b16 %v554, %v552
        %v579 = vpack.c.b16 %v557, %v555
        %v580 = vpack.c.b16 %v558, %v556
        %v581 = vpack.c.b16 %v561, %v559
        %v582 = vpack.c.b16 %v562, %v560
        %v583 = vpack.c.b16 %v565, %v563
        %v584 = vpack.c.b16 %v566, %v564
        %v585 = vpack.c.b16 %v569, %v567
        %v586 = vpack.c.b16 %v570, %v568
        %603 = vmatprep.subr.bf16.mxu0 %v572
        %604 = vmatpush1.bf16.msra.mxu0 %v571
        %605 = vmatprep.subr.bf16.mxu0 %v574
        %606 = vmatpush1.bf16.msra.mxu0 %v573
        %607 = vmatprep.subr.bf16.mxu0 %v576
        %608 = vmatpush1.bf16.msra.mxu0 %v575
        %609 = vmatprep.subr.bf16.mxu0 %v578
        %610 = vmatpush1.bf16.msra.mxu0 %v577
        %611 = vmatprep.subr.bf16.mxu0 %v580
        %612 = vmatpush1.bf16.msra.mxu0 %v579
        %613 = vmatprep.subr.bf16.mxu0 %v582
        %614 = vmatpush1.bf16.msra.mxu0 %v581
        %615 = vmatprep.subr.bf16.mxu0 %v584
        %616 = vmatpush1.bf16.msra.mxu0 %v583
        %617 = vmatprep.subr.bf16.mxu0 %v586
        %618 = vmatpush1.bf16.msra.mxu0 %v585
        %619 = vmatprep.subr.bf16.mxu0 0
        %620 = vmatpush1.bf16.msra.mxu0 0
        %621 = vmatprep.subr.bf16.mxu0 0
        %622 = vmatpush1.bf16.msra.mxu0 0
        %623 = vmatprep.subr.bf16.mxu0 0
        %624 = vmatpush1.bf16.msra.mxu0 0
        %625 = vmatprep.subr.bf16.mxu0 0
        %626 = vmatpush1.bf16.msra.mxu0 0
        %627 = vmatprep.subr.bf16.mxu0 0
        %628 = vmatpush1.bf16.msra.mxu0 0
        %629 = vmatprep.subr.bf16.mxu0 0
        %630 = vmatpush1.bf16.msra.mxu0 0
        %631 = vmatprep.subr.bf16.mxu0 0
        %632 = vmatpush1.bf16.msra.mxu0 0
        %633 = vmatprep.subr.bf16.mxu0 0
        %634 = vmatpush1.bf16.msra.mxu0 0
        %635 = vmatprep.mubr.bf16.mxu0 0
        %636 = vmatmul.mubr.bf16.gmra.mrb[0].mxu0 %v521
        %v637 = vpop.f32.mrb[0].mxu0
        %v638 = vadd.f32 %v510, %v637
        %v639 = vpop.f32.mrb[0].mxu0
        %v640 = vadd.f32 %v514, %v639
        %v641 = vpop.f32.mrb[0].mxu0
        %v642 = vadd.f32 %v510, %v641
        %v643 = vpop.f32.mrb[0].mxu0
        %v644 = vadd.f32 %v514, %v643
        %645 = vdwg.mxu0
        %v646 = vmul.f32 %v638, 0.5
        %v647 = vmul.f32 %v640, 0.5
        %v648 = vmul.f32 %v642, 0.5
        %v649 = vmul.f32 %v644, 0.5
        %v650 = vmul.f32 %v638, 0.70710677
        %v651 = vmul.f32 %v640, 0.70710677
        %v652 = vmul.f32 %v642, 0.70710677
        %v653 = vmul.f32 %v644, 0.70710677
        %v654 = verf.f32.pop %v650
        %v655 = verf.f32.pop %v651
        %v656 = verf.f32.pop %v652
        %v657 = verf.f32.pop %v653
        %v658 = vadd.f32 %v654, 1.0
        %v659 = vadd.f32 %v655, 1.0
        %v660 = vadd.f32 %v656, 1.0
        %v661 = vadd.f32 %v657, 1.0
        %v662 = vmul.f32 %v646, %v658
        %v663 = vmul.f32 %v647, %v659
        %v664 = vmul.f32 %v648, %v660
        %v665 = vmul.f32 %v649, %v661
        %v666 = vpack.c.bf16 %v664, %v662
        %v667 = vpack.c.bf16 %v665, %v663
        %v670 = vunpack.c.l.b16 %v666
        %v671 = vunpack.c.l.b16 %v667
        %v672 = vunpack.c.h.b16 %v666
        %v673 = vunpack.c.h.b16 %v667
        %v674 = vpack.c.b16 %v671, %v670
        %v675 = vpack.c.b16 %v673, %v672
        %678 = vst [vmem:[%s399] sm:$0xff] %v674
        %679 = vst [vmem:[%s399 + $0x8] sm:$0x11] %v675
        %s680 = sand.u32 %s179, 1
        %s681 = sand.u32 %s179, 1
        %s682 = smul.addr %s681, 16
        %s683 = scalar_lea.vmem [#allocation4], %s682
        // Predicated region
        $region83: #{vit_forward.16} parent=73 // pred_check
          %p684 = pneg %p189
        $region84: #{vit_forward.16} parent=73 // pred_check_branch
          %686 = sbr.rel (%p684) target = $region86
        $region85: #{vit_forward.16} parent=73 // pred_region
          %s687 = smul.u32 2, %s21
          %s688 = smul.u32 2, %s22
          %s689 = smul.addr %s687, 4
          %s690 = sadd.s32 %s688, %s689
          %s691 = smul.addr %s690, 4
          %s692 = scalar_lea.vmem %s5, %s691
          // Predicated region
          $region87: #{vit_forward.16} parent=85 // pred_check
            _
          $region88: #{vit_forward.16} parent=85 // pred_check_branch
            %694 = sbr.rel (0) target = $region90
          $region89: #{vit_forward.16} parent=85 // pred_region
            // Predicated region
            $region91: #{vit_forward.16} parent=89 // pred_check
              _
            $region92: #{vit_forward.16} parent=89 // pred_check_branch
              %696 = sbr.rel (0) target = $region94
            $region93: #{vit_forward.16} parent=89 // pred_region
              // Predicated region
              $region106: #{vit_forward.16} parent=93 // pred_check
                _
              $region107: #{vit_forward.16} parent=93 // pred_check_branch
                %713 = sbr.rel (0) target = $region109
              $region108: #{vit_forward.16} parent=93 // pred_region
                loop: start=0, step=1, limit=1
                $region110: #{vit_forward.16} parent=108 // loop_pre_header
                  _
                $region111: #{vit_forward.16} parent=108 // loop_header
                  %s715 = sphi 0, %s719
                  %p716 = scmp.ge.s32.totalorder %s715, 1
                  %s720 = sphi %s683, %s683
                  %s721 = sphi %s692, %s692
                $region112: #{vit_forward.16} parent=108 // loop_header_branch
                  %718 = sbr.rel (%p716) target = $region116
                $region113: #{vit_forward.16} parent=108 // loop_body
                  %v722 = vld [vmem:[%s720] sm:$0xff]
                  %723 = vst [vmem:[%s721] sm:$0xff] %v722
                  %v724 = vld [vmem:[%s720 + $0x8] sm:$0xff]
                  %725 = vst [vmem:[%s721 + $0x10] sm:$0xff] %v724
                $region114: #{vit_forward.16} parent=108 // loop_footer
                  %s719 = sadd.s32 1, %s715
                $region115: #{vit_forward.16} parent=108 // loop_footer_branch
                  %714 = sbr.rel target = $region111
                $region116: #{vit_forward.16} parent=108 // loop_exit
                  _
              $region109: #{vit_forward.16} parent=93 // pred_fallthru
                _
              // Predicated region
              $region117: #{vit_forward.16} parent=93 // pred_check
                _
              $region118: #{vit_forward.16} parent=93 // pred_check_branch
                %727 = sbr.rel target = $region120
              $region119: #{vit_forward.16} parent=93 // pred_region
                _
              $region120: #{vit_forward.16} parent=93 // pred_fallthru
                _
            $region94: #{vit_forward.16} parent=89 // pred_fallthru
              _
            // Predicated region
            $region95: #{vit_forward.16} parent=89 // pred_check
              _
            $region96: #{vit_forward.16} parent=89 // pred_check_branch
              %698 = sbr.rel target = $region98
            $region97: #{vit_forward.16} parent=89 // pred_region
              loop: start=0, step=1, limit=1
              $region99: #{vit_forward.16} parent=97 // loop_pre_header
                _
              $region100: #{vit_forward.16} parent=97 // loop_header
                %s701 = sphi 0, %s705
                %p702 = scmp.ge.s32.totalorder %s701, 1
                %s706 = sphi %s683, %s683
                %s707 = sphi %s692, %s692
              $region101: #{vit_forward.16} parent=97 // loop_header_branch
                %704 = sbr.rel (%p702) target = $region105
              $region102: #{vit_forward.16} parent=97 // loop_body
                %v708 = vld [vmem:[%s706] sm:$0xff]
                %709 = vst [vmem:[%s707] sm:$0xff] %v708
                %v710 = vld [vmem:[%s706 + $0x8] sm:$0xff]
                %711 = vst [vmem:[%s707 + $0x10] sm:$0xff] %v710
              $region103: #{vit_forward.16} parent=97 // loop_footer
                %s705 = sadd.s32 1, %s701
              $region104: #{vit_forward.16} parent=97 // loop_footer_branch
                %700 = sbr.rel target = $region100
              $region105: #{vit_forward.16} parent=97 // loop_exit
                _
            $region98: #{vit_forward.16} parent=89 // pred_fallthru
              _
          $region90: #{vit_forward.16} parent=85 // pred_fallthru
            _
          %728 = vnop
        $region86: #{vit_forward.16} parent=73 // pred_fallthru
          _
      $region74: #{vit_forward.16} parent=5 // pred_fallthru
        _
      %p729 = scmp.le.s32.totalorder 2, %s11
      // Predicated region
      $region121: #{vit_forward.16} parent=5 // pred_check
        %p730 = pneg %p729
      $region122: #{vit_forward.16} parent=5 // pred_check_branch
        %732 = sbr.rel (%p730) target = $region124
      $region123: #{vit_forward.16} parent=5 // pred_region
        %s733 = ssub.s32 %s11, 2
        // Predicated region
        $region125: #{vit_forward.16} parent=123 // pred_check
          %p734 = pneg %p195
        $region126: #{vit_forward.16} parent=123 // pred_check_branch
          %736 = sbr.rel (%p734) target = $region128
        $region127: #{vit_forward.16} parent=123 // pred_region
          %s737 = sand.u32 %s180, 1
          %s738 = sand.u32 %s180, 1
          %s739 = smul.addr %s738, 16
          %s740 = scalar_lea.vmem [#allocation4], %s739
        $region128: #{vit_forward.16} parent=123 // pred_fallthru
          _
      $region124: #{vit_forward.16} parent=5 // pred_fallthru
        _
    $region6: #{vit_forward.16} parent=1 // loop_footer
      %s15 = sadd.s32 1, %s11
    $region7: #{vit_forward.16} parent=1 // loop_footer_branch
      %10 = sbr.rel target = $region3
    $region8: #{vit_forward.16} parent=1 // loop_exit
      _

// kernel: vit_forward.17
$region0: #{vit_forward.17}
  #allocation0 [shape = 'u32[]', space=smem, size = 0x4, offset = 0x4, fixed_abs, tag = 'smem constant byte address 0x4 - core index']
  #allocation1 [shape = 'u32[144,128]{1,0:T(1,128)}', space=vmem, size = 0x12000, scoped, tag = 'internal scratch']
  %s0 = inlined_call_operand.vmem [shape: bf16[10,512], index: 0, kind: input, shape index: {}]
  %s1 = inlined_call_operand.vmem [shape: bf16[512,128], index: 1, kind: input, shape index: {}]
  %s2 = inlined_call_operand.vmem [shape: f32[1,128], index: 2, kind: input, shape index: {}]
  %s3 = inlined_call_operand.vmem [shape: bf16[10,128], index: 3, kind: input, shape index: {}]
  %s4 = inlined_call_operand.vmem [shape: bf16[10,128], index: 4, kind: output, shape index: {}]
  %s5 = sld [smem:[#allocation0]]
  $region26: #{vit_forward.17} parent=0
    _
  %s7 = ssub.s32 1, %s5
  %s8 = scalar_select 0, %s7, %s5
  // Predicated region
  $region2: #{vit_forward.17} parent=0 // pred_check
    _
  $region3: #{vit_forward.17} parent=0 // pred_check_branch
    %10 = sbr.rel (0) target = $region5
  $region4: #{vit_forward.17} parent=0 // pred_region
    _
  $region5: #{vit_forward.17} parent=0 // pred_fallthru
    _
  // Predicated region
  $region6: #{vit_forward.17} parent=0 // pred_check
    _
  $region7: #{vit_forward.17} parent=0 // pred_check_branch
    %12 = sbr.rel (0) target = $region9
  $region8: #{vit_forward.17} parent=0 // pred_region
    _
  $region9: #{vit_forward.17} parent=0 // pred_fallthru
    _
  // Predicated region
  $region10: #{vit_forward.17} parent=0 // pred_check
    _
  $region11: #{vit_forward.17} parent=0 // pred_check_branch
    %14 = sbr.rel (0) target = $region13
  $region12: #{vit_forward.17} parent=0 // pred_region
    _
  $region13: #{vit_forward.17} parent=0 // pred_fallthru
    _
  // Predicated region
  $region14: #{vit_forward.17} parent=0 // pred_check
    _
  $region15: #{vit_forward.17} parent=0 // pred_check_branch
    %16 = sbr.rel (0) target = $region17
  $region16: #{vit_forward.17} parent=0 // pred_region
    _
  $region17: #{vit_forward.17} parent=0 // pred_fallthru
    _
  %v18 = vld [vmem:[%s0] sm:$0xff]
  %v19 = vld [vmem:[%s0 + $0x8] sm:$0xff]
  %v20 = vld [vmem:[%s0 + $0x10] sm:$0x11]
  %v21 = vld [vmem:[%s0 + $0x18] sm:$0x11]
  %v22 = vld [vmem:[%s1] sm:$0xf]
  %v23 = vld [vmem:[%s1 + $0x4] sm:$0xf]
  %v24 = vld [vmem:[%s1 + $0x8] sm:$0xf]
  %v25 = vld [vmem:[%s1 + $0xc] sm:$0xf]
  %v26 = vld [vmem:[%s1 + $0x10] sm:$0xf]
  %v27 = vld [vmem:[%s1 + $0x14] sm:$0xf]
  %v28 = vld [vmem:[%s1 + $0x18] sm:$0xf]
  %v29 = vld [vmem:[%s1 + $0x1c] sm:$0xf]
  %v30 = vld [vmem:[%s1 + $0x20] sm:$0xf]
  %v31 = vld [vmem:[%s1 + $0x24] sm:$0xf]
  %v32 = vld [vmem:[%s1 + $0x28] sm:$0xf]
  %v33 = vld [vmem:[%s1 + $0x2c] sm:$0xf]
  %v34 = vld [vmem:[%s1 + $0x30] sm:$0xf]
  %v35 = vld [vmem:[%s1 + $0x34] sm:$0xf]
  %v36 = vld [vmem:[%s1 + $0x38] sm:$0xf]
  %v37 = vld [vmem:[%s1 + $0x3c] sm:$0xf]
  %v38 = vld [vmem:[%s1 + $0x40] sm:$0xf]
  %v39 = vld [vmem:[%s1 + $0x44] sm:$0xf]
  %v40 = vld [vmem:[%s1 + $0x48] sm:$0xf]
  %v41 = vld [vmem:[%s1 + $0x4c] sm:$0xf]
  %v42 = vld [vmem:[%s1 + $0x50] sm:$0xf]
  %v43 = vld [vmem:[%s1 + $0x54] sm:$0xf]
  %v44 = vld [vmem:[%s1 + $0x58] sm:$0xf]
  %v45 = vld [vmem:[%s1 + $0x5c] sm:$0xf]
  %v46 = vld [vmem:[%s1 + $0x60] sm:$0xf]
  %v47 = vld [vmem:[%s1 + $0x64] sm:$0xf]
  %v48 = vld [vmem:[%s1 + $0x68] sm:$0xf]
  %v49 = vld [vmem:[%s1 + $0x6c] sm:$0xf]
  %v50 = vld [vmem:[%s1 + $0x70] sm:$0xf]
  %v51 = vld [vmem:[%s1 + $0x74] sm:$0xf]
  %v52 = vld [vmem:[%s1 + $0x78] sm:$0xf]
  %v53 = vld [vmem:[%s1 + $0x7c] sm:$0xf]
  %v54 = vld [vmem:[%s1 + $0x80] sm:$0xf]
  %v55 = vld [vmem:[%s1 + $0x84] sm:$0xf]
  %v56 = vld [vmem:[%s1 + $0x88] sm:$0xf]
  %v57 = vld [vmem:[%s1 + $0x8c] sm:$0xf]
  %v58 = vld [vmem:[%s1 + $0x90] sm:$0xf]
  %v59 = vld [vmem:[%s1 + $0x94] sm:$0xf]
  %v60 = vld [vmem:[%s1 + $0x98] sm:$0xf]
  %v61 = vld [vmem:[%s1 + $0x9c] sm:$0xf]
  %v62 = vld [vmem:[%s1 + $0xa0] sm:$0xf]
  %v63 = vld [vmem:[%s1 + $0xa4] sm:$0xf]
  %v64 = vld [vmem:[%s1 + $0xa8] sm:$0xf]
  %v65 = vld [vmem:[%s1 + $0xac] sm:$0xf]
  %v66 = vld [vmem:[%s1 + $0xb0] sm:$0xf]
  %v67 = vld [vmem:[%s1 + $0xb4] sm:$0xf]
  %v68 = vld [vmem:[%s1 + $0xb8] sm:$0xf]
  %v69 = vld [vmem:[%s1 + $0xbc] sm:$0xf]
  %v70 = vld [vmem:[%s1 + $0xc0] sm:$0xf]
  %v71 = vld [vmem:[%s1 + $0xc4] sm:$0xf]
  %v72 = vld [vmem:[%s1 + $0xc8] sm:$0xf]
  %v73 = vld [vmem:[%s1 + $0xcc] sm:$0xf]
  %v74 = vld [vmem:[%s1 + $0xd0] sm:$0xf]
  %v75 = vld [vmem:[%s1 + $0xd4] sm:$0xf]
  %v76 = vld [vmem:[%s1 + $0xd8] sm:$0xf]
  %v77 = vld [vmem:[%s1 + $0xdc] sm:$0xf]
  %v78 = vld [vmem:[%s1 + $0xe0] sm:$0xf]
  %v79 = vld [vmem:[%s1 + $0xe4] sm:$0xf]
  %v80 = vld [vmem:[%s1 + $0xe8] sm:$0xf]
  %v81 = vld [vmem:[%s1 + $0xec] sm:$0xf]
  %v82 = vld [vmem:[%s1 + $0xf0] sm:$0xf]
  %v83 = vld [vmem:[%s1 + $0xf4] sm:$0xf]
  %v84 = vld [vmem:[%s1 + $0xf8] sm:$0xf]
  %v85 = vld [vmem:[%s1 + $0xfc] sm:$0xf]
  %v86 = vld [vmem:[%s2] sm:$0x1]
  %v88 = vlaneseq
  %v89 = vshrl.u32 %v88, 7
  %v90 = vsub.s32 0, %v89
  %v91 = vrot.slane %v86, %v90
  %v97 = vunpack.c.l.b16 %v18
  %v98 = vunpack.c.h.b16 %v18
  %v99 = vunpack.c.l.b16 %v19
  %v100 = vunpack.c.h.b16 %v19
  %v101 = vunpack.c.l.b16 %v20
  %v102 = vunpack.c.h.b16 %v20
  %v103 = vunpack.c.l.b16 %v21
  %v104 = vunpack.c.h.b16 %v21
  %v105 = vpack.c.b16 %v101, %v97
  %v106 = vpack.c.b16 %v102, %v98
  %v107 = vpack.c.b16 %v103, %v99
  %v108 = vpack.c.b16 %v104, %v100
  %v177 = vunpack.c.l.b16 %v22
  %v178 = vunpack.c.l.b16 %v23
  %v179 = vunpack.c.l.b16 %v24
  %v180 = vunpack.c.l.b16 %v25
  %v181 = vunpack.c.l.b16 %v26
  %v182 = vunpack.c.l.b16 %v27
  %v183 = vunpack.c.l.b16 %v28
  %v184 = vunpack.c.l.b16 %v29
  %v185 = vunpack.c.l.b16 %v30
  %v186 = vunpack.c.l.b16 %v31
  %v187 = vunpack.c.l.b16 %v32
  %v188 = vunpack.c.l.b16 %v33
  %v189 = vunpack.c.l.b16 %v34
  %v190 = vunpack.c.l.b16 %v35
  %v191 = vunpack.c.l.b16 %v36
  %v192 = vunpack.c.l.b16 %v37
  %v193 = vunpack.c.l.b16 %v38
  %v194 = vunpack.c.l.b16 %v39
  %v195 = vunpack.c.l.b16 %v40
  %v196 = vunpack.c.l.b16 %v41
  %v197 = vunpack.c.l.b16 %v42
  %v198 = vunpack.c.l.b16 %v43
  %v199 = vunpack.c.l.b16 %v44
  %v200 = vunpack.c.l.b16 %v45
  %v201 = vunpack.c.l.b16 %v46
  %v202 = vunpack.c.l.b16 %v47
  %v203 = vunpack.c.l.b16 %v48
  %v204 = vunpack.c.l.b16 %v49
  %v205 = vunpack.c.l.b16 %v50
  %v206 = vunpack.c.l.b16 %v51
  %v207 = vunpack.c.l.b16 %v52
  %v208 = vunpack.c.l.b16 %v53
  %v209 = vunpack.c.l.b16 %v54
  %v210 = vunpack.c.l.b16 %v55
  %v211 = vunpack.c.l.b16 %v56
  %v212 = vunpack.c.l.b16 %v57
  %v213 = vunpack.c.l.b16 %v58
  %v214 = vunpack.c.l.b16 %v59
  %v215 = vunpack.c.l.b16 %v60
  %v216 = vunpack.c.l.b16 %v61
  %v217 = vunpack.c.l.b16 %v62
  %v218 = vunpack.c.l.b16 %v63
  %v219 = vunpack.c.l.b16 %v64
  %v220 = vunpack.c.l.b16 %v65
  %v221 = vunpack.c.l.b16 %v66
  %v222 = vunpack.c.l.b16 %v67
  %v223 = vunpack.c.l.b16 %v68
  %v224 = vunpack.c.l.b16 %v69
  %v225 = vunpack.c.l.b16 %v70
  %v226 = vunpack.c.l.b16 %v71
  %v227 = vunpack.c.l.b16 %v72
  %v228 = vunpack.c.l.b16 %v73
  %v229 = vunpack.c.l.b16 %v74
  %v230 = vunpack.c.l.b16 %v75
  %v231 = vunpack.c.l.b16 %v76
  %v232 = vunpack.c.l.b16 %v77
  %v233 = vunpack.c.l.b16 %v78
  %v234 = vunpack.c.l.b16 %v79
  %v235 = vunpack.c.l.b16 %v80
  %v236 = vunpack.c.l.b16 %v81
  %v237 = vunpack.c.l.b16 %v82
  %v238 = vunpack.c.l.b16 %v83
  %v239 = vunpack.c.l.b16 %v84
  %v240 = vunpack.c.l.b16 %v85
  %v241 = vpack.c.b16 %v178, %v177
  %v242 = vpack.c.b16 %v180, %v179
  %v243 = vpack.c.b16 %v182, %v181
  %v244 = vpack.c.b16 %v184, %v183
  %v245 = vpack.c.b16 %v186, %v185
  %v246 = vpack.c.b16 %v188, %v187
  %v247 = vpack.c.b16 %v190, %v189
  %v248 = vpack.c.b16 %v192, %v191
  %v249 = vpack.c.b16 %v194, %v193
  %v250 = vpack.c.b16 %v196, %v195
  %v251 = vpack.c.b16 %v198, %v197
  %v252 = vpack.c.b16 %v200, %v199
  %v253 = vpack.c.b16 %v202, %v201
  %v254 = vpack.c.b16 %v204, %v203
  %v255 = vpack.c.b16 %v206, %v205
  %v256 = vpack.c.b16 %v208, %v207
  %v257 = vpack.c.b16 %v210, %v209
  %v258 = vpack.c.b16 %v212, %v211
  %v259 = vpack.c.b16 %v214, %v213
  %v260 = vpack.c.b16 %v216, %v215
  %v261 = vpack.c.b16 %v218, %v217
  %v262 = vpack.c.b16 %v220, %v219
  %v263 = vpack.c.b16 %v222, %v221
  %v264 = vpack.c.b16 %v224, %v223
  %v265 = vpack.c.b16 %v226, %v225
  %v266 = vpack.c.b16 %v228, %v227
  %v267 = vpack.c.b16 %v230, %v229
  %v268 = vpack.c.b16 %v232, %v231
  %v269 = vpack.c.b16 %v234, %v233
  %v270 = vpack.c.b16 %v236, %v235
  %v271 = vpack.c.b16 %v238, %v237
  %v272 = vpack.c.b16 %v240, %v239
  %305 = vmatprep.subr.bf16.mxu0 0
  %306 = vmatpush1.bf16.msra.mxu0 %v241
  %307 = vmatprep.subr.bf16.mxu0 0
  %308 = vmatpush1.bf16.msra.mxu0 %v242
  %309 = vmatprep.subr.bf16.mxu0 0
  %310 = vmatpush1.bf16.msra.mxu0 %v243
  %311 = vmatprep.subr.bf16.mxu0 0
  %312 = vmatpush1.bf16.msra.mxu0 %v244
  %313 = vmatprep.subr.bf16.mxu0 0
  %314 = vmatpush1.bf16.msra.mxu0 %v245
  %315 = vmatprep.subr.bf16.mxu0 0
  %316 = vmatpush1.bf16.msra.mxu0 %v246
  %317 = vmatprep.subr.bf16.mxu0 0
  %318 = vmatpush1.bf16.msra.mxu0 %v247
  %319 = vmatprep.subr.bf16.mxu0 0
  %320 = vmatpush1.bf16.msra.mxu0 %v248
  %321 = vmatprep.subr.bf16.mxu0 0
  %322 = vmatpush1.bf16.msra.mxu0 %v249
  %323 = vmatprep.subr.bf16.mxu0 0
  %324 = vmatpush1.bf16.msra.mxu0 %v250
  %325 = vmatprep.subr.bf16.mxu0 0
  %326 = vmatpush1.bf16.msra.mxu0 %v251
  %327 = vmatprep.subr.bf16.mxu0 0
  %328 = vmatpush1.bf16.msra.mxu0 %v252
  %329 = vmatprep.subr.bf16.mxu0 0
  %330 = vmatpush1.bf16.msra.mxu0 %v253
  %331 = vmatprep.subr.bf16.mxu0 0
  %332 = vmatpush1.bf16.msra.mxu0 %v254
  %333 = vmatprep.subr.bf16.mxu0 0
  %334 = vmatpush1.bf16.msra.mxu0 %v255
  %335 = vmatprep.subr.bf16.mxu0 0
  %336 = vmatpush1.bf16.msra.mxu0 %v256
  %337 = vmatprep.mubr.bf16.mxu0 %v106
  %338 = vmatmul.mubr.bf16.gmra.mrb[0].mxu0 %v105
  %v339 = vpop.f32.mrb[0].mxu0
  %v340 = vadd.f32 %v91, %v339
  %v341 = vpop.f32.mrb[0].mxu0
  %v342 = vpop.f32.mrb[0].mxu0
  %v343 = vadd.f32 %v91, %v342
  %v344 = vpop.f32.mrb[0].mxu0
  %345 = vdwg.mxu0
  %346 = vmatprep.subr.bf16.mxu0 0
  %347 = vmatpush1.bf16.msra.mxu0 %v257
  %348 = vmatprep.subr.bf16.mxu0 0
  %349 = vmatpush1.bf16.msra.mxu0 %v258
  %350 = vmatprep.subr.bf16.mxu0 0
  %351 = vmatpush1.bf16.msra.mxu0 %v259
  %352 = vmatprep.subr.bf16.mxu0 0
  %353 = vmatpush1.bf16.msra.mxu0 %v260
  %354 = vmatprep.subr.bf16.mxu0 0
  %355 = vmatpush1.bf16.msra.mxu0 %v261
  %356 = vmatprep.subr.bf16.mxu0 0
  %357 = vmatpush1.bf16.msra.mxu0 %v262
  %358 = vmatprep.subr.bf16.mxu0 0
  %359 = vmatpush1.bf16.msra.mxu0 %v263
  %360 = vmatprep.subr.bf16.mxu0 0
  %361 = vmatpush1.bf16.msra.mxu0 %v264
  %362 = vmatprep.subr.bf16.mxu0 0
  %363 = vmatpush1.bf16.msra.mxu0 %v265
  %364 = vmatprep.subr.bf16.mxu0 0
  %365 = vmatpush1.bf16.msra.mxu0 %v266
  %366 = vmatprep.subr.bf16.mxu0 0
  %367 = vmatpush1.bf16.msra.mxu0 %v267
  %368 = vmatprep.subr.bf16.mxu0 0
  %369 = vmatpush1.bf16.msra.mxu0 %v268
  %370 = vmatprep.subr.bf16.mxu0 0
  %371 = vmatpush1.bf16.msra.mxu0 %v269
  %372 = vmatprep.subr.bf16.mxu0 0
  %373 = vmatpush1.bf16.msra.mxu0 %v270
  %374 = vmatprep.subr.bf16.mxu0 0
  %375 = vmatpush1.bf16.msra.mxu0 %v271
  %376 = vmatprep.subr.bf16.mxu0 0
  %377 = vmatpush1.bf16.msra.mxu0 %v272
  %378 = vmatprep.mubr.bf16.mxu0 %v108
  %379 = vmatmul.mubr.bf16.gmra.mrb[0].mxu0 %v107
  %v380 = vpop.f32.mrb[0].mxu0
  %v381 = vadd.f32 %v340, %v380
  %v382 = vpop.f32.mrb[0].mxu0
  %v383 = vpop.f32.mrb[0].mxu0
  %v384 = vadd.f32 %v343, %v383
  %v385 = vpop.f32.mrb[0].mxu0
  %386 = vdwg.mxu0
  %v387 = vld [vmem:[%s3] sm:$0xf]
  %v388 = vld [vmem:[%s3 + $0x4] sm:$0x1]
  %v389 = vunpack.c.l.bf16 %v387
  %v390 = vunpack.c.l.bf16 %v388
  %v391 = vadd.f32 %v381, %v389
  %v392 = vadd.f32 %v384, %v390
  %v393 = vpack.c.bf16 %v392, %v391
  %v395 = vunpack.c.l.b16 %v393
  %v396 = vunpack.c.h.b16 %v393
  %v397 = vpack.c.b16 %v395, %v395
  %v398 = vpack.c.b16 %v396, %v396
  %401 = vst [vmem:[%s4] sm:$0xf] %v397
  %402 = vst [vmem:[%s4 + $0x4] sm:$0x1] %v398
  // Predicated region
  $region18: #{vit_forward.17} parent=0 // pred_check
    _
  $region19: #{vit_forward.17} parent=0 // pred_check_branch
    %404 = sbr.rel (0) target = $region21
  $region20: #{vit_forward.17} parent=0 // pred_region
    _
  $region21: #{vit_forward.17} parent=0 // pred_fallthru
    _
  // Predicated region
  $region22: #{vit_forward.17} parent=0 // pred_check
    _
  $region23: #{vit_forward.17} parent=0 // pred_check_branch
    %406 = sbr.rel (0) target = $region25
  $region24: #{vit_forward.17} parent=0 // pred_region
    _
  $region25: #{vit_forward.17} parent=0 // pred_fallthru
    _

// kernel: vit_forward.23
$region0: #{vit_forward.23}
  #allocation0 [shape = 'u32[]', space=smem, size = 0x4, offset = 0x4, fixed_abs, tag = 'smem constant byte address 0x4 - core index']
  #allocation1 [shape = 'u32[144,128]{1,0:T(1,128)}', space=vmem, size = 0x12000, scoped, tag = 'internal scratch']
  %s0 = inlined_call_operand.vmem [shape: bf16[2,128], index: 0, kind: input, shape index: {}]
  %s1 = inlined_call_operand.vmem [shape: bf16[128,128], index: 1, kind: input, shape index: {}]
  %s2 = inlined_call_operand.vmem [shape: f32[1,128], index: 2, kind: input, shape index: {}]
  %s3 = inlined_call_operand.vmem [shape: f32[1,128], index: 3, kind: input, shape index: {}]
  %s4 = inlined_call_operand.vmem [shape: f32[1,128], index: 4, kind: input, shape index: {}]
  %s5 = inlined_call_operand.hbm [shape: f32[2,128], index: 5, kind: output, shape index: {}]
  %s6 = sld [smem:[#allocation0]]
  $region30: #{vit_forward.23} parent=0
    _
  %s8 = ssub.s32 1, %s6
  %s9 = scalar_select 0, %s8, %s6
  $region1: #{vit_forward.23} parent=0
    #allocation2 [shape = 'u8[1024]{0}', space=vmem, size = 0x400, scoped, tag = 'output window, operand 0, single buffered']
    #allocation3 [shape = 's32[1]{0}', space=sflag, size = 0x4, scoped, tag = 'scoped memory for vit_forward.23']
    %10 = vsyncpa [#allocation3], 0
    // Predicated region
    $region2: #{vit_forward.23} parent=1 // pred_check
      _
    $region3: #{vit_forward.23} parent=1 // pred_check_branch
      %12 = sbr.rel (0) target = $region5
    $region4: #{vit_forward.23} parent=1 // pred_region
      _
    $region5: #{vit_forward.23} parent=1 // pred_fallthru
      _
    // Predicated region
    $region6: #{vit_forward.23} parent=1 // pred_check
      _
    $region7: #{vit_forward.23} parent=1 // pred_check_branch
      %14 = sbr.rel (0) target = $region9
    $region8: #{vit_forward.23} parent=1 // pred_region
      _
    $region9: #{vit_forward.23} parent=1 // pred_fallthru
      _
    // Predicated region
    $region10: #{vit_forward.23} parent=1 // pred_check
      _
    $region11: #{vit_forward.23} parent=1 // pred_check_branch
      %16 = sbr.rel (0) target = $region13
    $region12: #{vit_forward.23} parent=1 // pred_region
      _
    $region13: #{vit_forward.23} parent=1 // pred_fallthru
      _
    // Predicated region
    $region14: #{vit_forward.23} parent=1 // pred_check
      _
    $region15: #{vit_forward.23} parent=1 // pred_check_branch
      %18 = sbr.rel (0) target = $region17
    $region16: #{vit_forward.23} parent=1 // pred_region
      _
    $region17: #{vit_forward.23} parent=1 // pred_fallthru
      _
    // Predicated region
    $region18: #{vit_forward.23} parent=1 // pred_check
      _
    $region19: #{vit_forward.23} parent=1 // pred_check_branch
      %20 = sbr.rel (0) target = $region21
    $region20: #{vit_forward.23} parent=1 // pred_region
      _
    $region21: #{vit_forward.23} parent=1 // pred_fallthru
      _
    %v22 = vld [vmem:[%s0] sm:$0x1]
    %v23 = vunpack.c.l.bf16 %v22
    %vm24 = vcmask 1041408
    %v25 = vsel %vm24, %v23, 0.0
    %26 = vadd.xlane.f32.xlu0 %v25
    %v27 = vpop.xlane.xlu0 %26
    %v28 = vrcp.pop 128.0
    %v29 = vmul.f32 %v27, %v28
    %v30 = vsub.f32 %v23, %v29
    %v31 = vmul.f32 %v30, %v30
    %v32 = vsel %vm24, %v31, 0.0
    %33 = vadd.xlane.f32.xlu0 %v32
    %v34 = vpop.xlane.xlu0 %33
    %v35 = vmul.f32 %v34, %v28
    %v36 = vadd.f32 %v35, 1e-05
    %v37 = vrsqrt.pop %v36
    %v38 = vmul.f32 %v30, %v37
    %v39 = vld [vmem:[%s3] sm:$0x1]
    %v41 = vlaneseq
    %v42 = vshrl.u32 %v41, 7
    %v43 = vsub.s32 0, %v42
    %v44 = vrot.slane %v39, %v43
    %v46 = vmul.f32 %v38, %v44
    %v47 = vld [vmem:[%s4] sm:$0x1]
    %v49 = vlaneseq
    %v50 = vshrl.u32 %v49, 7
    %v51 = vsub.s32 0, %v50
    %v52 = vrot.slane %v47, %v51
    %v54 = vadd.f32 %v46, %v52
    %v55 = vpack.c.bf16 %v54, %v54
    %v56 = vld [vmem:[%s1] sm:$0xf]
    %v57 = vld [vmem:[%s1 + $0x4] sm:$0xf]
    %v58 = vld [vmem:[%s1 + $0x8] sm:$0xf]
    %v59 = vld [vmem:[%s1 + $0xc] sm:$0xf]
    %v60 = vld [vmem:[%s1 + $0x10] sm:$0xf]
    %v61 = vld [vmem:[%s1 + $0x14] sm:$0xf]
    %v62 = vld [vmem:[%s1 + $0x18] sm:$0xf]
    %v63 = vld [vmem:[%s1 + $0x1c] sm:$0xf]
    %v64 = vld [vmem:[%s1 + $0x20] sm:$0xf]
    %v65 = vld [vmem:[%s1 + $0x24] sm:$0xf]
    %v66 = vld [vmem:[%s1 + $0x28] sm:$0xf]
    %v67 = vld [vmem:[%s1 + $0x2c] sm:$0xf]
    %v68 = vld [vmem:[%s1 + $0x30] sm:$0xf]
    %v69 = vld [vmem:[%s1 + $0x34] sm:$0xf]
    %v70 = vld [vmem:[%s1 + $0x38] sm:$0xf]
    %v71 = vld [vmem:[%s1 + $0x3c] sm:$0xf]
    %v72 = vld [vmem:[%s2] sm:$0x1]
    %v74 = vlaneseq
    %v75 = vshrl.u32 %v74, 7
    %v76 = vsub.s32 0, %v75
    %v77 = vrot.slane %v72, %v76
    %v95 = vunpack.c.l.b16 %v56
    %v96 = vunpack.c.l.b16 %v57
    %v97 = vunpack.c.l.b16 %v58
    %v98 = vunpack.c.l.b16 %v59
    %v99 = vunpack.c.l.b16 %v60
    %v100 = vunpack.c.l.b16 %v61
    %v101 = vunpack.c.l.b16 %v62
    %v102 = vunpack.c.l.b16 %v63
    %v103 = vunpack.c.l.b16 %v64
    %v104 = vunpack.c.l.b16 %v65
    %v105 = vunpack.c.l.b16 %v66
    %v106 = vunpack.c.l.b16 %v67
    %v107 = vunpack.c.l.b16 %v68
    %v108 = vunpack.c.l.b16 %v69
    %v109 = vunpack.c.l.b16 %v70
    %v110 = vunpack.c.l.b16 %v71
    %v111 = vpack.c.b16 %v96, %v95
    %v112 = vpack.c.b16 %v98, %v97
    %v113 = vpack.c.b16 %v100, %v99
    %v114 = vpack.c.b16 %v102, %v101
    %v115 = vpack.c.b16 %v104, %v103
    %v116 = vpack.c.b16 %v106, %v105
    %v117 = vpack.c.b16 %v108, %v107
    %v118 = vpack.c.b16 %v110, %v109
    %127 = vmatprep.subr.bf16.mxu0 0
    %128 = vmatpush1.bf16.msra.mxu0 %v111
    %129 = vmatprep.subr.bf16.mxu0 0
    %130 = vmatpush1.bf16.msra.mxu0 %v112
    %131 = vmatprep.subr.bf16.mxu0 0
    %132 = vmatpush1.bf16.msra.mxu0 %v113
    %133 = vmatprep.subr.bf16.mxu0 0
    %134 = vmatpush1.bf16.msra.mxu0 %v114
    %135 = vmatprep.subr.bf16.mxu0 0
    %136 = vmatpush1.bf16.msra.mxu0 %v115
    %137 = vmatprep.subr.bf16.mxu0 0
    %138 = vmatpush1.bf16.msra.mxu0 %v116
    %139 = vmatprep.subr.bf16.mxu0 0
    %140 = vmatpush1.bf16.msra.mxu0 %v117
    %141 = vmatprep.subr.bf16.mxu0 0
    %142 = vmatpush1.bf16.msra.mxu0 %v118
    %143 = vmatprep.subr.bf16.mxu0 0
    %144 = vmatpush1.bf16.msra.mxu0 0
    %145 = vmatprep.subr.bf16.mxu0 0
    %146 = vmatpush1.bf16.msra.mxu0 0
    %147 = vmatprep.subr.bf16.mxu0 0
    %148 = vmatpush1.bf16.msra.mxu0 0
    %149 = vmatprep.subr.bf16.mxu0 0
    %150 = vmatpush1.bf16.msra.mxu0 0
    %151 = vmatprep.subr.bf16.mxu0 0
    %152 = vmatpush1.bf16.msra.mxu0 0
    %153 = vmatprep.subr.bf16.mxu0 0
    %154 = vmatpush1.bf16.msra.mxu0 0
    %155 = vmatprep.subr.bf16.mxu0 0
    %156 = vmatpush1.bf16.msra.mxu0 0
    %157 = vmatprep.subr.bf16.mxu0 0
    %158 = vmatpush1.bf16.msra.mxu0 0
    %159 = vmatprep.mubr.bf16.mxu0 0
    %160 = vmatmul.mubr.bf16.gmra.mrb[0].mxu0 %v55
    %v161 = vpop.f32.mrb[0].mxu0
    %v162 = vadd.f32 %v77, %v161
    %v163 = vpop.f32.mrb[0].mxu0
    %v164 = vpop.f32.mrb[0].mxu0
    %v165 = vpop.f32.mrb[0].mxu0
    %166 = vdwg.mxu0
    %167 = vst [vmem:[#allocation2] sm:$0x3] %v162
    // Predicated region
    $region22: #{vit_forward.23} parent=1 // pred_check
      _
    $region23: #{vit_forward.23} parent=1 // pred_check_branch
      %169 = sbr.rel (0) target = $region25
    $region24: #{vit_forward.23} parent=1 // pred_region
      %s171 = ssub.s32 32, 32
      %172 = vsyncadd [#allocation3], %s171
      %s174 = sshll.u32 [#allocation2], 4
      %s175 = int_to_ptr.vmem [resolvable:$true] %s174
      %177 = dma.vmem_to_hbm [thread:$0]  %s175, 32, %s5, [#allocation3]
    $region25: #{vit_forward.23} parent=1 // pred_fallthru
      _
    // Predicated region
    $region26: #{vit_forward.23} parent=1 // pred_check
      _
    $region27: #{vit_forward.23} parent=1 // pred_check_branch
      %179 = sbr.rel (0) target = $region29
    $region28: #{vit_forward.23} parent=1 // pred_region
      %180 = dma.done [#allocation3], 32
    $region29: #{vit_forward.23} parent=1 // pred_fallthru
      _
    %181 = vsyncpa [#allocation3], 1

</llo_original>
